<compile_context>
chip_gen: v6e
topology: v6e:2x2x1
jax: 0.10.0
libtpu: 0.0.40
codegen_flags: <defaults>
</compile_context>

<pallas_src>
import jax
import jax.numpy as jnp
from jax.experimental import pallas as pl
from jax.experimental.pallas import tpu as pltpu


def _gelu_tanh(z):
    c = 0.7978845608028654  # sqrt(2/pi)
    return 0.5 * z * (1.0 + jnp.tanh(c * (z + 0.044715 * z * z * z)))


def _make_block_kernel(num_heads, img_h, img_w, hidden, chunk, eps=1e-5):
    N = img_h * img_w
    W = img_w
    n_chunks = hidden // chunk

    def _layernorm(z, g, b):
        mu = jnp.mean(z, axis=-1, keepdims=True)
        zc = z - mu
        var = jnp.mean(zc * zc, axis=-1, keepdims=True)
        return zc * jax.lax.rsqrt(var + eps) * g + b

    def kernel(x_ref, g1_ref, b1_ref, wqkv_ref, wp_ref, bp_ref,
               g2_ref, b2_ref, w1_ref, fb1_ref, wdw_ref, msk_ref, w2_ref, fb2_ref,
               o_ref):
        f32, bf16 = jnp.float32, jnp.bfloat16
        x0 = x_ref[0]                                                   # (N, C) f32
        C = x0.shape[-1]
        hd = C // num_heads

        # -------- attention: LN1 -> fused QKV -> per-head SDPA -> fused out-projection --------
        xn16 = _layernorm(x0, g1_ref[...], b1_ref[...]).astype(bf16)
        # single (N,C)x(C,3C) MXU matmul for all heads; softmax scale pre-folded into Q columns
        qkv16 = jnp.dot(xn16, wqkv_ref[...], preferred_element_type=f32).astype(bf16)  # (N, 3C)
        ctx_heads = []
        for h in range(num_heads):            # static unroll; 32-lane slices are cheap layout work
            lo = h * hd
            q = qkv16[:, lo:lo + hd]
            k = qkv16[:, C + lo:C + lo + hd]
            v = qkv16[:, 2 * C + lo:2 * C + lo + hd]
            # q @ k^T without a materialized transpose: contract last axes of both operands
            s = jax.lax.dot_general(q, k, (((1,), (1,)), ((), ())),
                                    preferred_element_type=f32)          # (N, N) f32
            s = s - jnp.max(s, axis=-1, keepdims=True)
            p = jnp.exp(s)
            p = p / jnp.sum(p, axis=-1, keepdims=True)                   # exact normalization
            ctx_heads.append(jnp.dot(p.astype(bf16), v, preferred_element_type=f32))  # (N, hd)
        ctx16 = jnp.concatenate(ctx_heads, axis=-1).astype(bf16)         # (N, C), head-major lanes
        attn = jnp.dot(ctx16, wp_ref[...], preferred_element_type=f32)   # one (N,C)x(C,C) matmul
        x1 = x0 + attn + bp_ref[...]                                     # residual + proj bias

        # ---- ConvMlp: LN2 -> per-hidden-chunk [fc1 -> depthwise 3x3 -> GELU -> fc2 partial] ----
        y16 = _layernorm(x1, g2_ref[...], b2_ref[...]).astype(bf16)
        m_l = msk_ref[0]                                                 # (N,1) col >= 1
        m_r = msk_ref[1]                                                 # (N,1) col <= W-2
        m_t = msk_ref[2]                                                 # (N,1) row >= 1
        m_b = msk_ref[3]                                                 # (N,1) row <= H-2
        mlp = jnp.zeros_like(x0)                                         # (N, C) f32 fc2 accumulator
        for c in range(n_chunks):
            h1 = jnp.dot(y16, w1_ref[c], preferred_element_type=f32) + fb1_ref[c]   # (N, chunk)
            # depthwise 3x3 (padding=1, no bias) on the row-major (H, W) token grid:
            # two +/-1-token rolls with the column masks applied once, then the nine taps come
            # from sublane-aligned +/-W rolls of {left, center, right}; y-edges zeroed by row masks.
            left = pltpu.roll(h1, 1, 0) * m_l                            # token (y, x-1)
            right = pltpu.roll(h1, N - 1, 0) * m_r                       # token (y, x+1)
            tap = [wdw_ref[c, t] for t in range(9)]                      # (1, chunk) per-channel taps
            top = (pltpu.roll(left, W, 0) * tap[0]
                   + pltpu.roll(h1, W, 0) * tap[1]
                   + pltpu.roll(right, W, 0) * tap[2]) * m_t
            mid = left * tap[3] + h1 * tap[4] + right * tap[5]
            bot = (pltpu.roll(left, N - W, 0) * tap[6]
                   + pltpu.roll(h1, N - W, 0) * tap[7]
                   + pltpu.roll(right, N - W, 0) * tap[8]) * m_b
            h2 = _gelu_tanh(top + mid + bot)
            mlp = mlp + jnp.dot(h2.astype(bf16), w2_ref[c], preferred_element_type=f32)
        o_ref[0] = (x1 + mlp + fb2_ref[...]).astype(o_ref.dtype)

    return kernel


def dense_attention_block_pallas(x_nchw, params, *, num_heads, hidden_chunk=128):
    B, C, H, W = x_nchw.shape
    N = H * W
    hd = C // num_heads
    hidden = params['w_fc1'].shape[1]
    assert hidden % hidden_chunk == 0
    n_chunks = hidden // hidden_chunk
    scale = hd ** (-0.5)
    f32, bf16 = jnp.float32, jnp.bfloat16

    # 'b c h w -> b (h w) c'
    # TODO(synk): this HBM<->HBM transpose (and the inverse below) could be folded into the kernel
    # (read a (1,C,N) block, transpose on-chip), at the cost of a 64-lane output store; kept in the
    # wrapper to preserve the lane-dense (N, C) tile layout.
    x_seq = x_nchw.transpose(0, 2, 3, 1).reshape(B, N, C).astype(f32)

    # --- parameter prep: bf16 MXU operands, fused QKV with softmax scale folded into Q columns ---
    wqkv = jnp.concatenate([params['w_qkv'][:, :C] * scale, params['w_qkv'][:, C:]],
                           axis=1).astype(bf16)                          # (C, 3C)
    wp = params['w_proj'].astype(bf16)                                   # (C, C)
    bp = params['b_proj'].reshape(1, C).astype(f32)
    g1 = params['norm1_w'].reshape(1, C).astype(f32)
    b1 = params['norm1_b'].reshape(1, C).astype(f32)
    g2 = params['norm2_w'].reshape(1, C).astype(f32)
    b2 = params['norm2_b'].reshape(1, C).astype(f32)
    # MLP weights pre-split into hidden chunks (leading-axis indexed inside the kernel)
    w1 = params['w_fc1'].reshape(C, n_chunks, hidden_chunk).transpose(1, 0, 2).astype(bf16)
    fb1 = params['b_fc1'].reshape(n_chunks, 1, hidden_chunk).astype(f32)
    wdw = (params['w_dw'].reshape(9, n_chunks, hidden_chunk)
           .transpose(1, 0, 2).reshape(n_chunks, 9, 1, hidden_chunk).astype(f32))
    w2 = params['w_fc2'].reshape(n_chunks, hidden_chunk, C).astype(bf16)
    fb2 = params['b_fc2'].reshape(1, C).astype(f32)

    # depthwise-conv edge-validity masks [x>=1, x<=W-2, y>=1, y<=H-2] per token (lane-broadcast)
    tok = jnp.arange(N, dtype=jnp.int32)
    col, row = tok % W, tok // W
    masks = jnp.stack([col >= 1, col <= W - 2, row >= 1, row <= H - 2]).astype(f32).reshape(4, N, 1)

    kernel = _make_block_kernel(num_heads, H, W, hidden, hidden_chunk)

    def _full_spec(arr):
        nd = arr.ndim
        return pl.BlockSpec(arr.shape, lambda b, _nd=nd: (0,) * _nd)

    operands = (x_seq, g1, b1, wqkv, wp, bp, g2, b2, w1, fb1, wdw, masks, w2, fb2)
    in_specs = [pl.BlockSpec((1, N, C), lambda b: (b, 0, 0))] + [_full_spec(a) for a in operands[1:]]
    # TODO(synk): at production C/hidden the grid-invariant weight specs should be single-buffered
    # (pipeline_mode=pl.Buffered(1)) or vmem_limit_bytes raised; negligible at these demo sizes.

    flops = B * (2 * N * C * 3 * C + num_heads * 4 * N * N * hd + 2 * N * C * C
                 + 2 * N * C * hidden + 18 * N * hidden + 2 * N * hidden * C)
    transcendentals = B * (num_heads * N * N + N * hidden)
    weight_bytes = sum(int(a.size) * a.dtype.itemsize for a in operands[1:])
    cost = pl.CostEstimate(flops=int(flops), transcendentals=int(transcendentals),
                           bytes_accessed=int(2 * B * N * C * 4 + weight_bytes))

    out_seq = pl.pallas_call(
        kernel,
        out_shape=jax.ShapeDtypeStruct((B, N, C), x_seq.dtype),
        grid_spec=pltpu.PrefetchScalarGridSpec(
            num_scalar_prefetch=0,
            grid=(B,),                                                   # >= 2 -> both v7x TCs
            in_specs=in_specs,
            out_specs=pl.BlockSpec((1, N, C), lambda b: (b, 0, 0)),
        ),
        compiler_params=pltpu.CompilerParams(
            dimension_semantics=("parallel",),
        ),
        cost_estimate=cost,
    )(*operands)

    # 'b (h w) c -> b c h w'
    return out_seq.reshape(B, H, W, C).transpose(0, 3, 1, 2)


def dense_attention_block_reference(x_nchw, params, *, num_heads):
    """Pure-JAX f32 reference mirroring the PyTorch DenseAttentionBlock forward."""
    B, C, H, W = x_nchw.shape
    N = H * W
    hd = C // num_heads
    hidden = params['w_fc1'].shape[1]
    scale = hd ** (-0.5)

    def layernorm(z, g, b, eps=1e-5):
        mu = z.mean(-1, keepdims=True)
        var = ((z - mu) ** 2).mean(-1, keepdims=True)
        return (z - mu) / jnp.sqrt(var + eps) * g + b

    x = x_nchw.transpose(0, 2, 3, 1).reshape(B, N, C)

    # --- attention ---
    xn = layernorm(x, params['norm1_w'], params['norm1_b'])
    qkv = xn @ params['w_qkv']
    qkv = qkv.reshape(B, N, 3, num_heads, hd).transpose(2, 0, 3, 1, 4)
    q, k, v = qkv[0], qkv[1], qkv[2]
    attn = jnp.einsum('bhnd,bhmd->bhnm', q, k) * scale
    attn = jax.nn.softmax(attn, axis=-1)
    ctx = jnp.einsum('bhnm,bhmd->bhnd', attn, v).transpose(0, 2, 1, 3).reshape(B, N, C)
    x = x + ctx @ params['w_proj'] + params['b_proj']

    # --- ConvMlp ---
    y = layernorm(x, params['norm2_w'], params['norm2_b'])
    h1 = y @ params['w_fc1'] + params['b_fc1']
    img = h1.reshape(B, H, W, hidden)
    padded = jnp.pad(img, ((0, 0), (1, 1), (1, 1), (0, 0)))
    conv = jnp.zeros_like(img)
    for ky in range(3):
        for kx in range(3):
            conv = conv + padded[:, ky:ky + H, kx:kx + W, :] * params['w_dw'][ky, kx]
    h2 = _gelu_tanh(conv.reshape(B, N, hidden))
    x = x + h2 @ params['w_fc2'] + params['b_fc2']

    return x.reshape(B, H, W, C).transpose(0, 3, 1, 2)


if __name__ == "__main__":
    # dim=128 keeps every tile 128-lane dense; N = 8*8 = 64 tokens, heads=4, hidden=512.
    B, C, H, W = 2, 128, 8, 8
    num_heads = 4
    hidden = int(C * 4.0)

    key = jax.random.PRNGKey(0)
    ks = jax.random.split(key, 14)
    x = jax.random.normal(ks[0], (B, C, H, W), dtype=jnp.float32)
    params = {
        'norm1_w': 1.0 + 0.1 * jax.random.normal(ks[1], (C,), jnp.float32),
        'norm1_b': 0.1 * jax.random.normal(ks[2], (C,), jnp.float32),
        'w_qkv':   0.05 * jax.random.normal(ks[3], (C, 3 * C), jnp.float32),
        'w_proj':  0.05 * jax.random.normal(ks[4], (C, C), jnp.float32),
        'b_proj':  0.05 * jax.random.normal(ks[5], (C,), jnp.float32),
        'norm2_w': 1.0 + 0.1 * jax.random.normal(ks[6], (C,), jnp.float32),
        'norm2_b': 0.1 * jax.random.normal(ks[7], (C,), jnp.float32),
        'w_fc1':   0.05 * jax.random.normal(ks[8], (C, hidden), jnp.float32),
        'b_fc1':   0.05 * jax.random.normal(ks[9], (hidden,), jnp.float32),
        'w_dw':    0.05 * jax.random.normal(ks[10], (3, 3, hidden), jnp.float32),
        'w_fc2':   0.05 * jax.random.normal(ks[11], (hidden, C), jnp.float32),
        'b_fc2':   0.05 * jax.random.normal(ks[12], (C,), jnp.float32),
    }

    out = dense_attention_block_pallas(x, params, num_heads=num_heads)
    out = jax.block_until_ready(out)

    ref = dense_attention_block_reference(x, params, num_heads=num_heads)
    assert out.shape == x.shape
    max_err = float(jnp.max(jnp.abs(out - ref)))
    # tolerance loosened vs. pure-f32 because the kernel feeds the MXU bf16 operands
    # (with f32 accumulation); the softmax normalization itself is an exact divide.
    assert jnp.allclose(out, ref, atol=3e-2, rtol=3e-2), f"mismatch vs reference (max abs err={max_err})"

    print("KERNEL_OK")
</pallas_src>

<mosaic_0001>
module attributes {stable_mosaic.version = 11 : i64} {
  func.func @kernel(%arg0: i32, %arg1: memref<1x64x128xf32, #tpu.memory_space<vmem>>, %arg2: memref<1x128xf32, #tpu.memory_space<vmem>>, %arg3: memref<1x128xf32, #tpu.memory_space<vmem>>, %arg4: memref<128x384xbf16, #tpu.memory_space<vmem>>, %arg5: memref<128x128xbf16, #tpu.memory_space<vmem>>, %arg6: memref<1x128xf32, #tpu.memory_space<vmem>>, %arg7: memref<1x128xf32, #tpu.memory_space<vmem>>, %arg8: memref<1x128xf32, #tpu.memory_space<vmem>>, %arg9: memref<4x128x128xbf16, #tpu.memory_space<vmem>>, %arg10: memref<4x1x128xf32, #tpu.memory_space<vmem>>, %arg11: memref<4x9x1x128xf32, #tpu.memory_space<vmem>>, %arg12: memref<4x64x1xf32, #tpu.memory_space<vmem>>, %arg13: memref<4x128x128xbf16, #tpu.memory_space<vmem>>, %arg14: memref<1x128xf32, #tpu.memory_space<vmem>>, %arg15: memref<1x64x128xf32, #tpu.memory_space<vmem>>) attributes {dimension_semantics = [#tpu.dimension_semantics<parallel>], iteration_bounds = array<i64: 2>, scalar_prefetch = 0 : i64, scratch_operands = 0 : i64, tpu.core_type = #tpu.core_type<tc>, window_params = [{transform_indices = @transform_0, window_bounds = array<i64: 1, 64, 128>}, {pipeline_mode = #tpu.pipeline_mode<synchronous>, transform_indices = @transform_1, window_bounds = array<i64: 1, 128>}, {pipeline_mode = #tpu.pipeline_mode<synchronous>, transform_indices = @transform_2, window_bounds = array<i64: 1, 128>}, {pipeline_mode = #tpu.pipeline_mode<synchronous>, transform_indices = @transform_3, window_bounds = array<i64: 128, 384>}, {pipeline_mode = #tpu.pipeline_mode<synchronous>, transform_indices = @transform_4, window_bounds = array<i64: 128, 128>}, {pipeline_mode = #tpu.pipeline_mode<synchronous>, transform_indices = @transform_5, window_bounds = array<i64: 1, 128>}, {pipeline_mode = #tpu.pipeline_mode<synchronous>, transform_indices = @transform_6, window_bounds = array<i64: 1, 128>}, {pipeline_mode = #tpu.pipeline_mode<synchronous>, transform_indices = @transform_7, window_bounds = array<i64: 1, 128>}, {pipeline_mode = #tpu.pipeline_mode<synchronous>, transform_indices = @transform_8, window_bounds = array<i64: 4, 128, 128>}, {pipeline_mode = #tpu.pipeline_mode<synchronous>, transform_indices = @transform_9, window_bounds = array<i64: 4, 1, 128>}, {pipeline_mode = #tpu.pipeline_mode<synchronous>, transform_indices = @transform_10, window_bounds = array<i64: 4, 9, 1, 128>}, {pipeline_mode = #tpu.pipeline_mode<synchronous>, transform_indices = @transform_11, window_bounds = array<i64: 4, 64, 1>}, {pipeline_mode = #tpu.pipeline_mode<synchronous>, transform_indices = @transform_12, window_bounds = array<i64: 4, 128, 128>}, {pipeline_mode = #tpu.pipeline_mode<synchronous>, transform_indices = @transform_13, window_bounds = array<i64: 1, 128>}, {transform_indices = @transform_14, window_bounds = array<i64: 1, 64, 128>}]} {
    %c0 = arith.constant 0 : index
    %c0_0 = arith.constant 0 : index
    %c0_1 = arith.constant 0 : index
    %0 = vector.load %arg1[%c0, %c0_0, %c0_1] : memref<1x64x128xf32, #tpu.memory_space<vmem>>, vector<1x64x128xf32>
    %1 = vector.shape_cast %0 : vector<1x64x128xf32> to vector<64x128xf32>
    %c0_2 = arith.constant 0 : index
    %c0_3 = arith.constant 0 : index
    %2 = vector.load %arg2[%c0_2, %c0_3] : memref<1x128xf32, #tpu.memory_space<vmem>>, vector<1x128xf32>
    %c0_4 = arith.constant 0 : index
    %c0_5 = arith.constant 0 : index
    %3 = vector.load %arg3[%c0_4, %c0_5] : memref<1x128xf32, #tpu.memory_space<vmem>>, vector<1x128xf32>
    %cst = arith.constant dense<0.000000e+00> : vector<64xf32>
    %4 = vector.multi_reduction <add>, %1, %cst [1] : vector<64x128xf32> to vector<64xf32>
    %5 = vector.shape_cast %4 : vector<64xf32> to vector<64x1xf32>
    %cst_6 = arith.constant 1.280000e+02 : f32
    %6 = vector.broadcast %cst_6 : f32 to vector<64x1xf32>
    %7 = arith.divf %5, %6 : vector<64x1xf32>
    %8 = vector.broadcast %7 : vector<64x1xf32> to vector<64x128xf32>
    %9 = arith.subf %1, %8 : vector<64x128xf32>
    %10 = arith.mulf %9, %9 : vector<64x128xf32>
    %cst_7 = arith.constant dense<0.000000e+00> : vector<64xf32>
    %11 = vector.multi_reduction <add>, %10, %cst_7 [1] : vector<64x128xf32> to vector<64xf32>
    %12 = vector.shape_cast %11 : vector<64xf32> to vector<64x1xf32>
    %cst_8 = arith.constant 1.280000e+02 : f32
    %13 = vector.broadcast %cst_8 : f32 to vector<64x1xf32>
    %14 = arith.divf %12, %13 : vector<64x1xf32>
    %cst_9 = arith.constant 9.99999974E-6 : f32
    %15 = vector.broadcast %cst_9 : f32 to vector<64x1xf32>
    %16 = arith.addf %14, %15 : vector<64x1xf32>
    %17 = math.rsqrt %16 : vector<64x1xf32>
    %18 = vector.broadcast %17 : vector<64x1xf32> to vector<64x128xf32>
    %19 = arith.mulf %9, %18 : vector<64x128xf32>
    %20 = vector.broadcast %2 : vector<1x128xf32> to vector<64x128xf32>
    %21 = arith.mulf %19, %20 : vector<64x128xf32>
    %22 = vector.broadcast %3 : vector<1x128xf32> to vector<64x128xf32>
    %23 = arith.addf %21, %22 : vector<64x128xf32>
    %24 = arith.truncf %23 : vector<64x128xf32> to vector<64x128xbf16>
    %c0_10 = arith.constant 0 : index
    %c0_11 = arith.constant 0 : index
    %25 = vector.load %arg4[%c0_10, %c0_11] : memref<128x384xbf16, #tpu.memory_space<vmem>>, vector<128x384xbf16>
    %cst_12 = arith.constant dense<0.000000e+00> : vector<64x384xf32>
    %26 = tpu.matmul %24, %25, %cst_12 {dimension_numbers = #tpu.dot_dimension_numbers<[1], [0], [0], [1], [0, 0, 1, 1], [], []>} : vector<64x128xbf16>, vector<128x384xbf16>, vector<64x384xf32> -> vector<64x384xf32>
    %27 = arith.truncf %26 : vector<64x384xf32> to vector<64x384xbf16>
    %28 = vector.extract_strided_slice %27 {offsets = [0, 0], sizes = [64, 32], strides = [1, 1]} : vector<64x384xbf16> to vector<64x32xbf16>
    %29 = vector.extract_strided_slice %27 {offsets = [0, 128], sizes = [64, 32], strides = [1, 1]} : vector<64x384xbf16> to vector<64x32xbf16>
    %30 = vector.extract_strided_slice %27 {offsets = [0, 256], sizes = [64, 32], strides = [1, 1]} : vector<64x384xbf16> to vector<64x32xbf16>
    %cst_13 = arith.constant dense<0.000000e+00> : vector<64x64xf32>
    %31 = tpu.matmul %28, %29, %cst_13 {dimension_numbers = #tpu.dot_dimension_numbers<[1], [1], [0], [0], [0, 0, 1, 0], [], []>} : vector<64x32xbf16>, vector<64x32xbf16>, vector<64x64xf32> -> vector<64x64xf32>
    %cst_14 = arith.constant dense<0xFF800000> : vector<64xf32>
    %32 = vector.multi_reduction <maximumf>, %31, %cst_14 [1] : vector<64x64xf32> to vector<64xf32>
    %33 = vector.shape_cast %32 : vector<64xf32> to vector<64x1xf32>
    %34 = vector.broadcast %33 : vector<64x1xf32> to vector<64x64xf32>
    %35 = arith.subf %31, %34 : vector<64x64xf32>
    %36 = math.exp %35 : vector<64x64xf32>
    %cst_15 = arith.constant dense<0.000000e+00> : vector<64xf32>
    %37 = vector.multi_reduction <add>, %36, %cst_15 [1] : vector<64x64xf32> to vector<64xf32>
    %38 = vector.shape_cast %37 : vector<64xf32> to vector<64x1xf32>
    %39 = vector.broadcast %38 : vector<64x1xf32> to vector<64x64xf32>
    %40 = arith.divf %36, %39 : vector<64x64xf32>
    %41 = arith.truncf %40 : vector<64x64xf32> to vector<64x64xbf16>
    %cst_16 = arith.constant dense<0.000000e+00> : vector<64x32xf32>
    %42 = tpu.matmul %41, %30, %cst_16 {dimension_numbers = #tpu.dot_dimension_numbers<[1], [0], [0], [1], [0, 0, 1, 1], [], []>} : vector<64x64xbf16>, vector<64x32xbf16>, vector<64x32xf32> -> vector<64x32xf32>
    %43 = vector.extract_strided_slice %27 {offsets = [0, 32], sizes = [64, 32], strides = [1, 1]} : vector<64x384xbf16> to vector<64x32xbf16>
    %44 = vector.extract_strided_slice %27 {offsets = [0, 160], sizes = [64, 32], strides = [1, 1]} : vector<64x384xbf16> to vector<64x32xbf16>
    %45 = vector.extract_strided_slice %27 {offsets = [0, 288], sizes = [64, 32], strides = [1, 1]} : vector<64x384xbf16> to vector<64x32xbf16>
    %cst_17 = arith.constant dense<0.000000e+00> : vector<64x64xf32>
    %46 = tpu.matmul %43, %44, %cst_17 {dimension_numbers = #tpu.dot_dimension_numbers<[1], [1], [0], [0], [0, 0, 1, 0], [], []>} : vector<64x32xbf16>, vector<64x32xbf16>, vector<64x64xf32> -> vector<64x64xf32>
    %cst_18 = arith.constant dense<0xFF800000> : vector<64xf32>
    %47 = vector.multi_reduction <maximumf>, %46, %cst_18 [1] : vector<64x64xf32> to vector<64xf32>
    %48 = vector.shape_cast %47 : vector<64xf32> to vector<64x1xf32>
    %49 = vector.broadcast %48 : vector<64x1xf32> to vector<64x64xf32>
    %50 = arith.subf %46, %49 : vector<64x64xf32>
    %51 = math.exp %50 : vector<64x64xf32>
    %cst_19 = arith.constant dense<0.000000e+00> : vector<64xf32>
    %52 = vector.multi_reduction <add>, %51, %cst_19 [1] : vector<64x64xf32> to vector<64xf32>
    %53 = vector.shape_cast %52 : vector<64xf32> to vector<64x1xf32>
    %54 = vector.broadcast %53 : vector<64x1xf32> to vector<64x64xf32>
    %55 = arith.divf %51, %54 : vector<64x64xf32>
    %56 = arith.truncf %55 : vector<64x64xf32> to vector<64x64xbf16>
    %cst_20 = arith.constant dense<0.000000e+00> : vector<64x32xf32>
    %57 = tpu.matmul %56, %45, %cst_20 {dimension_numbers = #tpu.dot_dimension_numbers<[1], [0], [0], [1], [0, 0, 1, 1], [], []>} : vector<64x64xbf16>, vector<64x32xbf16>, vector<64x32xf32> -> vector<64x32xf32>
    %58 = vector.extract_strided_slice %27 {offsets = [0, 64], sizes = [64, 32], strides = [1, 1]} : vector<64x384xbf16> to vector<64x32xbf16>
    %59 = vector.extract_strided_slice %27 {offsets = [0, 192], sizes = [64, 32], strides = [1, 1]} : vector<64x384xbf16> to vector<64x32xbf16>
    %60 = vector.extract_strided_slice %27 {offsets = [0, 320], sizes = [64, 32], strides = [1, 1]} : vector<64x384xbf16> to vector<64x32xbf16>
    %cst_21 = arith.constant dense<0.000000e+00> : vector<64x64xf32>
    %61 = tpu.matmul %58, %59, %cst_21 {dimension_numbers = #tpu.dot_dimension_numbers<[1], [1], [0], [0], [0, 0, 1, 0], [], []>} : vector<64x32xbf16>, vector<64x32xbf16>, vector<64x64xf32> -> vector<64x64xf32>
    %cst_22 = arith.constant dense<0xFF800000> : vector<64xf32>
    %62 = vector.multi_reduction <maximumf>, %61, %cst_22 [1] : vector<64x64xf32> to vector<64xf32>
    %63 = vector.shape_cast %62 : vector<64xf32> to vector<64x1xf32>
    %64 = vector.broadcast %63 : vector<64x1xf32> to vector<64x64xf32>
    %65 = arith.subf %61, %64 : vector<64x64xf32>
    %66 = math.exp %65 : vector<64x64xf32>
    %cst_23 = arith.constant dense<0.000000e+00> : vector<64xf32>
    %67 = vector.multi_reduction <add>, %66, %cst_23 [1] : vector<64x64xf32> to vector<64xf32>
    %68 = vector.shape_cast %67 : vector<64xf32> to vector<64x1xf32>
    %69 = vector.broadcast %68 : vector<64x1xf32> to vector<64x64xf32>
    %70 = arith.divf %66, %69 : vector<64x64xf32>
    %71 = arith.truncf %70 : vector<64x64xf32> to vector<64x64xbf16>
    %cst_24 = arith.constant dense<0.000000e+00> : vector<64x32xf32>
    %72 = tpu.matmul %71, %60, %cst_24 {dimension_numbers = #tpu.dot_dimension_numbers<[1], [0], [0], [1], [0, 0, 1, 1], [], []>} : vector<64x64xbf16>, vector<64x32xbf16>, vector<64x32xf32> -> vector<64x32xf32>
    %73 = vector.extract_strided_slice %27 {offsets = [0, 96], sizes = [64, 32], strides = [1, 1]} : vector<64x384xbf16> to vector<64x32xbf16>
    %74 = vector.extract_strided_slice %27 {offsets = [0, 224], sizes = [64, 32], strides = [1, 1]} : vector<64x384xbf16> to vector<64x32xbf16>
    %75 = vector.extract_strided_slice %27 {offsets = [0, 352], sizes = [64, 32], strides = [1, 1]} : vector<64x384xbf16> to vector<64x32xbf16>
    %cst_25 = arith.constant dense<0.000000e+00> : vector<64x64xf32>
    %76 = tpu.matmul %73, %74, %cst_25 {dimension_numbers = #tpu.dot_dimension_numbers<[1], [1], [0], [0], [0, 0, 1, 0], [], []>} : vector<64x32xbf16>, vector<64x32xbf16>, vector<64x64xf32> -> vector<64x64xf32>
    %cst_26 = arith.constant dense<0xFF800000> : vector<64xf32>
    %77 = vector.multi_reduction <maximumf>, %76, %cst_26 [1] : vector<64x64xf32> to vector<64xf32>
    %78 = vector.shape_cast %77 : vector<64xf32> to vector<64x1xf32>
    %79 = vector.broadcast %78 : vector<64x1xf32> to vector<64x64xf32>
    %80 = arith.subf %76, %79 : vector<64x64xf32>
    %81 = math.exp %80 : vector<64x64xf32>
    %cst_27 = arith.constant dense<0.000000e+00> : vector<64xf32>
    %82 = vector.multi_reduction <add>, %81, %cst_27 [1] : vector<64x64xf32> to vector<64xf32>
    %83 = vector.shape_cast %82 : vector<64xf32> to vector<64x1xf32>
    %84 = vector.broadcast %83 : vector<64x1xf32> to vector<64x64xf32>
    %85 = arith.divf %81, %84 : vector<64x64xf32>
    %86 = arith.truncf %85 : vector<64x64xf32> to vector<64x64xbf16>
    %cst_28 = arith.constant dense<0.000000e+00> : vector<64x32xf32>
    %87 = tpu.matmul %86, %75, %cst_28 {dimension_numbers = #tpu.dot_dimension_numbers<[1], [0], [0], [1], [0, 0, 1, 1], [], []>} : vector<64x64xbf16>, vector<64x32xbf16>, vector<64x32xf32> -> vector<64x32xf32>
    %88 = tpu.concatenate %42, %57, %72, %87 in 1 : vector<64x32xf32>, vector<64x32xf32>, vector<64x32xf32>, vector<64x32xf32> -> vector<64x128xf32>
    %89 = arith.truncf %88 : vector<64x128xf32> to vector<64x128xbf16>
    %c0_29 = arith.constant 0 : index
    %c0_30 = arith.constant 0 : index
    %90 = vector.load %arg5[%c0_29, %c0_30] : memref<128x128xbf16, #tpu.memory_space<vmem>>, vector<128x128xbf16>
    %cst_31 = arith.constant dense<0.000000e+00> : vector<64x128xf32>
    %91 = tpu.matmul %89, %90, %cst_31 {dimension_numbers = #tpu.dot_dimension_numbers<[1], [0], [0], [1], [0, 0, 1, 1], [], []>} : vector<64x128xbf16>, vector<128x128xbf16>, vector<64x128xf32> -> vector<64x128xf32>
    %92 = arith.addf %1, %91 : vector<64x128xf32>
    %c0_32 = arith.constant 0 : index
    %c0_33 = arith.constant 0 : index
    %93 = vector.load %arg6[%c0_32, %c0_33] : memref<1x128xf32, #tpu.memory_space<vmem>>, vector<1x128xf32>
    %94 = vector.broadcast %93 : vector<1x128xf32> to vector<64x128xf32>
    %95 = arith.addf %92, %94 : vector<64x128xf32>
    %c0_34 = arith.constant 0 : index
    %c0_35 = arith.constant 0 : index
    %96 = vector.load %arg7[%c0_34, %c0_35] : memref<1x128xf32, #tpu.memory_space<vmem>>, vector<1x128xf32>
    %c0_36 = arith.constant 0 : index
    %c0_37 = arith.constant 0 : index
    %97 = vector.load %arg8[%c0_36, %c0_37] : memref<1x128xf32, #tpu.memory_space<vmem>>, vector<1x128xf32>
    %cst_38 = arith.constant dense<0.000000e+00> : vector<64xf32>
    %98 = vector.multi_reduction <add>, %95, %cst_38 [1] : vector<64x128xf32> to vector<64xf32>
    %99 = vector.shape_cast %98 : vector<64xf32> to vector<64x1xf32>
    %cst_39 = arith.constant 1.280000e+02 : f32
    %100 = vector.broadcast %cst_39 : f32 to vector<64x1xf32>
    %101 = arith.divf %99, %100 : vector<64x1xf32>
    %102 = vector.broadcast %101 : vector<64x1xf32> to vector<64x128xf32>
    %103 = arith.subf %95, %102 : vector<64x128xf32>
    %104 = arith.mulf %103, %103 : vector<64x128xf32>
    %cst_40 = arith.constant dense<0.000000e+00> : vector<64xf32>
    %105 = vector.multi_reduction <add>, %104, %cst_40 [1] : vector<64x128xf32> to vector<64xf32>
    %106 = vector.shape_cast %105 : vector<64xf32> to vector<64x1xf32>
    %cst_41 = arith.constant 1.280000e+02 : f32
    %107 = vector.broadcast %cst_41 : f32 to vector<64x1xf32>
    %108 = arith.divf %106, %107 : vector<64x1xf32>
    %cst_42 = arith.constant 9.99999974E-6 : f32
    %109 = vector.broadcast %cst_42 : f32 to vector<64x1xf32>
    %110 = arith.addf %108, %109 : vector<64x1xf32>
    %111 = math.rsqrt %110 : vector<64x1xf32>
    %112 = vector.broadcast %111 : vector<64x1xf32> to vector<64x128xf32>
    %113 = arith.mulf %103, %112 : vector<64x128xf32>
    %114 = vector.broadcast %96 : vector<1x128xf32> to vector<64x128xf32>
    %115 = arith.mulf %113, %114 : vector<64x128xf32>
    %116 = vector.broadcast %97 : vector<1x128xf32> to vector<64x128xf32>
    %117 = arith.addf %115, %116 : vector<64x128xf32>
    %118 = arith.truncf %117 : vector<64x128xf32> to vector<64x128xbf16>
    %c0_43 = arith.constant 0 : index
    %c0_44 = arith.constant 0 : index
    %c0_45 = arith.constant 0 : index
    %119 = vector.load %arg12[%c0_43, %c0_44, %c0_45] : memref<4x64x1xf32, #tpu.memory_space<vmem>>, vector<1x64x1xf32>
    %120 = vector.shape_cast %119 : vector<1x64x1xf32> to vector<64x1xf32>
    %c1 = arith.constant 1 : index
    %c0_46 = arith.constant 0 : index
    %c0_47 = arith.constant 0 : index
    %121 = vector.load %arg12[%c1, %c0_46, %c0_47] : memref<4x64x1xf32, #tpu.memory_space<vmem>>, vector<1x64x1xf32>
    %122 = vector.shape_cast %121 : vector<1x64x1xf32> to vector<64x1xf32>
    %c2 = arith.constant 2 : index
    %c0_48 = arith.constant 0 : index
    %c0_49 = arith.constant 0 : index
    %123 = vector.load %arg12[%c2, %c0_48, %c0_49] : memref<4x64x1xf32, #tpu.memory_space<vmem>>, vector<1x64x1xf32>
    %124 = vector.shape_cast %123 : vector<1x64x1xf32> to vector<64x1xf32>
    %c3 = arith.constant 3 : index
    %c0_50 = arith.constant 0 : index
    %c0_51 = arith.constant 0 : index
    %125 = vector.load %arg12[%c3, %c0_50, %c0_51] : memref<4x64x1xf32, #tpu.memory_space<vmem>>, vector<1x64x1xf32>
    %126 = vector.shape_cast %125 : vector<1x64x1xf32> to vector<64x1xf32>
    %cst_52 = arith.constant 0.000000e+00 : f32
    %127 = vector.broadcast %cst_52 : f32 to vector<64x128xf32>
    %c0_53 = arith.constant 0 : index
    %c0_54 = arith.constant 0 : index
    %c0_55 = arith.constant 0 : index
    %128 = vector.load %arg9[%c0_53, %c0_54, %c0_55] : memref<4x128x128xbf16, #tpu.memory_space<vmem>>, vector<1x128x128xbf16>
    %129 = vector.shape_cast %128 : vector<1x128x128xbf16> to vector<128x128xbf16>
    %cst_56 = arith.constant dense<0.000000e+00> : vector<64x128xf32>
    %130 = tpu.matmul %118, %129, %cst_56 {dimension_numbers = #tpu.dot_dimension_numbers<[1], [0], [0], [1], [0, 0, 1, 1], [], []>} : vector<64x128xbf16>, vector<128x128xbf16>, vector<64x128xf32> -> vector<64x128xf32>
    %c0_57 = arith.constant 0 : index
    %c0_58 = arith.constant 0 : index
    %c0_59 = arith.constant 0 : index
    %131 = vector.load %arg10[%c0_57, %c0_58, %c0_59] : memref<4x1x128xf32, #tpu.memory_space<vmem>>, vector<1x1x128xf32>
    %132 = vector.shape_cast %131 : vector<1x1x128xf32> to vector<1x128xf32>
    %133 = vector.broadcast %132 : vector<1x128xf32> to vector<64x128xf32>
    %134 = arith.addf %130, %133 : vector<64x128xf32>
    %c1_i32 = arith.constant 1 : i32
    %135 = tpu.dynamic_rotate %134 by %c1_i32 dim 0 : vector<64x128xf32>, i32 -> vector<64x128xf32>
    %136 = vector.broadcast %120 : vector<64x1xf32> to vector<64x128xf32>
    %137 = arith.mulf %135, %136 : vector<64x128xf32>
    %c63_i32 = arith.constant 63 : i32
    %138 = tpu.dynamic_rotate %134 by %c63_i32 dim 0 : vector<64x128xf32>, i32 -> vector<64x128xf32>
    %139 = vector.broadcast %122 : vector<64x1xf32> to vector<64x128xf32>
    %140 = arith.mulf %138, %139 : vector<64x128xf32>
    %c0_60 = arith.constant 0 : index
    %c0_61 = arith.constant 0 : index
    %c0_62 = arith.constant 0 : index
    %c0_63 = arith.constant 0 : index
    %141 = vector.load %arg11[%c0_60, %c0_61, %c0_62, %c0_63] : memref<4x9x1x128xf32, #tpu.memory_space<vmem>>, vector<1x1x1x128xf32>
    %142 = vector.shape_cast %141 : vector<1x1x1x128xf32> to vector<1x128xf32>
    %c0_64 = arith.constant 0 : index
    %c1_65 = arith.constant 1 : index
    %c0_66 = arith.constant 0 : index
    %c0_67 = arith.constant 0 : index
    %143 = vector.load %arg11[%c0_64, %c1_65, %c0_66, %c0_67] : memref<4x9x1x128xf32, #tpu.memory_space<vmem>>, vector<1x1x1x128xf32>
    %144 = vector.shape_cast %143 : vector<1x1x1x128xf32> to vector<1x128xf32>
    %c0_68 = arith.constant 0 : index
    %c2_69 = arith.constant 2 : index
    %c0_70 = arith.constant 0 : index
    %c0_71 = arith.constant 0 : index
    %145 = vector.load %arg11[%c0_68, %c2_69, %c0_70, %c0_71] : memref<4x9x1x128xf32, #tpu.memory_space<vmem>>, vector<1x1x1x128xf32>
    %146 = vector.shape_cast %145 : vector<1x1x1x128xf32> to vector<1x128xf32>
    %c0_72 = arith.constant 0 : index
    %c3_73 = arith.constant 3 : index
    %c0_74 = arith.constant 0 : index
    %c0_75 = arith.constant 0 : index
    %147 = vector.load %arg11[%c0_72, %c3_73, %c0_74, %c0_75] : memref<4x9x1x128xf32, #tpu.memory_space<vmem>>, vector<1x1x1x128xf32>
    %148 = vector.shape_cast %147 : vector<1x1x1x128xf32> to vector<1x128xf32>
    %c0_76 = arith.constant 0 : index
    %c4 = arith.constant 4 : index
    %c0_77 = arith.constant 0 : index
    %c0_78 = arith.constant 0 : index
    %149 = vector.load %arg11[%c0_76, %c4, %c0_77, %c0_78] : memref<4x9x1x128xf32, #tpu.memory_space<vmem>>, vector<1x1x1x128xf32>
    %150 = vector.shape_cast %149 : vector<1x1x1x128xf32> to vector<1x128xf32>
    %c0_79 = arith.constant 0 : index
    %c5 = arith.constant 5 : index
    %c0_80 = arith.constant 0 : index
    %c0_81 = arith.constant 0 : index
    %151 = vector.load %arg11[%c0_79, %c5, %c0_80, %c0_81] : memref<4x9x1x128xf32, #tpu.memory_space<vmem>>, vector<1x1x1x128xf32>
    %152 = vector.shape_cast %151 : vector<1x1x1x128xf32> to vector<1x128xf32>
    %c0_82 = arith.constant 0 : index
    %c6 = arith.constant 6 : index
    %c0_83 = arith.constant 0 : index
    %c0_84 = arith.constant 0 : index
    %153 = vector.load %arg11[%c0_82, %c6, %c0_83, %c0_84] : memref<4x9x1x128xf32, #tpu.memory_space<vmem>>, vector<1x1x1x128xf32>
    %154 = vector.shape_cast %153 : vector<1x1x1x128xf32> to vector<1x128xf32>
    %c0_85 = arith.constant 0 : index
    %c7 = arith.constant 7 : index
    %c0_86 = arith.constant 0 : index
    %c0_87 = arith.constant 0 : index
    %155 = vector.load %arg11[%c0_85, %c7, %c0_86, %c0_87] : memref<4x9x1x128xf32, #tpu.memory_space<vmem>>, vector<1x1x1x128xf32>
    %156 = vector.shape_cast %155 : vector<1x1x1x128xf32> to vector<1x128xf32>
    %c0_88 = arith.constant 0 : index
    %c8 = arith.constant 8 : index
    %c0_89 = arith.constant 0 : index
    %c0_90 = arith.constant 0 : index
    %157 = vector.load %arg11[%c0_88, %c8, %c0_89, %c0_90] : memref<4x9x1x128xf32, #tpu.memory_space<vmem>>, vector<1x1x1x128xf32>
    %158 = vector.shape_cast %157 : vector<1x1x1x128xf32> to vector<1x128xf32>
    %c8_i32 = arith.constant 8 : i32
    %159 = tpu.dynamic_rotate %137 by %c8_i32 dim 0 : vector<64x128xf32>, i32 -> vector<64x128xf32>
    %160 = vector.broadcast %142 : vector<1x128xf32> to vector<64x128xf32>
    %161 = arith.mulf %159, %160 : vector<64x128xf32>
    %c8_i32_91 = arith.constant 8 : i32
    %162 = tpu.dynamic_rotate %134 by %c8_i32_91 dim 0 : vector<64x128xf32>, i32 -> vector<64x128xf32>
    %163 = vector.broadcast %144 : vector<1x128xf32> to vector<64x128xf32>
    %164 = arith.mulf %162, %163 : vector<64x128xf32>
    %165 = arith.addf %161, %164 : vector<64x128xf32>
    %c8_i32_92 = arith.constant 8 : i32
    %166 = tpu.dynamic_rotate %140 by %c8_i32_92 dim 0 : vector<64x128xf32>, i32 -> vector<64x128xf32>
    %167 = vector.broadcast %146 : vector<1x128xf32> to vector<64x128xf32>
    %168 = arith.mulf %166, %167 : vector<64x128xf32>
    %169 = arith.addf %165, %168 : vector<64x128xf32>
    %170 = vector.broadcast %124 : vector<64x1xf32> to vector<64x128xf32>
    %171 = arith.mulf %169, %170 : vector<64x128xf32>
    %172 = vector.broadcast %148 : vector<1x128xf32> to vector<64x128xf32>
    %173 = arith.mulf %137, %172 : vector<64x128xf32>
    %174 = vector.broadcast %150 : vector<1x128xf32> to vector<64x128xf32>
    %175 = arith.mulf %134, %174 : vector<64x128xf32>
    %176 = arith.addf %173, %175 : vector<64x128xf32>
    %177 = vector.broadcast %152 : vector<1x128xf32> to vector<64x128xf32>
    %178 = arith.mulf %140, %177 : vector<64x128xf32>
    %179 = arith.addf %176, %178 : vector<64x128xf32>
    %c56_i32 = arith.constant 56 : i32
    %180 = tpu.dynamic_rotate %137 by %c56_i32 dim 0 : vector<64x128xf32>, i32 -> vector<64x128xf32>
    %181 = vector.broadcast %154 : vector<1x128xf32> to vector<64x128xf32>
    %182 = arith.mulf %180, %181 : vector<64x128xf32>
    %c56_i32_93 = arith.constant 56 : i32
    %183 = tpu.dynamic_rotate %134 by %c56_i32_93 dim 0 : vector<64x128xf32>, i32 -> vector<64x128xf32>
    %184 = vector.broadcast %156 : vector<1x128xf32> to vector<64x128xf32>
    %185 = arith.mulf %183, %184 : vector<64x128xf32>
    %186 = arith.addf %182, %185 : vector<64x128xf32>
    %c56_i32_94 = arith.constant 56 : i32
    %187 = tpu.dynamic_rotate %140 by %c56_i32_94 dim 0 : vector<64x128xf32>, i32 -> vector<64x128xf32>
    %188 = vector.broadcast %158 : vector<1x128xf32> to vector<64x128xf32>
    %189 = arith.mulf %187, %188 : vector<64x128xf32>
    %190 = arith.addf %186, %189 : vector<64x128xf32>
    %191 = vector.broadcast %126 : vector<64x1xf32> to vector<64x128xf32>
    %192 = arith.mulf %190, %191 : vector<64x128xf32>
    %193 = arith.addf %171, %179 : vector<64x128xf32>
    %194 = arith.addf %193, %192 : vector<64x128xf32>
    %cst_95 = arith.constant 5.000000e-01 : f32
    %195 = vector.broadcast %cst_95 : f32 to vector<64x128xf32>
    %196 = arith.mulf %195, %194 : vector<64x128xf32>
    %cst_96 = arith.constant 4.471500e-02 : f32
    %197 = vector.broadcast %cst_96 : f32 to vector<64x128xf32>
    %198 = arith.mulf %197, %194 : vector<64x128xf32>
    %199 = arith.mulf %198, %194 : vector<64x128xf32>
    %200 = arith.mulf %199, %194 : vector<64x128xf32>
    %201 = arith.addf %194, %200 : vector<64x128xf32>
    %cst_97 = arith.constant 0.797884583 : f32
    %202 = vector.broadcast %cst_97 : f32 to vector<64x128xf32>
    %203 = arith.mulf %202, %201 : vector<64x128xf32>
    %204 = math.tanh %203 : vector<64x128xf32>
    %cst_98 = arith.constant 1.000000e+00 : f32
    %205 = vector.broadcast %cst_98 : f32 to vector<64x128xf32>
    %206 = arith.addf %205, %204 : vector<64x128xf32>
    %207 = arith.mulf %196, %206 : vector<64x128xf32>
    %208 = arith.truncf %207 : vector<64x128xf32> to vector<64x128xbf16>
    %c0_99 = arith.constant 0 : index
    %c0_100 = arith.constant 0 : index
    %c0_101 = arith.constant 0 : index
    %209 = vector.load %arg13[%c0_99, %c0_100, %c0_101] : memref<4x128x128xbf16, #tpu.memory_space<vmem>>, vector<1x128x128xbf16>
    %210 = vector.shape_cast %209 : vector<1x128x128xbf16> to vector<128x128xbf16>
    %cst_102 = arith.constant dense<0.000000e+00> : vector<64x128xf32>
    %211 = tpu.matmul %208, %210, %cst_102 {dimension_numbers = #tpu.dot_dimension_numbers<[1], [0], [0], [1], [0, 0, 1, 1], [], []>} : vector<64x128xbf16>, vector<128x128xbf16>, vector<64x128xf32> -> vector<64x128xf32>
    %212 = arith.addf %127, %211 : vector<64x128xf32>
    %c1_103 = arith.constant 1 : index
    %c0_104 = arith.constant 0 : index
    %c0_105 = arith.constant 0 : index
    %213 = vector.load %arg9[%c1_103, %c0_104, %c0_105] : memref<4x128x128xbf16, #tpu.memory_space<vmem>>, vector<1x128x128xbf16>
    %214 = vector.shape_cast %213 : vector<1x128x128xbf16> to vector<128x128xbf16>
    %cst_106 = arith.constant dense<0.000000e+00> : vector<64x128xf32>
    %215 = tpu.matmul %118, %214, %cst_106 {dimension_numbers = #tpu.dot_dimension_numbers<[1], [0], [0], [1], [0, 0, 1, 1], [], []>} : vector<64x128xbf16>, vector<128x128xbf16>, vector<64x128xf32> -> vector<64x128xf32>
    %c1_107 = arith.constant 1 : index
    %c0_108 = arith.constant 0 : index
    %c0_109 = arith.constant 0 : index
    %216 = vector.load %arg10[%c1_107, %c0_108, %c0_109] : memref<4x1x128xf32, #tpu.memory_space<vmem>>, vector<1x1x128xf32>
    %217 = vector.shape_cast %216 : vector<1x1x128xf32> to vector<1x128xf32>
    %218 = vector.broadcast %217 : vector<1x128xf32> to vector<64x128xf32>
    %219 = arith.addf %215, %218 : vector<64x128xf32>
    %c1_i32_110 = arith.constant 1 : i32
    %220 = tpu.dynamic_rotate %219 by %c1_i32_110 dim 0 : vector<64x128xf32>, i32 -> vector<64x128xf32>
    %221 = vector.broadcast %120 : vector<64x1xf32> to vector<64x128xf32>
    %222 = arith.mulf %220, %221 : vector<64x128xf32>
    %c63_i32_111 = arith.constant 63 : i32
    %223 = tpu.dynamic_rotate %219 by %c63_i32_111 dim 0 : vector<64x128xf32>, i32 -> vector<64x128xf32>
    %224 = vector.broadcast %122 : vector<64x1xf32> to vector<64x128xf32>
    %225 = arith.mulf %223, %224 : vector<64x128xf32>
    %c1_112 = arith.constant 1 : index
    %c0_113 = arith.constant 0 : index
    %c0_114 = arith.constant 0 : index
    %c0_115 = arith.constant 0 : index
    %226 = vector.load %arg11[%c1_112, %c0_113, %c0_114, %c0_115] : memref<4x9x1x128xf32, #tpu.memory_space<vmem>>, vector<1x1x1x128xf32>
    %227 = vector.shape_cast %226 : vector<1x1x1x128xf32> to vector<1x128xf32>
    %c1_116 = arith.constant 1 : index
    %c1_117 = arith.constant 1 : index
    %c0_118 = arith.constant 0 : index
    %c0_119 = arith.constant 0 : index
    %228 = vector.load %arg11[%c1_116, %c1_117, %c0_118, %c0_119] : memref<4x9x1x128xf32, #tpu.memory_space<vmem>>, vector<1x1x1x128xf32>
    %229 = vector.shape_cast %228 : vector<1x1x1x128xf32> to vector<1x128xf32>
    %c1_120 = arith.constant 1 : index
    %c2_121 = arith.constant 2 : index
    %c0_122 = arith.constant 0 : index
    %c0_123 = arith.constant 0 : index
    %230 = vector.load %arg11[%c1_120, %c2_121, %c0_122, %c0_123] : memref<4x9x1x128xf32, #tpu.memory_space<vmem>>, vector<1x1x1x128xf32>
    %231 = vector.shape_cast %230 : vector<1x1x1x128xf32> to vector<1x128xf32>
    %c1_124 = arith.constant 1 : index
    %c3_125 = arith.constant 3 : index
    %c0_126 = arith.constant 0 : index
    %c0_127 = arith.constant 0 : index
    %232 = vector.load %arg11[%c1_124, %c3_125, %c0_126, %c0_127] : memref<4x9x1x128xf32, #tpu.memory_space<vmem>>, vector<1x1x1x128xf32>
    %233 = vector.shape_cast %232 : vector<1x1x1x128xf32> to vector<1x128xf32>
    %c1_128 = arith.constant 1 : index
    %c4_129 = arith.constant 4 : index
    %c0_130 = arith.constant 0 : index
    %c0_131 = arith.constant 0 : index
    %234 = vector.load %arg11[%c1_128, %c4_129, %c0_130, %c0_131] : memref<4x9x1x128xf32, #tpu.memory_space<vmem>>, vector<1x1x1x128xf32>
    %235 = vector.shape_cast %234 : vector<1x1x1x128xf32> to vector<1x128xf32>
    %c1_132 = arith.constant 1 : index
    %c5_133 = arith.constant 5 : index
    %c0_134 = arith.constant 0 : index
    %c0_135 = arith.constant 0 : index
    %236 = vector.load %arg11[%c1_132, %c5_133, %c0_134, %c0_135] : memref<4x9x1x128xf32, #tpu.memory_space<vmem>>, vector<1x1x1x128xf32>
    %237 = vector.shape_cast %236 : vector<1x1x1x128xf32> to vector<1x128xf32>
    %c1_136 = arith.constant 1 : index
    %c6_137 = arith.constant 6 : index
    %c0_138 = arith.constant 0 : index
    %c0_139 = arith.constant 0 : index
    %238 = vector.load %arg11[%c1_136, %c6_137, %c0_138, %c0_139] : memref<4x9x1x128xf32, #tpu.memory_space<vmem>>, vector<1x1x1x128xf32>
    %239 = vector.shape_cast %238 : vector<1x1x1x128xf32> to vector<1x128xf32>
    %c1_140 = arith.constant 1 : index
    %c7_141 = arith.constant 7 : index
    %c0_142 = arith.constant 0 : index
    %c0_143 = arith.constant 0 : index
    %240 = vector.load %arg11[%c1_140, %c7_141, %c0_142, %c0_143] : memref<4x9x1x128xf32, #tpu.memory_space<vmem>>, vector<1x1x1x128xf32>
    %241 = vector.shape_cast %240 : vector<1x1x1x128xf32> to vector<1x128xf32>
    %c1_144 = arith.constant 1 : index
    %c8_145 = arith.constant 8 : index
    %c0_146 = arith.constant 0 : index
    %c0_147 = arith.constant 0 : index
    %242 = vector.load %arg11[%c1_144, %c8_145, %c0_146, %c0_147] : memref<4x9x1x128xf32, #tpu.memory_space<vmem>>, vector<1x1x1x128xf32>
    %243 = vector.shape_cast %242 : vector<1x1x1x128xf32> to vector<1x128xf32>
    %c8_i32_148 = arith.constant 8 : i32
    %244 = tpu.dynamic_rotate %222 by %c8_i32_148 dim 0 : vector<64x128xf32>, i32 -> vector<64x128xf32>
    %245 = vector.broadcast %227 : vector<1x128xf32> to vector<64x128xf32>
    %246 = arith.mulf %244, %245 : vector<64x128xf32>
    %c8_i32_149 = arith.constant 8 : i32
    %247 = tpu.dynamic_rotate %219 by %c8_i32_149 dim 0 : vector<64x128xf32>, i32 -> vector<64x128xf32>
    %248 = vector.broadcast %229 : vector<1x128xf32> to vector<64x128xf32>
    %249 = arith.mulf %247, %248 : vector<64x128xf32>
    %250 = arith.addf %246, %249 : vector<64x128xf32>
    %c8_i32_150 = arith.constant 8 : i32
    %251 = tpu.dynamic_rotate %225 by %c8_i32_150 dim 0 : vector<64x128xf32>, i32 -> vector<64x128xf32>
    %252 = vector.broadcast %231 : vector<1x128xf32> to vector<64x128xf32>
    %253 = arith.mulf %251, %252 : vector<64x128xf32>
    %254 = arith.addf %250, %253 : vector<64x128xf32>
    %255 = vector.broadcast %124 : vector<64x1xf32> to vector<64x128xf32>
    %256 = arith.mulf %254, %255 : vector<64x128xf32>
    %257 = vector.broadcast %233 : vector<1x128xf32> to vector<64x128xf32>
    %258 = arith.mulf %222, %257 : vector<64x128xf32>
    %259 = vector.broadcast %235 : vector<1x128xf32> to vector<64x128xf32>
    %260 = arith.mulf %219, %259 : vector<64x128xf32>
    %261 = arith.addf %258, %260 : vector<64x128xf32>
    %262 = vector.broadcast %237 : vector<1x128xf32> to vector<64x128xf32>
    %263 = arith.mulf %225, %262 : vector<64x128xf32>
    %264 = arith.addf %261, %263 : vector<64x128xf32>
    %c56_i32_151 = arith.constant 56 : i32
    %265 = tpu.dynamic_rotate %222 by %c56_i32_151 dim 0 : vector<64x128xf32>, i32 -> vector<64x128xf32>
    %266 = vector.broadcast %239 : vector<1x128xf32> to vector<64x128xf32>
    %267 = arith.mulf %265, %266 : vector<64x128xf32>
    %c56_i32_152 = arith.constant 56 : i32
    %268 = tpu.dynamic_rotate %219 by %c56_i32_152 dim 0 : vector<64x128xf32>, i32 -> vector<64x128xf32>
    %269 = vector.broadcast %241 : vector<1x128xf32> to vector<64x128xf32>
    %270 = arith.mulf %268, %269 : vector<64x128xf32>
    %271 = arith.addf %267, %270 : vector<64x128xf32>
    %c56_i32_153 = arith.constant 56 : i32
    %272 = tpu.dynamic_rotate %225 by %c56_i32_153 dim 0 : vector<64x128xf32>, i32 -> vector<64x128xf32>
    %273 = vector.broadcast %243 : vector<1x128xf32> to vector<64x128xf32>
    %274 = arith.mulf %272, %273 : vector<64x128xf32>
    %275 = arith.addf %271, %274 : vector<64x128xf32>
    %276 = vector.broadcast %126 : vector<64x1xf32> to vector<64x128xf32>
    %277 = arith.mulf %275, %276 : vector<64x128xf32>
    %278 = arith.addf %256, %264 : vector<64x128xf32>
    %279 = arith.addf %278, %277 : vector<64x128xf32>
    %cst_154 = arith.constant 5.000000e-01 : f32
    %280 = vector.broadcast %cst_154 : f32 to vector<64x128xf32>
    %281 = arith.mulf %280, %279 : vector<64x128xf32>
    %cst_155 = arith.constant 4.471500e-02 : f32
    %282 = vector.broadcast %cst_155 : f32 to vector<64x128xf32>
    %283 = arith.mulf %282, %279 : vector<64x128xf32>
    %284 = arith.mulf %283, %279 : vector<64x128xf32>
    %285 = arith.mulf %284, %279 : vector<64x128xf32>
    %286 = arith.addf %279, %285 : vector<64x128xf32>
    %cst_156 = arith.constant 0.797884583 : f32
    %287 = vector.broadcast %cst_156 : f32 to vector<64x128xf32>
    %288 = arith.mulf %287, %286 : vector<64x128xf32>
    %289 = math.tanh %288 : vector<64x128xf32>
    %cst_157 = arith.constant 1.000000e+00 : f32
    %290 = vector.broadcast %cst_157 : f32 to vector<64x128xf32>
    %291 = arith.addf %290, %289 : vector<64x128xf32>
    %292 = arith.mulf %281, %291 : vector<64x128xf32>
    %293 = arith.truncf %292 : vector<64x128xf32> to vector<64x128xbf16>
    %c1_158 = arith.constant 1 : index
    %c0_159 = arith.constant 0 : index
    %c0_160 = arith.constant 0 : index
    %294 = vector.load %arg13[%c1_158, %c0_159, %c0_160] : memref<4x128x128xbf16, #tpu.memory_space<vmem>>, vector<1x128x128xbf16>
    %295 = vector.shape_cast %294 : vector<1x128x128xbf16> to vector<128x128xbf16>
    %cst_161 = arith.constant dense<0.000000e+00> : vector<64x128xf32>
    %296 = tpu.matmul %293, %295, %cst_161 {dimension_numbers = #tpu.dot_dimension_numbers<[1], [0], [0], [1], [0, 0, 1, 1], [], []>} : vector<64x128xbf16>, vector<128x128xbf16>, vector<64x128xf32> -> vector<64x128xf32>
    %297 = arith.addf %212, %296 : vector<64x128xf32>
    %c2_162 = arith.constant 2 : index
    %c0_163 = arith.constant 0 : index
    %c0_164 = arith.constant 0 : index
    %298 = vector.load %arg9[%c2_162, %c0_163, %c0_164] : memref<4x128x128xbf16, #tpu.memory_space<vmem>>, vector<1x128x128xbf16>
    %299 = vector.shape_cast %298 : vector<1x128x128xbf16> to vector<128x128xbf16>
    %cst_165 = arith.constant dense<0.000000e+00> : vector<64x128xf32>
    %300 = tpu.matmul %118, %299, %cst_165 {dimension_numbers = #tpu.dot_dimension_numbers<[1], [0], [0], [1], [0, 0, 1, 1], [], []>} : vector<64x128xbf16>, vector<128x128xbf16>, vector<64x128xf32> -> vector<64x128xf32>
    %c2_166 = arith.constant 2 : index
    %c0_167 = arith.constant 0 : index
    %c0_168 = arith.constant 0 : index
    %301 = vector.load %arg10[%c2_166, %c0_167, %c0_168] : memref<4x1x128xf32, #tpu.memory_space<vmem>>, vector<1x1x128xf32>
    %302 = vector.shape_cast %301 : vector<1x1x128xf32> to vector<1x128xf32>
    %303 = vector.broadcast %302 : vector<1x128xf32> to vector<64x128xf32>
    %304 = arith.addf %300, %303 : vector<64x128xf32>
    %c1_i32_169 = arith.constant 1 : i32
    %305 = tpu.dynamic_rotate %304 by %c1_i32_169 dim 0 : vector<64x128xf32>, i32 -> vector<64x128xf32>
    %306 = vector.broadcast %120 : vector<64x1xf32> to vector<64x128xf32>
    %307 = arith.mulf %305, %306 : vector<64x128xf32>
    %c63_i32_170 = arith.constant 63 : i32
    %308 = tpu.dynamic_rotate %304 by %c63_i32_170 dim 0 : vector<64x128xf32>, i32 -> vector<64x128xf32>
    %309 = vector.broadcast %122 : vector<64x1xf32> to vector<64x128xf32>
    %310 = arith.mulf %308, %309 : vector<64x128xf32>
    %c2_171 = arith.constant 2 : index
    %c0_172 = arith.constant 0 : index
    %c0_173 = arith.constant 0 : index
    %c0_174 = arith.constant 0 : index
    %311 = vector.load %arg11[%c2_171, %c0_172, %c0_173, %c0_174] : memref<4x9x1x128xf32, #tpu.memory_space<vmem>>, vector<1x1x1x128xf32>
    %312 = vector.shape_cast %311 : vector<1x1x1x128xf32> to vector<1x128xf32>
    %c2_175 = arith.constant 2 : index
    %c1_176 = arith.constant 1 : index
    %c0_177 = arith.constant 0 : index
    %c0_178 = arith.constant 0 : index
    %313 = vector.load %arg11[%c2_175, %c1_176, %c0_177, %c0_178] : memref<4x9x1x128xf32, #tpu.memory_space<vmem>>, vector<1x1x1x128xf32>
    %314 = vector.shape_cast %313 : vector<1x1x1x128xf32> to vector<1x128xf32>
    %c2_179 = arith.constant 2 : index
    %c2_180 = arith.constant 2 : index
    %c0_181 = arith.constant 0 : index
    %c0_182 = arith.constant 0 : index
    %315 = vector.load %arg11[%c2_179, %c2_180, %c0_181, %c0_182] : memref<4x9x1x128xf32, #tpu.memory_space<vmem>>, vector<1x1x1x128xf32>
    %316 = vector.shape_cast %315 : vector<1x1x1x128xf32> to vector<1x128xf32>
    %c2_183 = arith.constant 2 : index
    %c3_184 = arith.constant 3 : index
    %c0_185 = arith.constant 0 : index
    %c0_186 = arith.constant 0 : index
    %317 = vector.load %arg11[%c2_183, %c3_184, %c0_185, %c0_186] : memref<4x9x1x128xf32, #tpu.memory_space<vmem>>, vector<1x1x1x128xf32>
    %318 = vector.shape_cast %317 : vector<1x1x1x128xf32> to vector<1x128xf32>
    %c2_187 = arith.constant 2 : index
    %c4_188 = arith.constant 4 : index
    %c0_189 = arith.constant 0 : index
    %c0_190 = arith.constant 0 : index
    %319 = vector.load %arg11[%c2_187, %c4_188, %c0_189, %c0_190] : memref<4x9x1x128xf32, #tpu.memory_space<vmem>>, vector<1x1x1x128xf32>
    %320 = vector.shape_cast %319 : vector<1x1x1x128xf32> to vector<1x128xf32>
    %c2_191 = arith.constant 2 : index
    %c5_192 = arith.constant 5 : index
    %c0_193 = arith.constant 0 : index
    %c0_194 = arith.constant 0 : index
    %321 = vector.load %arg11[%c2_191, %c5_192, %c0_193, %c0_194] : memref<4x9x1x128xf32, #tpu.memory_space<vmem>>, vector<1x1x1x128xf32>
    %322 = vector.shape_cast %321 : vector<1x1x1x128xf32> to vector<1x128xf32>
    %c2_195 = arith.constant 2 : index
    %c6_196 = arith.constant 6 : index
    %c0_197 = arith.constant 0 : index
    %c0_198 = arith.constant 0 : index
    %323 = vector.load %arg11[%c2_195, %c6_196, %c0_197, %c0_198] : memref<4x9x1x128xf32, #tpu.memory_space<vmem>>, vector<1x1x1x128xf32>
    %324 = vector.shape_cast %323 : vector<1x1x1x128xf32> to vector<1x128xf32>
    %c2_199 = arith.constant 2 : index
    %c7_200 = arith.constant 7 : index
    %c0_201 = arith.constant 0 : index
    %c0_202 = arith.constant 0 : index
    %325 = vector.load %arg11[%c2_199, %c7_200, %c0_201, %c0_202] : memref<4x9x1x128xf32, #tpu.memory_space<vmem>>, vector<1x1x1x128xf32>
    %326 = vector.shape_cast %325 : vector<1x1x1x128xf32> to vector<1x128xf32>
    %c2_203 = arith.constant 2 : index
    %c8_204 = arith.constant 8 : index
    %c0_205 = arith.constant 0 : index
    %c0_206 = arith.constant 0 : index
    %327 = vector.load %arg11[%c2_203, %c8_204, %c0_205, %c0_206] : memref<4x9x1x128xf32, #tpu.memory_space<vmem>>, vector<1x1x1x128xf32>
    %328 = vector.shape_cast %327 : vector<1x1x1x128xf32> to vector<1x128xf32>
    %c8_i32_207 = arith.constant 8 : i32
    %329 = tpu.dynamic_rotate %307 by %c8_i32_207 dim 0 : vector<64x128xf32>, i32 -> vector<64x128xf32>
    %330 = vector.broadcast %312 : vector<1x128xf32> to vector<64x128xf32>
    %331 = arith.mulf %329, %330 : vector<64x128xf32>
    %c8_i32_208 = arith.constant 8 : i32
    %332 = tpu.dynamic_rotate %304 by %c8_i32_208 dim 0 : vector<64x128xf32>, i32 -> vector<64x128xf32>
    %333 = vector.broadcast %314 : vector<1x128xf32> to vector<64x128xf32>
    %334 = arith.mulf %332, %333 : vector<64x128xf32>
    %335 = arith.addf %331, %334 : vector<64x128xf32>
    %c8_i32_209 = arith.constant 8 : i32
    %336 = tpu.dynamic_rotate %310 by %c8_i32_209 dim 0 : vector<64x128xf32>, i32 -> vector<64x128xf32>
    %337 = vector.broadcast %316 : vector<1x128xf32> to vector<64x128xf32>
    %338 = arith.mulf %336, %337 : vector<64x128xf32>
    %339 = arith.addf %335, %338 : vector<64x128xf32>
    %340 = vector.broadcast %124 : vector<64x1xf32> to vector<64x128xf32>
    %341 = arith.mulf %339, %340 : vector<64x128xf32>
    %342 = vector.broadcast %318 : vector<1x128xf32> to vector<64x128xf32>
    %343 = arith.mulf %307, %342 : vector<64x128xf32>
    %344 = vector.broadcast %320 : vector<1x128xf32> to vector<64x128xf32>
    %345 = arith.mulf %304, %344 : vector<64x128xf32>
    %346 = arith.addf %343, %345 : vector<64x128xf32>
    %347 = vector.broadcast %322 : vector<1x128xf32> to vector<64x128xf32>
    %348 = arith.mulf %310, %347 : vector<64x128xf32>
    %349 = arith.addf %346, %348 : vector<64x128xf32>
    %c56_i32_210 = arith.constant 56 : i32
    %350 = tpu.dynamic_rotate %307 by %c56_i32_210 dim 0 : vector<64x128xf32>, i32 -> vector<64x128xf32>
    %351 = vector.broadcast %324 : vector<1x128xf32> to vector<64x128xf32>
    %352 = arith.mulf %350, %351 : vector<64x128xf32>
    %c56_i32_211 = arith.constant 56 : i32
    %353 = tpu.dynamic_rotate %304 by %c56_i32_211 dim 0 : vector<64x128xf32>, i32 -> vector<64x128xf32>
    %354 = vector.broadcast %326 : vector<1x128xf32> to vector<64x128xf32>
    %355 = arith.mulf %353, %354 : vector<64x128xf32>
    %356 = arith.addf %352, %355 : vector<64x128xf32>
    %c56_i32_212 = arith.constant 56 : i32
    %357 = tpu.dynamic_rotate %310 by %c56_i32_212 dim 0 : vector<64x128xf32>, i32 -> vector<64x128xf32>
    %358 = vector.broadcast %328 : vector<1x128xf32> to vector<64x128xf32>
    %359 = arith.mulf %357, %358 : vector<64x128xf32>
    %360 = arith.addf %356, %359 : vector<64x128xf32>
    %361 = vector.broadcast %126 : vector<64x1xf32> to vector<64x128xf32>
    %362 = arith.mulf %360, %361 : vector<64x128xf32>
    %363 = arith.addf %341, %349 : vector<64x128xf32>
    %364 = arith.addf %363, %362 : vector<64x128xf32>
    %cst_213 = arith.constant 5.000000e-01 : f32
    %365 = vector.broadcast %cst_213 : f32 to vector<64x128xf32>
    %366 = arith.mulf %365, %364 : vector<64x128xf32>
    %cst_214 = arith.constant 4.471500e-02 : f32
    %367 = vector.broadcast %cst_214 : f32 to vector<64x128xf32>
    %368 = arith.mulf %367, %364 : vector<64x128xf32>
    %369 = arith.mulf %368, %364 : vector<64x128xf32>
    %370 = arith.mulf %369, %364 : vector<64x128xf32>
    %371 = arith.addf %364, %370 : vector<64x128xf32>
    %cst_215 = arith.constant 0.797884583 : f32
    %372 = vector.broadcast %cst_215 : f32 to vector<64x128xf32>
    %373 = arith.mulf %372, %371 : vector<64x128xf32>
    %374 = math.tanh %373 : vector<64x128xf32>
    %cst_216 = arith.constant 1.000000e+00 : f32
    %375 = vector.broadcast %cst_216 : f32 to vector<64x128xf32>
    %376 = arith.addf %375, %374 : vector<64x128xf32>
    %377 = arith.mulf %366, %376 : vector<64x128xf32>
    %378 = arith.truncf %377 : vector<64x128xf32> to vector<64x128xbf16>
    %c2_217 = arith.constant 2 : index
    %c0_218 = arith.constant 0 : index
    %c0_219 = arith.constant 0 : index
    %379 = vector.load %arg13[%c2_217, %c0_218, %c0_219] : memref<4x128x128xbf16, #tpu.memory_space<vmem>>, vector<1x128x128xbf16>
    %380 = vector.shape_cast %379 : vector<1x128x128xbf16> to vector<128x128xbf16>
    %cst_220 = arith.constant dense<0.000000e+00> : vector<64x128xf32>
    %381 = tpu.matmul %378, %380, %cst_220 {dimension_numbers = #tpu.dot_dimension_numbers<[1], [0], [0], [1], [0, 0, 1, 1], [], []>} : vector<64x128xbf16>, vector<128x128xbf16>, vector<64x128xf32> -> vector<64x128xf32>
    %382 = arith.addf %297, %381 : vector<64x128xf32>
    %c3_221 = arith.constant 3 : index
    %c0_222 = arith.constant 0 : index
    %c0_223 = arith.constant 0 : index
    %383 = vector.load %arg9[%c3_221, %c0_222, %c0_223] : memref<4x128x128xbf16, #tpu.memory_space<vmem>>, vector<1x128x128xbf16>
    %384 = vector.shape_cast %383 : vector<1x128x128xbf16> to vector<128x128xbf16>
    %cst_224 = arith.constant dense<0.000000e+00> : vector<64x128xf32>
    %385 = tpu.matmul %118, %384, %cst_224 {dimension_numbers = #tpu.dot_dimension_numbers<[1], [0], [0], [1], [0, 0, 1, 1], [], []>} : vector<64x128xbf16>, vector<128x128xbf16>, vector<64x128xf32> -> vector<64x128xf32>
    %c3_225 = arith.constant 3 : index
    %c0_226 = arith.constant 0 : index
    %c0_227 = arith.constant 0 : index
    %386 = vector.load %arg10[%c3_225, %c0_226, %c0_227] : memref<4x1x128xf32, #tpu.memory_space<vmem>>, vector<1x1x128xf32>
    %387 = vector.shape_cast %386 : vector<1x1x128xf32> to vector<1x128xf32>
    %388 = vector.broadcast %387 : vector<1x128xf32> to vector<64x128xf32>
    %389 = arith.addf %385, %388 : vector<64x128xf32>
    %c1_i32_228 = arith.constant 1 : i32
    %390 = tpu.dynamic_rotate %389 by %c1_i32_228 dim 0 : vector<64x128xf32>, i32 -> vector<64x128xf32>
    %391 = vector.broadcast %120 : vector<64x1xf32> to vector<64x128xf32>
    %392 = arith.mulf %390, %391 : vector<64x128xf32>
    %c63_i32_229 = arith.constant 63 : i32
    %393 = tpu.dynamic_rotate %389 by %c63_i32_229 dim 0 : vector<64x128xf32>, i32 -> vector<64x128xf32>
    %394 = vector.broadcast %122 : vector<64x1xf32> to vector<64x128xf32>
    %395 = arith.mulf %393, %394 : vector<64x128xf32>
    %c3_230 = arith.constant 3 : index
    %c0_231 = arith.constant 0 : index
    %c0_232 = arith.constant 0 : index
    %c0_233 = arith.constant 0 : index
    %396 = vector.load %arg11[%c3_230, %c0_231, %c0_232, %c0_233] : memref<4x9x1x128xf32, #tpu.memory_space<vmem>>, vector<1x1x1x128xf32>
    %397 = vector.shape_cast %396 : vector<1x1x1x128xf32> to vector<1x128xf32>
    %c3_234 = arith.constant 3 : index
    %c1_235 = arith.constant 1 : index
    %c0_236 = arith.constant 0 : index
    %c0_237 = arith.constant 0 : index
    %398 = vector.load %arg11[%c3_234, %c1_235, %c0_236, %c0_237] : memref<4x9x1x128xf32, #tpu.memory_space<vmem>>, vector<1x1x1x128xf32>
    %399 = vector.shape_cast %398 : vector<1x1x1x128xf32> to vector<1x128xf32>
    %c3_238 = arith.constant 3 : index
    %c2_239 = arith.constant 2 : index
    %c0_240 = arith.constant 0 : index
    %c0_241 = arith.constant 0 : index
    %400 = vector.load %arg11[%c3_238, %c2_239, %c0_240, %c0_241] : memref<4x9x1x128xf32, #tpu.memory_space<vmem>>, vector<1x1x1x128xf32>
    %401 = vector.shape_cast %400 : vector<1x1x1x128xf32> to vector<1x128xf32>
    %c3_242 = arith.constant 3 : index
    %c3_243 = arith.constant 3 : index
    %c0_244 = arith.constant 0 : index
    %c0_245 = arith.constant 0 : index
    %402 = vector.load %arg11[%c3_242, %c3_243, %c0_244, %c0_245] : memref<4x9x1x128xf32, #tpu.memory_space<vmem>>, vector<1x1x1x128xf32>
    %403 = vector.shape_cast %402 : vector<1x1x1x128xf32> to vector<1x128xf32>
    %c3_246 = arith.constant 3 : index
    %c4_247 = arith.constant 4 : index
    %c0_248 = arith.constant 0 : index
    %c0_249 = arith.constant 0 : index
    %404 = vector.load %arg11[%c3_246, %c4_247, %c0_248, %c0_249] : memref<4x9x1x128xf32, #tpu.memory_space<vmem>>, vector<1x1x1x128xf32>
    %405 = vector.shape_cast %404 : vector<1x1x1x128xf32> to vector<1x128xf32>
    %c3_250 = arith.constant 3 : index
    %c5_251 = arith.constant 5 : index
    %c0_252 = arith.constant 0 : index
    %c0_253 = arith.constant 0 : index
    %406 = vector.load %arg11[%c3_250, %c5_251, %c0_252, %c0_253] : memref<4x9x1x128xf32, #tpu.memory_space<vmem>>, vector<1x1x1x128xf32>
    %407 = vector.shape_cast %406 : vector<1x1x1x128xf32> to vector<1x128xf32>
    %c3_254 = arith.constant 3 : index
    %c6_255 = arith.constant 6 : index
    %c0_256 = arith.constant 0 : index
    %c0_257 = arith.constant 0 : index
    %408 = vector.load %arg11[%c3_254, %c6_255, %c0_256, %c0_257] : memref<4x9x1x128xf32, #tpu.memory_space<vmem>>, vector<1x1x1x128xf32>
    %409 = vector.shape_cast %408 : vector<1x1x1x128xf32> to vector<1x128xf32>
    %c3_258 = arith.constant 3 : index
    %c7_259 = arith.constant 7 : index
    %c0_260 = arith.constant 0 : index
    %c0_261 = arith.constant 0 : index
    %410 = vector.load %arg11[%c3_258, %c7_259, %c0_260, %c0_261] : memref<4x9x1x128xf32, #tpu.memory_space<vmem>>, vector<1x1x1x128xf32>
    %411 = vector.shape_cast %410 : vector<1x1x1x128xf32> to vector<1x128xf32>
    %c3_262 = arith.constant 3 : index
    %c8_263 = arith.constant 8 : index
    %c0_264 = arith.constant 0 : index
    %c0_265 = arith.constant 0 : index
    %412 = vector.load %arg11[%c3_262, %c8_263, %c0_264, %c0_265] : memref<4x9x1x128xf32, #tpu.memory_space<vmem>>, vector<1x1x1x128xf32>
    %413 = vector.shape_cast %412 : vector<1x1x1x128xf32> to vector<1x128xf32>
    %c8_i32_266 = arith.constant 8 : i32
    %414 = tpu.dynamic_rotate %392 by %c8_i32_266 dim 0 : vector<64x128xf32>, i32 -> vector<64x128xf32>
    %415 = vector.broadcast %397 : vector<1x128xf32> to vector<64x128xf32>
    %416 = arith.mulf %414, %415 : vector<64x128xf32>
    %c8_i32_267 = arith.constant 8 : i32
    %417 = tpu.dynamic_rotate %389 by %c8_i32_267 dim 0 : vector<64x128xf32>, i32 -> vector<64x128xf32>
    %418 = vector.broadcast %399 : vector<1x128xf32> to vector<64x128xf32>
    %419 = arith.mulf %417, %418 : vector<64x128xf32>
    %420 = arith.addf %416, %419 : vector<64x128xf32>
    %c8_i32_268 = arith.constant 8 : i32
    %421 = tpu.dynamic_rotate %395 by %c8_i32_268 dim 0 : vector<64x128xf32>, i32 -> vector<64x128xf32>
    %422 = vector.broadcast %401 : vector<1x128xf32> to vector<64x128xf32>
    %423 = arith.mulf %421, %422 : vector<64x128xf32>
    %424 = arith.addf %420, %423 : vector<64x128xf32>
    %425 = vector.broadcast %124 : vector<64x1xf32> to vector<64x128xf32>
    %426 = arith.mulf %424, %425 : vector<64x128xf32>
    %427 = vector.broadcast %403 : vector<1x128xf32> to vector<64x128xf32>
    %428 = arith.mulf %392, %427 : vector<64x128xf32>
    %429 = vector.broadcast %405 : vector<1x128xf32> to vector<64x128xf32>
    %430 = arith.mulf %389, %429 : vector<64x128xf32>
    %431 = arith.addf %428, %430 : vector<64x128xf32>
    %432 = vector.broadcast %407 : vector<1x128xf32> to vector<64x128xf32>
    %433 = arith.mulf %395, %432 : vector<64x128xf32>
    %434 = arith.addf %431, %433 : vector<64x128xf32>
    %c56_i32_269 = arith.constant 56 : i32
    %435 = tpu.dynamic_rotate %392 by %c56_i32_269 dim 0 : vector<64x128xf32>, i32 -> vector<64x128xf32>
    %436 = vector.broadcast %409 : vector<1x128xf32> to vector<64x128xf32>
    %437 = arith.mulf %435, %436 : vector<64x128xf32>
    %c56_i32_270 = arith.constant 56 : i32
    %438 = tpu.dynamic_rotate %389 by %c56_i32_270 dim 0 : vector<64x128xf32>, i32 -> vector<64x128xf32>
    %439 = vector.broadcast %411 : vector<1x128xf32> to vector<64x128xf32>
    %440 = arith.mulf %438, %439 : vector<64x128xf32>
    %441 = arith.addf %437, %440 : vector<64x128xf32>
    %c56_i32_271 = arith.constant 56 : i32
    %442 = tpu.dynamic_rotate %395 by %c56_i32_271 dim 0 : vector<64x128xf32>, i32 -> vector<64x128xf32>
    %443 = vector.broadcast %413 : vector<1x128xf32> to vector<64x128xf32>
    %444 = arith.mulf %442, %443 : vector<64x128xf32>
    %445 = arith.addf %441, %444 : vector<64x128xf32>
    %446 = vector.broadcast %126 : vector<64x1xf32> to vector<64x128xf32>
    %447 = arith.mulf %445, %446 : vector<64x128xf32>
    %448 = arith.addf %426, %434 : vector<64x128xf32>
    %449 = arith.addf %448, %447 : vector<64x128xf32>
    %cst_272 = arith.constant 5.000000e-01 : f32
    %450 = vector.broadcast %cst_272 : f32 to vector<64x128xf32>
    %451 = arith.mulf %450, %449 : vector<64x128xf32>
    %cst_273 = arith.constant 4.471500e-02 : f32
    %452 = vector.broadcast %cst_273 : f32 to vector<64x128xf32>
    %453 = arith.mulf %452, %449 : vector<64x128xf32>
    %454 = arith.mulf %453, %449 : vector<64x128xf32>
    %455 = arith.mulf %454, %449 : vector<64x128xf32>
    %456 = arith.addf %449, %455 : vector<64x128xf32>
    %cst_274 = arith.constant 0.797884583 : f32
    %457 = vector.broadcast %cst_274 : f32 to vector<64x128xf32>
    %458 = arith.mulf %457, %456 : vector<64x128xf32>
    %459 = math.tanh %458 : vector<64x128xf32>
    %cst_275 = arith.constant 1.000000e+00 : f32
    %460 = vector.broadcast %cst_275 : f32 to vector<64x128xf32>
    %461 = arith.addf %460, %459 : vector<64x128xf32>
    %462 = arith.mulf %451, %461 : vector<64x128xf32>
    %463 = arith.truncf %462 : vector<64x128xf32> to vector<64x128xbf16>
    %c3_276 = arith.constant 3 : index
    %c0_277 = arith.constant 0 : index
    %c0_278 = arith.constant 0 : index
    %464 = vector.load %arg13[%c3_276, %c0_277, %c0_278] : memref<4x128x128xbf16, #tpu.memory_space<vmem>>, vector<1x128x128xbf16>
    %465 = vector.shape_cast %464 : vector<1x128x128xbf16> to vector<128x128xbf16>
    %cst_279 = arith.constant dense<0.000000e+00> : vector<64x128xf32>
    %466 = tpu.matmul %463, %465, %cst_279 {dimension_numbers = #tpu.dot_dimension_numbers<[1], [0], [0], [1], [0, 0, 1, 1], [], []>} : vector<64x128xbf16>, vector<128x128xbf16>, vector<64x128xf32> -> vector<64x128xf32>
    %467 = arith.addf %382, %466 : vector<64x128xf32>
    %468 = arith.addf %95, %467 : vector<64x128xf32>
    %c0_280 = arith.constant 0 : index
    %c0_281 = arith.constant 0 : index
    %469 = vector.load %arg14[%c0_280, %c0_281] : memref<1x128xf32, #tpu.memory_space<vmem>>, vector<1x128xf32>
    %470 = vector.broadcast %469 : vector<1x128xf32> to vector<64x128xf32>
    %471 = arith.addf %468, %470 : vector<64x128xf32>
    %c0_282 = arith.constant 0 : index
    %c0_283 = arith.constant 0 : index
    %c0_284 = arith.constant 0 : index
    %472 = vector.load %arg15[%c0_282, %c0_283, %c0_284] : memref<1x64x128xf32, #tpu.memory_space<vmem>>, vector<1x64x128xf32>
    %473 = vector.shape_cast %472 : vector<1x64x128xf32> to vector<64x128xf32>
    %474 = vector.shape_cast %471 : vector<64x128xf32> to vector<1x64x128xf32>
    tpu.vector_store %arg15[%c0_282, %c0_283, %c0_284], %474 {strides = array<i32>} : memref<1x64x128xf32, #tpu.memory_space<vmem>>, vector<1x64x128xf32>,
    return
  }
  func.func @transform_0(%arg0: i32) -> (i32, i32, i32) {
    %c0_i32 = arith.constant 0 : i32
    %c0_i32_0 = arith.constant 0 : i32
    %c0_i32_1 = arith.constant 0 : i32
    return %arg0, %c0_i32, %c0_i32_0 : i32, i32, i32
  }
  func.func @transform_1(%arg0: i32) -> (i32, i32) {
    %c0_i32 = arith.constant 0 : i32
    %c0_i32_0 = arith.constant 0 : i32
    %c0_i32_1 = arith.constant 0 : i32
    return %c0_i32, %c0_i32_0 : i32, i32
  }
  func.func @transform_2(%arg0: i32) -> (i32, i32) {
    %c0_i32 = arith.constant 0 : i32
    %c0_i32_0 = arith.constant 0 : i32
    %c0_i32_1 = arith.constant 0 : i32
    return %c0_i32, %c0_i32_0 : i32, i32
  }
  func.func @transform_3(%arg0: i32) -> (i32, i32) {
    %c0_i32 = arith.constant 0 : i32
    %c0_i32_0 = arith.constant 0 : i32
    %c0_i32_1 = arith.constant 0 : i32
    return %c0_i32, %c0_i32_0 : i32, i32
  }
  func.func @transform_4(%arg0: i32) -> (i32, i32) {
    %c0_i32 = arith.constant 0 : i32
    %c0_i32_0 = arith.constant 0 : i32
    %c0_i32_1 = arith.constant 0 : i32
    return %c0_i32, %c0_i32_0 : i32, i32
  }
  func.func @transform_5(%arg0: i32) -> (i32, i32) {
    %c0_i32 = arith.constant 0 : i32
    %c0_i32_0 = arith.constant 0 : i32
    %c0_i32_1 = arith.constant 0 : i32
    return %c0_i32, %c0_i32_0 : i32, i32
  }
  func.func @transform_6(%arg0: i32) -> (i32, i32) {
    %c0_i32 = arith.constant 0 : i32
    %c0_i32_0 = arith.constant 0 : i32
    %c0_i32_1 = arith.constant 0 : i32
    return %c0_i32, %c0_i32_0 : i32, i32
  }
  func.func @transform_7(%arg0: i32) -> (i32, i32) {
    %c0_i32 = arith.constant 0 : i32
    %c0_i32_0 = arith.constant 0 : i32
    %c0_i32_1 = arith.constant 0 : i32
    return %c0_i32, %c0_i32_0 : i32, i32
  }
  func.func @transform_8(%arg0: i32) -> (i32, i32, i32) {
    %c0_i32 = arith.constant 0 : i32
    %c0_i32_0 = arith.constant 0 : i32
    %c0_i32_1 = arith.constant 0 : i32
    %c0_i32_2 = arith.constant 0 : i32
    return %c0_i32, %c0_i32_0, %c0_i32_1 : i32, i32, i32
  }
  func.func @transform_9(%arg0: i32) -> (i32, i32, i32) {
    %c0_i32 = arith.constant 0 : i32
    %c0_i32_0 = arith.constant 0 : i32
    %c0_i32_1 = arith.constant 0 : i32
    %c0_i32_2 = arith.constant 0 : i32
    return %c0_i32, %c0_i32_0, %c0_i32_1 : i32, i32, i32
  }
  func.func @transform_10(%arg0: i32) -> (i32, i32, i32, i32) {
    %c0_i32 = arith.constant 0 : i32
    %c0_i32_0 = arith.constant 0 : i32
    %c0_i32_1 = arith.constant 0 : i32
    %c0_i32_2 = arith.constant 0 : i32
    %c0_i32_3 = arith.constant 0 : i32
    return %c0_i32, %c0_i32_0, %c0_i32_1, %c0_i32_2 : i32, i32, i32, i32
  }
  func.func @transform_11(%arg0: i32) -> (i32, i32, i32) {
    %c0_i32 = arith.constant 0 : i32
    %c0_i32_0 = arith.constant 0 : i32
    %c0_i32_1 = arith.constant 0 : i32
    %c0_i32_2 = arith.constant 0 : i32
    return %c0_i32, %c0_i32_0, %c0_i32_1 : i32, i32, i32
  }
  func.func @transform_12(%arg0: i32) -> (i32, i32, i32) {
    %c0_i32 = arith.constant 0 : i32
    %c0_i32_0 = arith.constant 0 : i32
    %c0_i32_1 = arith.constant 0 : i32
    %c0_i32_2 = arith.constant 0 : i32
    return %c0_i32, %c0_i32_0, %c0_i32_1 : i32, i32, i32
  }
  func.func @transform_13(%arg0: i32) -> (i32, i32) {
    %c0_i32 = arith.constant 0 : i32
    %c0_i32_0 = arith.constant 0 : i32
    %c0_i32_1 = arith.constant 0 : i32
    return %c0_i32, %c0_i32_0 : i32, i32
  }
  func.func @transform_14(%arg0: i32) -> (i32, i32, i32) {
    %c0_i32 = arith.constant 0 : i32
    %c0_i32_0 = arith.constant 0 : i32
    %c0_i32_1 = arith.constant 0 : i32
    return %arg0, %c0_i32, %c0_i32_0 : i32, i32, i32
  }
}

</mosaic_0001>

<llo_original>
// kernel: tpu_custom_call.1
$region0: #{tpu_custom_call.1}
  #allocation0 [shape = 'u32[]', space=smem, size = 0x4, offset = 0x4, fixed_abs, tag = 'smem constant byte address 0x4 - core index']
  #allocation1 [shape = 'u32[144,128]{1,0:T(1,128)}', space=vmem, size = 0x12000, scoped, tag = 'internal scratch']
  %s0 = inlined_call_operand.hbm [shape: f32[2,64,128], index: 0, kind: input, shape index: {}]
  %s1 = inlined_call_operand.vmem [shape: f32[1,128], index: 1, kind: input, shape index: {}]
  %s2 = inlined_call_operand.vmem [shape: f32[1,128], index: 2, kind: input, shape index: {}]
  %s3 = inlined_call_operand.hbm [shape: bf16[128,384], index: 3, kind: input, shape index: {}]
  %s4 = inlined_call_operand.hbm [shape: bf16[128,128], index: 4, kind: input, shape index: {}]
  %s5 = inlined_call_operand.vmem [shape: f32[1,128], index: 5, kind: input, shape index: {}]
  %s6 = inlined_call_operand.vmem [shape: f32[1,128], index: 6, kind: input, shape index: {}]
  %s7 = inlined_call_operand.vmem [shape: f32[1,128], index: 7, kind: input, shape index: {}]
  %s8 = inlined_call_operand.vmem [shape: bf16[4,128,128], index: 8, kind: input, shape index: {}]
  %s9 = inlined_call_operand.vmem [shape: f32[4,1,128], index: 9, kind: input, shape index: {}]
  %s10 = inlined_call_operand.hbm [shape: f32[4,9,1,128], index: 10, kind: input, shape index: {}]
  %s11 = inlined_call_operand.vmem [shape: f32[4,64,1], index: 11, kind: input, shape index: {}]
  %s12 = inlined_call_operand.hbm [shape: bf16[4,128,128], index: 12, kind: input, shape index: {}]
  %s13 = inlined_call_operand.vmem [shape: f32[1,128], index: 13, kind: input, shape index: {}]
  %s14 = inlined_call_operand.hbm [shape: f32[2,64,128], index: 14, kind: output, shape index: {}]
  %s15 = sld [smem:[#allocation0]]
  $region109: #{tpu_custom_call.1} parent=0
    _
  %s17 = ssub.s32 1, %s15
  %s18 = scalar_select 0, %s17, %s15
  $region1: #{tpu_custom_call.1} parent=0
    #allocation2 [shape = 'u8[65536]{0}', space=vmem, size = 0x10000, scoped, tag = 'input window, operand 0']
    #allocation3 [shape = 's32[2]{0}', space=sflag, size = 0x8, scoped, tag = 'scoped memory for tpu_custom_call.1']
    #allocation4 [shape = 's32[2]{0}', space=sflag, size = 0x8, scoped, tag = 'scoped memory for tpu_custom_call.1']
    #allocation5 [shape = 'u8[98304]{0}', space=vmem, size = 0x18000, scoped, tag = 'input window, operand 3, single buffered']
    #allocation6 [shape = 's32[1]{0}', space=sflag, size = 0x4, scoped, tag = 'scoped memory for tpu_custom_call.1']
    #allocation7 [shape = 'u8[32768]{0}', space=vmem, size = 0x8000, scoped, tag = 'input window, operand 4, single buffered']
    #allocation8 [shape = 'u8[18432]{0}', space=vmem, size = 0x4800, scoped, tag = 'input window, operand 10, single buffered']
    #allocation9 [shape = 's32[1]{0}', space=sflag, size = 0x4, scoped, tag = 'scoped memory for tpu_custom_call.1']
    #allocation10 [shape = 'u8[131072]{0}', space=vmem, size = 0x20000, scoped, tag = 'input window, operand 12, single buffered']
    #allocation11 [shape = 'u8[65536]{0}', space=vmem, size = 0x10000, scoped, tag = 'output window, operand 0']
    %19 = vsyncpa [#allocation3], 0
    %s20 = scalar_lea.sflag [#allocation3], 1
    %21 = vsyncpa %s20, 0
    %22 = vsyncpa [#allocation6], 0
    %23 = vsyncpa [#allocation9], 0
    %24 = vsyncpa [#allocation4], 0
    %s25 = scalar_lea.sflag [#allocation4], 1
    %26 = vsyncpa %s25, 0
    loop: start=0, step=1, limit=4
    $region2: #{tpu_custom_call.1} parent=1 // loop_pre_header
      _
    $region3: #{tpu_custom_call.1} parent=1 // loop_header
      %s28 = sphi 0, %s32
      %p29 = scmp.ge.s32.totalorder %s28, 4
      %s38 = sphi 0, %s40
      %s41 = sphi 0, %s38
      %s42 = sphi 0, %s41
      %s58 = sphi 0, %s42
      %s62 = sphi 0, %s62
      %s64 = sphi 0, %s62
      %s65 = sphi 0, %s64
      %s79 = sphi 0, %s65
      %s83 = sphi 0, %s83
      %s85 = sphi 0, %s83
      %s86 = sphi 0, %s85
      %s100 = sphi 0, %s86
      %s104 = sphi 0, %s104
      %s106 = sphi 0, %s104
      %s107 = sphi 0, %s106
      %s121 = sphi 0, %s107
      %s125 = sphi 0, %s125
      %s127 = sphi 0, %s125
      %s128 = sphi 0, %s127
      %s142 = sphi 0, %s128
      %s146 = sphi 0, %s146
      %s148 = sphi 0, %s146
      %s149 = sphi 0, %s148
      %s163 = sphi 0, %s149
      %s167 = sphi 0, %s167
      %s169 = sphi 0, %s167
      %s170 = sphi 0, %s169
      %s184 = sphi 0, %s170
      %s188 = sphi 0, %s188
      %s190 = sphi 0, %s188
      %s191 = sphi 0, %s190
      %s205 = sphi 0, %s191
      %s209 = sphi 0, %s209
      %s211 = sphi 0, %s209
      %s212 = sphi 0, %s211
      %s226 = sphi 0, %s212
      %s230 = sphi 0, %s230
      %s232 = sphi 0, %s230
      %s233 = sphi 0, %s232
      %s247 = sphi 0, %s233
      %s251 = sphi 0, %s251
      %s253 = sphi 0, %s251
      %s254 = sphi 0, %s253
      %s268 = sphi 0, %s254
      %s272 = sphi 0, %s272
      %s274 = sphi 0, %s272
      %s275 = sphi 0, %s274
      %s289 = sphi 0, %s275
      %s293 = sphi 0, %s293
      %s295 = sphi 0, %s293
      %s296 = sphi 0, %s295
      %s310 = sphi 0, %s296
      %s314 = sphi 0, %s314
      %s316 = sphi 0, %s314
      %s317 = sphi 0, %s316
      %s331 = sphi 0, %s317
      %s337 = sphi 0, %s339
      %s340 = sphi 0, %s337
      %s341 = sphi 0, %s340
      %s357 = sphi 0, %s341
    $region4: #{tpu_custom_call.1} parent=1 // loop_header_branch
      %31 = sbr.rel (%p29) target = $region8
    $region5: #{tpu_custom_call.1} parent=1 // loop_body
      %s33 = ssub.s32 %s28, 1
      %s34 = ssub.s32 %s28, 2
      %s35 = sadd.s32 %s28, 1
      %s36 = ssub.s32 %s28, %s35
      %p37 = scmp.eq.s32.totalorder %s36, 0
      %s39 = sadd.s32 %s38, 1
      %s40 = scalar_select %p37, %s38, %s39
      %p43 = pneg %p37
      %p44 = scmp.eq.s32.totalorder %s28, 1
      %p45 = por %p43, %p44
      %p46 = scmp.ne.s32.totalorder %s38, %s41
      %p47 = scmp.eq.s32.totalorder %s28, 0
      %p48 = por %p46, %p47
      %p49 = scmp.ne.s32.totalorder %s38, %s41
      %p50 = scmp.eq.s32.totalorder %s33, 1
      %p51 = por %p49, %p50
      %p52 = scmp.ne.s32.totalorder %s41, %s42
      %p53 = scmp.eq.s32.totalorder %s33, 0
      %p54 = por %p52, %p53
      %p55 = scmp.ne.s32.totalorder %s41, %s42
      %p56 = scmp.eq.s32.totalorder %s34, 1
      %p57 = por %p55, %p56
      %p59 = scmp.ne.s32.totalorder %s42, %s58
      %p60 = scmp.eq.s32.totalorder %s34, 0
      %p61 = por %p59, %p60
      %s63 = sadd.s32 %s62, 1
      %p66 = scmp.eq.s32.totalorder %s28, 1
      %p67 = scmp.ne.s32.totalorder %s62, %s64
      %p68 = scmp.eq.s32.totalorder %s28, 0
      %p69 = por %p67, %p68
      %p70 = scmp.ne.s32.totalorder %s62, %s64
      %p71 = scmp.eq.s32.totalorder %s33, 1
      %p72 = por %p70, %p71
      %p73 = scmp.ne.s32.totalorder %s64, %s65
      %p74 = scmp.eq.s32.totalorder %s33, 0
      %p75 = por %p73, %p74
      %p76 = scmp.ne.s32.totalorder %s64, %s65
      %p77 = scmp.eq.s32.totalorder %s34, 1
      %p78 = por %p76, %p77
      %p80 = scmp.ne.s32.totalorder %s65, %s79
      %p81 = scmp.eq.s32.totalorder %s34, 0
      %p82 = por %p80, %p81
      %s84 = sadd.s32 %s83, 1
      %p87 = scmp.eq.s32.totalorder %s28, 1
      %p88 = scmp.ne.s32.totalorder %s83, %s85
      %p89 = scmp.eq.s32.totalorder %s28, 0
      %p90 = por %p88, %p89
      %p91 = scmp.ne.s32.totalorder %s83, %s85
      %p92 = scmp.eq.s32.totalorder %s33, 1
      %p93 = por %p91, %p92
      %p94 = scmp.ne.s32.totalorder %s85, %s86
      %p95 = scmp.eq.s32.totalorder %s33, 0
      %p96 = por %p94, %p95
      %p97 = scmp.ne.s32.totalorder %s85, %s86
      %p98 = scmp.eq.s32.totalorder %s34, 1
      %p99 = por %p97, %p98
      %p101 = scmp.ne.s32.totalorder %s86, %s100
      %p102 = scmp.eq.s32.totalorder %s34, 0
      %p103 = por %p101, %p102
      %s105 = sadd.s32 %s104, 1
      %p108 = scmp.eq.s32.totalorder %s28, 1
      %p109 = scmp.ne.s32.totalorder %s104, %s106
      %p110 = scmp.eq.s32.totalorder %s28, 0
      %p111 = por %p109, %p110
      %p112 = scmp.ne.s32.totalorder %s104, %s106
      %p113 = scmp.eq.s32.totalorder %s33, 1
      %p114 = por %p112, %p113
      %p115 = scmp.ne.s32.totalorder %s106, %s107
      %p116 = scmp.eq.s32.totalorder %s33, 0
      %p117 = por %p115, %p116
      %p118 = scmp.ne.s32.totalorder %s106, %s107
      %p119 = scmp.eq.s32.totalorder %s34, 1
      %p120 = por %p118, %p119
      %p122 = scmp.ne.s32.totalorder %s107, %s121
      %p123 = scmp.eq.s32.totalorder %s34, 0
      %p124 = por %p122, %p123
      %s126 = sadd.s32 %s125, 1
      %p129 = scmp.eq.s32.totalorder %s28, 1
      %p130 = scmp.ne.s32.totalorder %s125, %s127
      %p131 = scmp.eq.s32.totalorder %s28, 0
      %p132 = por %p130, %p131
      %p133 = scmp.ne.s32.totalorder %s125, %s127
      %p134 = scmp.eq.s32.totalorder %s33, 1
      %p135 = por %p133, %p134
      %p136 = scmp.ne.s32.totalorder %s127, %s128
      %p137 = scmp.eq.s32.totalorder %s33, 0
      %p138 = por %p136, %p137
      %p139 = scmp.ne.s32.totalorder %s127, %s128
      %p140 = scmp.eq.s32.totalorder %s34, 1
      %p141 = por %p139, %p140
      %p143 = scmp.ne.s32.totalorder %s128, %s142
      %p144 = scmp.eq.s32.totalorder %s34, 0
      %p145 = por %p143, %p144
      %s147 = sadd.s32 %s146, 1
      %p150 = scmp.eq.s32.totalorder %s28, 1
      %p151 = scmp.ne.s32.totalorder %s146, %s148
      %p152 = scmp.eq.s32.totalorder %s28, 0
      %p153 = por %p151, %p152
      %p154 = scmp.ne.s32.totalorder %s146, %s148
      %p155 = scmp.eq.s32.totalorder %s33, 1
      %p156 = por %p154, %p155
      %p157 = scmp.ne.s32.totalorder %s148, %s149
      %p158 = scmp.eq.s32.totalorder %s33, 0
      %p159 = por %p157, %p158
      %p160 = scmp.ne.s32.totalorder %s148, %s149
      %p161 = scmp.eq.s32.totalorder %s34, 1
      %p162 = por %p160, %p161
      %p164 = scmp.ne.s32.totalorder %s149, %s163
      %p165 = scmp.eq.s32.totalorder %s34, 0
      %p166 = por %p164, %p165
      %s168 = sadd.s32 %s167, 1
      %p171 = scmp.eq.s32.totalorder %s28, 1
      %p172 = scmp.ne.s32.totalorder %s167, %s169
      %p173 = scmp.eq.s32.totalorder %s28, 0
      %p174 = por %p172, %p173
      %p175 = scmp.ne.s32.totalorder %s167, %s169
      %p176 = scmp.eq.s32.totalorder %s33, 1
      %p177 = por %p175, %p176
      %p178 = scmp.ne.s32.totalorder %s169, %s170
      %p179 = scmp.eq.s32.totalorder %s33, 0
      %p180 = por %p178, %p179
      %p181 = scmp.ne.s32.totalorder %s169, %s170
      %p182 = scmp.eq.s32.totalorder %s34, 1
      %p183 = por %p181, %p182
      %p185 = scmp.ne.s32.totalorder %s170, %s184
      %p186 = scmp.eq.s32.totalorder %s34, 0
      %p187 = por %p185, %p186
      %s189 = sadd.s32 %s188, 1
      %p192 = scmp.eq.s32.totalorder %s28, 1
      %p193 = scmp.ne.s32.totalorder %s188, %s190
      %p194 = scmp.eq.s32.totalorder %s28, 0
      %p195 = por %p193, %p194
      %p196 = scmp.ne.s32.totalorder %s188, %s190
      %p197 = scmp.eq.s32.totalorder %s33, 1
      %p198 = por %p196, %p197
      %p199 = scmp.ne.s32.totalorder %s190, %s191
      %p200 = scmp.eq.s32.totalorder %s33, 0
      %p201 = por %p199, %p200
      %p202 = scmp.ne.s32.totalorder %s190, %s191
      %p203 = scmp.eq.s32.totalorder %s34, 1
      %p204 = por %p202, %p203
      %p206 = scmp.ne.s32.totalorder %s191, %s205
      %p207 = scmp.eq.s32.totalorder %s34, 0
      %p208 = por %p206, %p207
      %s210 = sadd.s32 %s209, 1
      %p213 = scmp.eq.s32.totalorder %s28, 1
      %p214 = scmp.ne.s32.totalorder %s209, %s211
      %p215 = scmp.eq.s32.totalorder %s28, 0
      %p216 = por %p214, %p215
      %p217 = scmp.ne.s32.totalorder %s209, %s211
      %p218 = scmp.eq.s32.totalorder %s33, 1
      %p219 = por %p217, %p218
      %p220 = scmp.ne.s32.totalorder %s211, %s212
      %p221 = scmp.eq.s32.totalorder %s33, 0
      %p222 = por %p220, %p221
      %p223 = scmp.ne.s32.totalorder %s211, %s212
      %p224 = scmp.eq.s32.totalorder %s34, 1
      %p225 = por %p223, %p224
      %p227 = scmp.ne.s32.totalorder %s212, %s226
      %p228 = scmp.eq.s32.totalorder %s34, 0
      %p229 = por %p227, %p228
      %s231 = sadd.s32 %s230, 1
      %p234 = scmp.eq.s32.totalorder %s28, 1
      %p235 = scmp.ne.s32.totalorder %s230, %s232
      %p236 = scmp.eq.s32.totalorder %s28, 0
      %p237 = por %p235, %p236
      %p238 = scmp.ne.s32.totalorder %s230, %s232
      %p239 = scmp.eq.s32.totalorder %s33, 1
      %p240 = por %p238, %p239
      %p241 = scmp.ne.s32.totalorder %s232, %s233
      %p242 = scmp.eq.s32.totalorder %s33, 0
      %p243 = por %p241, %p242
      %p244 = scmp.ne.s32.totalorder %s232, %s233
      %p245 = scmp.eq.s32.totalorder %s34, 1
      %p246 = por %p244, %p245
      %p248 = scmp.ne.s32.totalorder %s233, %s247
      %p249 = scmp.eq.s32.totalorder %s34, 0
      %p250 = por %p248, %p249
      %s252 = sadd.s32 %s251, 1
      %p255 = scmp.eq.s32.totalorder %s28, 1
      %p256 = scmp.ne.s32.totalorder %s251, %s253
      %p257 = scmp.eq.s32.totalorder %s28, 0
      %p258 = por %p256, %p257
      %p259 = scmp.ne.s32.totalorder %s251, %s253
      %p260 = scmp.eq.s32.totalorder %s33, 1
      %p261 = por %p259, %p260
      %p262 = scmp.ne.s32.totalorder %s253, %s254
      %p263 = scmp.eq.s32.totalorder %s33, 0
      %p264 = por %p262, %p263
      %p265 = scmp.ne.s32.totalorder %s253, %s254
      %p266 = scmp.eq.s32.totalorder %s34, 1
      %p267 = por %p265, %p266
      %p269 = scmp.ne.s32.totalorder %s254, %s268
      %p270 = scmp.eq.s32.totalorder %s34, 0
      %p271 = por %p269, %p270
      %s273 = sadd.s32 %s272, 1
      %p276 = scmp.eq.s32.totalorder %s28, 1
      %p277 = scmp.ne.s32.totalorder %s272, %s274
      %p278 = scmp.eq.s32.totalorder %s28, 0
      %p279 = por %p277, %p278
      %p280 = scmp.ne.s32.totalorder %s272, %s274
      %p281 = scmp.eq.s32.totalorder %s33, 1
      %p282 = por %p280, %p281
      %p283 = scmp.ne.s32.totalorder %s274, %s275
      %p284 = scmp.eq.s32.totalorder %s33, 0
      %p285 = por %p283, %p284
      %p286 = scmp.ne.s32.totalorder %s274, %s275
      %p287 = scmp.eq.s32.totalorder %s34, 1
      %p288 = por %p286, %p287
      %p290 = scmp.ne.s32.totalorder %s275, %s289
      %p291 = scmp.eq.s32.totalorder %s34, 0
      %p292 = por %p290, %p291
      %s294 = sadd.s32 %s293, 1
      %p297 = scmp.eq.s32.totalorder %s28, 1
      %p298 = scmp.ne.s32.totalorder %s293, %s295
      %p299 = scmp.eq.s32.totalorder %s28, 0
      %p300 = por %p298, %p299
      %p301 = scmp.ne.s32.totalorder %s293, %s295
      %p302 = scmp.eq.s32.totalorder %s33, 1
      %p303 = por %p301, %p302
      %p304 = scmp.ne.s32.totalorder %s295, %s296
      %p305 = scmp.eq.s32.totalorder %s33, 0
      %p306 = por %p304, %p305
      %p307 = scmp.ne.s32.totalorder %s295, %s296
      %p308 = scmp.eq.s32.totalorder %s34, 1
      %p309 = por %p307, %p308
      %p311 = scmp.ne.s32.totalorder %s296, %s310
      %p312 = scmp.eq.s32.totalorder %s34, 0
      %p313 = por %p311, %p312
      %s315 = sadd.s32 %s314, 1
      %p318 = scmp.eq.s32.totalorder %s28, 1
      %p319 = scmp.ne.s32.totalorder %s314, %s316
      %p320 = scmp.eq.s32.totalorder %s28, 0
      %p321 = por %p319, %p320
      %p322 = scmp.ne.s32.totalorder %s314, %s316
      %p323 = scmp.eq.s32.totalorder %s33, 1
      %p324 = por %p322, %p323
      %p325 = scmp.ne.s32.totalorder %s316, %s317
      %p326 = scmp.eq.s32.totalorder %s33, 0
      %p327 = por %p325, %p326
      %p328 = scmp.ne.s32.totalorder %s316, %s317
      %p329 = scmp.eq.s32.totalorder %s34, 1
      %p330 = por %p328, %p329
      %p332 = scmp.ne.s32.totalorder %s317, %s331
      %p333 = scmp.eq.s32.totalorder %s34, 0
      %p334 = por %p332, %p333
      %s335 = ssub.s32 %s28, %s35
      %p336 = scmp.eq.s32.totalorder %s335, 0
      %s338 = sadd.s32 %s337, 1
      %s339 = scalar_select %p336, %s337, %s338
      %p342 = pneg %p336
      %p343 = scmp.eq.s32.totalorder %s28, 1
      %p344 = por %p342, %p343
      %p345 = scmp.ne.s32.totalorder %s337, %s340
      %p346 = scmp.eq.s32.totalorder %s28, 0
      %p347 = por %p345, %p346
      %p348 = scmp.ne.s32.totalorder %s337, %s340
      %p349 = scmp.eq.s32.totalorder %s33, 1
      %p350 = por %p348, %p349
      %p351 = scmp.ne.s32.totalorder %s340, %s341
      %p352 = scmp.eq.s32.totalorder %s33, 0
      %p353 = por %p351, %p352
      %p354 = scmp.ne.s32.totalorder %s340, %s341
      %p355 = scmp.eq.s32.totalorder %s34, 1
      %p356 = por %p354, %p355
      %p358 = scmp.ne.s32.totalorder %s341, %s357
      %p359 = scmp.eq.s32.totalorder %s34, 0
      %p360 = por %p358, %p359
      %p361 = scmp.le.s32.totalorder 1, %s28
      %p362 = scmp.lt.s32.totalorder %s28, 3
      %p363 = pnand %p361, %p362
      %p364 = pneg %p363
      // Predicated region
      $region9: #{tpu_custom_call.1} parent=5 // pred_check
        _
      $region10: #{tpu_custom_call.1} parent=5 // pred_check_branch
        %366 = sbr.rel (%p363) target = $region12
      $region11: #{tpu_custom_call.1} parent=5 // pred_region
        %s367 = ssub.s32 %s28, 1
        // Predicated region
        $region13: #{tpu_custom_call.1} parent=11 // pred_check
          %p368 = pneg %p75
        $region14: #{tpu_custom_call.1} parent=11 // pred_check_branch
          %370 = sbr.rel (%p368) target = $region16
        $region15: #{tpu_custom_call.1} parent=11 // pred_region
          _
        $region16: #{tpu_custom_call.1} parent=11 // pred_fallthru
          _
        // Predicated region
        $region17: #{tpu_custom_call.1} parent=11 // pred_check
          %p371 = pneg %p96
        $region18: #{tpu_custom_call.1} parent=11 // pred_check_branch
          %373 = sbr.rel (%p371) target = $region20
        $region19: #{tpu_custom_call.1} parent=11 // pred_region
          _
        $region20: #{tpu_custom_call.1} parent=11 // pred_fallthru
          _
        // Predicated region
        $region21: #{tpu_custom_call.1} parent=11 // pred_check
          %p374 = pneg %p117
        $region22: #{tpu_custom_call.1} parent=11 // pred_check_branch
          %376 = sbr.rel (%p374) target = $region24
        $region23: #{tpu_custom_call.1} parent=11 // pred_region
          %s378 = ssub.s32 3072, 3072
          %379 = vsyncadd [#allocation6], %s378
          %s380 = sshll.u32 [#allocation5], 4
          %s381 = int_to_ptr.vmem [resolvable:$true] %s380
          %386 = dma.hbm_to_vmem [thread:$0]  %s3, 3072, %s381, [#allocation6], 192, 192, 12
        $region24: #{tpu_custom_call.1} parent=11 // pred_fallthru
          _
        // Predicated region
        $region25: #{tpu_custom_call.1} parent=11 // pred_check
          %p387 = pneg %p138
        $region26: #{tpu_custom_call.1} parent=11 // pred_check_branch
          %389 = sbr.rel (%p387) target = $region28
        $region27: #{tpu_custom_call.1} parent=11 // pred_region
          %s391 = ssub.s32 1024, 1024
          %392 = vsyncadd [#allocation6], %s391
          %s393 = sshll.u32 [#allocation7], 4
          %s394 = int_to_ptr.vmem [resolvable:$true] %s393
          %399 = dma.hbm_to_vmem [thread:$0]  %s4, 1024, %s394, [#allocation6], 64, 64, 4
        $region28: #{tpu_custom_call.1} parent=11 // pred_fallthru
          _
        // Predicated region
        $region29: #{tpu_custom_call.1} parent=11 // pred_check
          %p400 = pneg %p159
        $region30: #{tpu_custom_call.1} parent=11 // pred_check_branch
          %402 = sbr.rel (%p400) target = $region32
        $region31: #{tpu_custom_call.1} parent=11 // pred_region
          _
        $region32: #{tpu_custom_call.1} parent=11 // pred_fallthru
          _
        // Predicated region
        $region33: #{tpu_custom_call.1} parent=11 // pred_check
          %p403 = pneg %p180
        $region34: #{tpu_custom_call.1} parent=11 // pred_check_branch
          %405 = sbr.rel (%p403) target = $region36
        $region35: #{tpu_custom_call.1} parent=11 // pred_region
          _
        $region36: #{tpu_custom_call.1} parent=11 // pred_fallthru
          _
        // Predicated region
        $region37: #{tpu_custom_call.1} parent=11 // pred_check
          %p406 = pneg %p201
        $region38: #{tpu_custom_call.1} parent=11 // pred_check_branch
          %408 = sbr.rel (%p406) target = $region40
        $region39: #{tpu_custom_call.1} parent=11 // pred_region
          _
        $region40: #{tpu_custom_call.1} parent=11 // pred_fallthru
          _
        // Predicated region
        $region41: #{tpu_custom_call.1} parent=11 // pred_check
          %p409 = pneg %p222
        $region42: #{tpu_custom_call.1} parent=11 // pred_check_branch
          %411 = sbr.rel (%p409) target = $region44
        $region43: #{tpu_custom_call.1} parent=11 // pred_region
          _
        $region44: #{tpu_custom_call.1} parent=11 // pred_fallthru
          _
        // Predicated region
        $region45: #{tpu_custom_call.1} parent=11 // pred_check
          %p412 = pneg %p243
        $region46: #{tpu_custom_call.1} parent=11 // pred_check_branch
          %414 = sbr.rel (%p412) target = $region48
        $region47: #{tpu_custom_call.1} parent=11 // pred_region
          _
        $region48: #{tpu_custom_call.1} parent=11 // pred_fallthru
          _
        // Predicated region
        $region49: #{tpu_custom_call.1} parent=11 // pred_check
          %p415 = pneg %p264
        $region50: #{tpu_custom_call.1} parent=11 // pred_check_branch
          %417 = sbr.rel (%p415) target = $region52
        $region51: #{tpu_custom_call.1} parent=11 // pred_region
          %s419 = ssub.s32 576, 576
          %420 = vsyncadd [#allocation9], %s419
          %s421 = sshll.u32 [#allocation8], 4
          %s422 = int_to_ptr.vmem [resolvable:$true] %s421
          %427 = dma.hbm_to_vmem [thread:$0]  %s10, 576, %s422, [#allocation9], 16, 16, 1
        $region52: #{tpu_custom_call.1} parent=11 // pred_fallthru
          _
        // Predicated region
        $region53: #{tpu_custom_call.1} parent=11 // pred_check
          %p428 = pneg %p285
        $region54: #{tpu_custom_call.1} parent=11 // pred_check_branch
          %430 = sbr.rel (%p428) target = $region56
        $region55: #{tpu_custom_call.1} parent=11 // pred_region
          _
        $region56: #{tpu_custom_call.1} parent=11 // pred_fallthru
          _
        // Predicated region
        $region57: #{tpu_custom_call.1} parent=11 // pred_check
          %p431 = pneg %p306
        $region58: #{tpu_custom_call.1} parent=11 // pred_check_branch
          %433 = sbr.rel (%p431) target = $region60
        $region59: #{tpu_custom_call.1} parent=11 // pred_region
          %s435 = ssub.s32 4096, 4096
          %436 = vsyncadd [#allocation9], %s435
          %s437 = sshll.u32 [#allocation10], 4
          %s438 = int_to_ptr.vmem [resolvable:$true] %s437
          %443 = dma.hbm_to_vmem [thread:$0]  %s12, 4096, %s438, [#allocation9], 64, 64, 4
        $region60: #{tpu_custom_call.1} parent=11 // pred_fallthru
          _
        // Predicated region
        $region61: #{tpu_custom_call.1} parent=11 // pred_check
          %p444 = pneg %p327
        $region62: #{tpu_custom_call.1} parent=11 // pred_check_branch
          %446 = sbr.rel (%p444) target = $region64
        $region63: #{tpu_custom_call.1} parent=11 // pred_region
          _
        $region64: #{tpu_custom_call.1} parent=11 // pred_fallthru
          _
      $region12: #{tpu_custom_call.1} parent=5 // pred_fallthru
        _
      %p447 = scmp.lt.s32.totalorder %s28, 2
      // Predicated region
      $region65: #{tpu_custom_call.1} parent=5 // pred_check
        %p448 = pneg %p447
      $region66: #{tpu_custom_call.1} parent=5 // pred_check_branch
        %450 = sbr.rel (%p448) target = $region68
      $region67: #{tpu_custom_call.1} parent=5 // pred_region
        // Predicated region
        $region69: #{tpu_custom_call.1} parent=67 // pred_check
          %p451 = pneg %p48
        $region70: #{tpu_custom_call.1} parent=67 // pred_check_branch
          %453 = sbr.rel (%p451) target = $region72
        $region71: #{tpu_custom_call.1} parent=67 // pred_region
          %s454 = sand.u32 %s38, 1
          %s455 = scalar_lea.sflag [#allocation3], %s454
          %s456 = sand.u32 %s38, 1
          %s457 = smul.addr %s456, 64
          %s458 = scalar_lea.vmem [#allocation2], %s457
          %s460 = ssub.s32 1024, 1024
          %461 = vsyncadd %s455, %s460
          %s462 = smul.addr %s28, 8
          %s463 = smul.addr %s462, 128
          %s464 = scalar_lea.hbm %s0, %s463
          %s465 = sshll.u32 %s458, 4
          %s466 = int_to_ptr.vmem [resolvable:$true] %s465
          %471 = dma.hbm_to_vmem [thread:$0]  %s464, 1024, %s466, %s455, 128, 128, 8
        $region72: #{tpu_custom_call.1} parent=67 // pred_fallthru
          _
      $region68: #{tpu_custom_call.1} parent=5 // pred_fallthru
        _
      %p472 = scmp.le.s32.totalorder 1, %s28
      %p473 = scmp.lt.s32.totalorder %s28, 3
      %p474 = pnand %p472, %p473
      %p475 = pneg %p474
      // Predicated region
      $region73: #{tpu_custom_call.1} parent=5 // pred_check
        _
      $region74: #{tpu_custom_call.1} parent=5 // pred_check_branch
        %477 = sbr.rel (%p474) target = $region76
      $region75: #{tpu_custom_call.1} parent=5 // pred_region
        %s478 = ssub.s32 %s28, 1
        %s479 = sand.u32 %s41, 1
        %s480 = scalar_lea.sflag [#allocation3], %s479
        %s481 = sand.u32 %s41, 1
        %s482 = smul.addr %s481, 64
        %s483 = scalar_lea.vmem [#allocation2], %s482
        // Predicated region
        $region77: #{tpu_custom_call.1} parent=75 // pred_check
          %p484 = pneg %p54
        $region78: #{tpu_custom_call.1} parent=75 // pred_check_branch
          %486 = sbr.rel (%p484) target = $region80
        $region79: #{tpu_custom_call.1} parent=75 // pred_region
          %487 = dma.done %s480, 1024
        $region80: #{tpu_custom_call.1} parent=75 // pred_fallthru
          _
        // Predicated region
        $region81: #{tpu_custom_call.1} parent=75 // pred_check
          %p488 = pneg %p117
        $region82: #{tpu_custom_call.1} parent=75 // pred_check_branch
          %490 = sbr.rel (%p488) target = $region84
        $region83: #{tpu_custom_call.1} parent=75 // pred_region
          %491 = dma.done [#allocation6], 3072
        $region84: #{tpu_custom_call.1} parent=75 // pred_fallthru
          _
        // Predicated region
        $region85: #{tpu_custom_call.1} parent=75 // pred_check
          %p492 = pneg %p138
        $region86: #{tpu_custom_call.1} parent=75 // pred_check_branch
          %494 = sbr.rel (%p492) target = $region88
        $region87: #{tpu_custom_call.1} parent=75 // pred_region
          %495 = dma.done [#allocation6], 1024
        $region88: #{tpu_custom_call.1} parent=75 // pred_fallthru
          _
        // Predicated region
        $region89: #{tpu_custom_call.1} parent=75 // pred_check
          %p496 = pneg %p264
        $region90: #{tpu_custom_call.1} parent=75 // pred_check_branch
          %498 = sbr.rel (%p496) target = $region92
        $region91: #{tpu_custom_call.1} parent=75 // pred_region
          %499 = dma.done [#allocation9], 576
        $region92: #{tpu_custom_call.1} parent=75 // pred_fallthru
          _
        // Predicated region
        $region93: #{tpu_custom_call.1} parent=75 // pred_check
          %p500 = pneg %p306
        $region94: #{tpu_custom_call.1} parent=75 // pred_check_branch
          %502 = sbr.rel (%p500) target = $region96
        $region95: #{tpu_custom_call.1} parent=75 // pred_region
          %503 = dma.done [#allocation9], 4096
        $region96: #{tpu_custom_call.1} parent=75 // pred_fallthru
          _
        %s504 = sand.u32 %s41, 1
        %s505 = scalar_lea.sflag [#allocation3], %s504
        %s506 = sand.u32 %s41, 1
        %s507 = smul.addr %s506, 64
        %s508 = scalar_lea.vmem [#allocation2], %s507
        %p509 = pneg %p54
        %p510 = pneg %p51
        %p511 = pneg %p75
        %p512 = pneg %p72
        %p513 = pneg %p96
        %p514 = pneg %p93
        %p515 = pneg %p117
        %p516 = pneg %p114
        %p517 = pneg %p138
        %p518 = pneg %p135
        %p519 = pneg %p159
        %p520 = pneg %p156
        %p521 = pneg %p180
        %p522 = pneg %p177
        %p523 = pneg %p201
        %p524 = pneg %p198
        %p525 = pneg %p222
        %p526 = pneg %p219
        %p527 = pneg %p243
        %p528 = pneg %p240
        %p529 = pneg %p264
        %p530 = pneg %p261
        %p531 = pneg %p285
        %p532 = pneg %p282
        %p533 = pneg %p306
        %p534 = pneg %p303
        %p535 = pneg %p327
        %p536 = pneg %p324
        %p537 = pneg %p353
        %p538 = pneg %p350
        %s539 = sand.u32 %s340, 1
        %s540 = scalar_lea.sflag [#allocation4], %s539
        %s541 = sand.u32 %s340, 1
        %s542 = smul.addr %s541, 64
        %s543 = scalar_lea.vmem [#allocation11], %s542
        %v545 = vld [vmem:[%s483] sm:$0xff]
        %v546 = vld [vmem:[%s483 + $0x8] sm:$0xff]
        %v547 = vld [vmem:[%s483 + $0x10] sm:$0xff]
        %v548 = vld [vmem:[%s483 + $0x18] sm:$0xff]
        %v549 = vld [vmem:[%s483 + $0x20] sm:$0xff]
        %v550 = vld [vmem:[%s483 + $0x28] sm:$0xff]
        %v551 = vld [vmem:[%s483 + $0x30] sm:$0xff]
        %v552 = vld [vmem:[%s483 + $0x38] sm:$0xff]
        %v553 = vld [vmem:[%s1] sm:$0x1]
        %v554 = vld [vmem:[%s2] sm:$0x1]
        %555 = vadd.xlane.f32.xlu0 %v545
        %v556 = vpop.xlane.xlu0 %555
        %557 = vadd.xlane.f32.xlu0 %v546
        %v558 = vpop.xlane.xlu0 %557
        %559 = vadd.xlane.f32.xlu0 %v547
        %v560 = vpop.xlane.xlu0 %559
        %561 = vadd.xlane.f32.xlu0 %v548
        %v562 = vpop.xlane.xlu0 %561
        %563 = vadd.xlane.f32.xlu0 %v549
        %v564 = vpop.xlane.xlu0 %563
        %565 = vadd.xlane.f32.xlu0 %v550
        %v566 = vpop.xlane.xlu0 %565
        %567 = vadd.xlane.f32.xlu0 %v551
        %v568 = vpop.xlane.xlu0 %567
        %569 = vadd.xlane.f32.xlu0 %v552
        %v570 = vpop.xlane.xlu0 %569
        %v571 = vrcp.pop 128.0
        %v572 = vmul.f32 %v556, %v571
        %v573 = vmul.f32 %v558, %v571
        %v574 = vmul.f32 %v560, %v571
        %v575 = vmul.f32 %v562, %v571
        %v576 = vmul.f32 %v564, %v571
        %v577 = vmul.f32 %v566, %v571
        %v578 = vmul.f32 %v568, %v571
        %v579 = vmul.f32 %v570, %v571
        %v580 = vsub.f32 %v545, %v572
        %v581 = vsub.f32 %v546, %v573
        %v582 = vsub.f32 %v547, %v574
        %v583 = vsub.f32 %v548, %v575
        %v584 = vsub.f32 %v549, %v576
        %v585 = vsub.f32 %v550, %v577
        %v586 = vsub.f32 %v551, %v578
        %v587 = vsub.f32 %v552, %v579
        %v588 = vmul.f32 %v580, %v580
        %v589 = vmul.f32 %v581, %v581
        %v590 = vmul.f32 %v582, %v582
        %v591 = vmul.f32 %v583, %v583
        %v592 = vmul.f32 %v584, %v584
        %v593 = vmul.f32 %v585, %v585
        %v594 = vmul.f32 %v586, %v586
        %v595 = vmul.f32 %v587, %v587
        %596 = vadd.xlane.f32.xlu0 %v588
        %v597 = vpop.xlane.xlu0 %596
        %598 = vadd.xlane.f32.xlu0 %v589
        %v599 = vpop.xlane.xlu0 %598
        %600 = vadd.xlane.f32.xlu0 %v590
        %v601 = vpop.xlane.xlu0 %600
        %602 = vadd.xlane.f32.xlu0 %v591
        %v603 = vpop.xlane.xlu0 %602
        %604 = vadd.xlane.f32.xlu0 %v592
        %v605 = vpop.xlane.xlu0 %604
        %606 = vadd.xlane.f32.xlu0 %v593
        %v607 = vpop.xlane.xlu0 %606
        %608 = vadd.xlane.f32.xlu0 %v594
        %v609 = vpop.xlane.xlu0 %608
        %610 = vadd.xlane.f32.xlu0 %v595
        %v611 = vpop.xlane.xlu0 %610
        %v612 = vmul.f32 %v597, %v571
        %v613 = vmul.f32 %v599, %v571
        %v614 = vmul.f32 %v601, %v571
        %v615 = vmul.f32 %v603, %v571
        %v616 = vmul.f32 %v605, %v571
        %v617 = vmul.f32 %v607, %v571
        %v618 = vmul.f32 %v609, %v571
        %v619 = vmul.f32 %v611, %v571
        %v620 = vadd.f32 %v612, 1e-05
        %v621 = vadd.f32 %v613, 1e-05
        %v622 = vadd.f32 %v614, 1e-05
        %v623 = vadd.f32 %v615, 1e-05
        %v624 = vadd.f32 %v616, 1e-05
        %v625 = vadd.f32 %v617, 1e-05
        %v626 = vadd.f32 %v618, 1e-05
        %v627 = vadd.f32 %v619, 1e-05
        %v628 = vrsqrt.pop %v620
        %v629 = vrsqrt.pop %v621
        %v630 = vrsqrt.pop %v622
        %v631 = vrsqrt.pop %v623
        %v632 = vrsqrt.pop %v624
        %v633 = vrsqrt.pop %v625
        %v634 = vrsqrt.pop %v626
        %v635 = vrsqrt.pop %v627
        %v636 = vmul.f32 %v580, %v628
        %v637 = vmul.f32 %v581, %v629
        %v638 = vmul.f32 %v582, %v630
        %v639 = vmul.f32 %v583, %v631
        %v640 = vmul.f32 %v584, %v632
        %v641 = vmul.f32 %v585, %v633
        %v642 = vmul.f32 %v586, %v634
        %v643 = vmul.f32 %v587, %v635
        %v645 = vlaneseq
        %v646 = vshrl.u32 %v645, 7
        %v647 = vsub.s32 0, %v646
        %v648 = vrot.slane %v553, %v647
        %v650 = vmul.f32 %v636, %v648
        %v651 = vmul.f32 %v637, %v648
        %v652 = vmul.f32 %v638, %v648
        %v653 = vmul.f32 %v639, %v648
        %v654 = vmul.f32 %v640, %v648
        %v655 = vmul.f32 %v641, %v648
        %v656 = vmul.f32 %v642, %v648
        %v657 = vmul.f32 %v643, %v648
        %v659 = vlaneseq
        %v660 = vshrl.u32 %v659, 7
        %v661 = vsub.s32 0, %v660
        %v662 = vrot.slane %v554, %v661
        %v664 = vadd.f32 %v650, %v662
        %v665 = vadd.f32 %v651, %v662
        %v666 = vadd.f32 %v652, %v662
        %v667 = vadd.f32 %v653, %v662
        %v668 = vadd.f32 %v654, %v662
        %v669 = vadd.f32 %v655, %v662
        %v670 = vadd.f32 %v656, %v662
        %v671 = vadd.f32 %v657, %v662
        %v672 = vpack.c.bf16 %v665, %v664
        %v673 = vpack.c.bf16 %v667, %v666
        %v674 = vpack.c.bf16 %v669, %v668
        %v675 = vpack.c.bf16 %v671, %v670
        %v676 = vld [vmem:[#allocation5] sm:$0xff]
        %v677 = vld [vmem:[#allocation5 + $0x8] sm:$0xf]
        %v678 = vld [vmem:[#allocation5 + $0xc] sm:$0xff]
        %v679 = vld [vmem:[#allocation5 + $0x14] sm:$0xf]
        %v680 = vld [vmem:[#allocation5 + $0x18] sm:$0xff]
        %v681 = vld [vmem:[#allocation5 + $0x20] sm:$0xf]
        %v682 = vld [vmem:[#allocation5 + $0x24] sm:$0xff]
        %v683 = vld [vmem:[#allocation5 + $0x2c] sm:$0xf]
        %v684 = vld [vmem:[#allocation5 + $0x30] sm:$0xff]
        %v685 = vld [vmem:[#allocation5 + $0x38] sm:$0xf]
        %v686 = vld [vmem:[#allocation5 + $0x3c] sm:$0xff]
        %v687 = vld [vmem:[#allocation5 + $0x44] sm:$0xf]
        %v688 = vld [vmem:[#allocation5 + $0x48] sm:$0xff]
        %v689 = vld [vmem:[#allocation5 + $0x50] sm:$0xf]
        %v690 = vld [vmem:[#allocation5 + $0x54] sm:$0xff]
        %v691 = vld [vmem:[#allocation5 + $0x5c] sm:$0xf]
        %v692 = vld [vmem:[#allocation5 + $0x60] sm:$0xff]
        %v693 = vld [vmem:[#allocation5 + $0x68] sm:$0xf]
        %v694 = vld [vmem:[#allocation5 + $0x6c] sm:$0xff]
        %v695 = vld [vmem:[#allocation5 + $0x74] sm:$0xf]
        %v696 = vld [vmem:[#allocation5 + $0x78] sm:$0xff]
        %v697 = vld [vmem:[#allocation5 + $0x80] sm:$0xf]
        %v698 = vld [vmem:[#allocation5 + $0x84] sm:$0xff]
        %v699 = vld [vmem:[#allocation5 + $0x8c] sm:$0xf]
        %v700 = vld [vmem:[#allocation5 + $0x90] sm:$0xff]
        %v701 = vld [vmem:[#allocation5 + $0x98] sm:$0xf]
        %v702 = vld [vmem:[#allocation5 + $0x9c] sm:$0xff]
        %v703 = vld [vmem:[#allocation5 + $0xa4] sm:$0xf]
        %v704 = vld [vmem:[#allocation5 + $0xa8] sm:$0xff]
        %v705 = vld [vmem:[#allocation5 + $0xb0] sm:$0xf]
        %v706 = vld [vmem:[#allocation5 + $0xb4] sm:$0xff]
        %v707 = vld [vmem:[#allocation5 + $0xbc] sm:$0xf]
        %v740 = vunpack.c.l.b16 %v676
        %v741 = vunpack.c.h.b16 %v676
        %v742 = vunpack.c.l.b16 %v677
        %v743 = vunpack.c.l.b16 %v678
        %v744 = vunpack.c.h.b16 %v678
        %v745 = vunpack.c.l.b16 %v679
        %v746 = vunpack.c.l.b16 %v680
        %v747 = vunpack.c.h.b16 %v680
        %v748 = vunpack.c.l.b16 %v681
        %v749 = vunpack.c.l.b16 %v682
        %v750 = vunpack.c.h.b16 %v682
        %v751 = vunpack.c.l.b16 %v683
        %v752 = vunpack.c.l.b16 %v684
        %v753 = vunpack.c.h.b16 %v684
        %v754 = vunpack.c.l.b16 %v685
        %v755 = vunpack.c.l.b16 %v686
        %v756 = vunpack.c.h.b16 %v686
        %v757 = vunpack.c.l.b16 %v687
        %v758 = vunpack.c.l.b16 %v688
        %v759 = vunpack.c.h.b16 %v688
        %v760 = vunpack.c.l.b16 %v689
        %v761 = vunpack.c.l.b16 %v690
        %v762 = vunpack.c.h.b16 %v690
        %v763 = vunpack.c.l.b16 %v691
        %v764 = vunpack.c.l.b16 %v692
        %v765 = vunpack.c.h.b16 %v692
        %v766 = vunpack.c.l.b16 %v693
        %v767 = vunpack.c.l.b16 %v694
        %v768 = vunpack.c.h.b16 %v694
        %v769 = vunpack.c.l.b16 %v695
        %v770 = vunpack.c.l.b16 %v696
        %v771 = vunpack.c.h.b16 %v696
        %v772 = vunpack.c.l.b16 %v697
        %v773 = vunpack.c.l.b16 %v698
        %v774 = vunpack.c.h.b16 %v698
        %v775 = vunpack.c.l.b16 %v699
        %v776 = vunpack.c.l.b16 %v700
        %v777 = vunpack.c.h.b16 %v700
        %v778 = vunpack.c.l.b16 %v701
        %v779 = vunpack.c.l.b16 %v702
        %v780 = vunpack.c.h.b16 %v702
        %v781 = vunpack.c.l.b16 %v703
        %v782 = vunpack.c.l.b16 %v704
        %v783 = vunpack.c.h.b16 %v704
        %v784 = vunpack.c.l.b16 %v705
        %v785 = vunpack.c.l.b16 %v706
        %v786 = vunpack.c.h.b16 %v706
        %v787 = vunpack.c.l.b16 %v707
        %v788 = vpack.c.b16 %v743, %v740
        %v789 = vpack.c.b16 %v744, %v741
        %v790 = vpack.c.b16 %v745, %v742
        %v791 = vpack.c.b16 %v749, %v746
        %v792 = vpack.c.b16 %v750, %v747
        %v793 = vpack.c.b16 %v751, %v748
        %v794 = vpack.c.b16 %v755, %v752
        %v795 = vpack.c.b16 %v756, %v753
        %v796 = vpack.c.b16 %v757, %v754
        %v797 = vpack.c.b16 %v761, %v758
        %v798 = vpack.c.b16 %v762, %v759
        %v799 = vpack.c.b16 %v763, %v760
        %v800 = vpack.c.b16 %v767, %v764
        %v801 = vpack.c.b16 %v768, %v765
        %v802 = vpack.c.b16 %v769, %v766
        %v803 = vpack.c.b16 %v773, %v770
        %v804 = vpack.c.b16 %v774, %v771
        %v805 = vpack.c.b16 %v775, %v772
        %v806 = vpack.c.b16 %v779, %v776
        %v807 = vpack.c.b16 %v780, %v777
        %v808 = vpack.c.b16 %v781, %v778
        %v809 = vpack.c.b16 %v785, %v782
        %v810 = vpack.c.b16 %v786, %v783
        %v811 = vpack.c.b16 %v787, %v784
        %836 = vmatprep.subr.bf16.mxu0 %v810
        %837 = vmatpush1.bf16.msra.mxu0 %v809
        %838 = vmatprep.subr.bf16.mxu0 %v807
        %839 = vmatpush1.bf16.msra.mxu0 %v806
        %840 = vmatprep.subr.bf16.mxu0 %v804
        %841 = vmatpush1.bf16.msra.mxu0 %v803
        %842 = vmatprep.subr.bf16.mxu0 %v801
        %843 = vmatpush1.bf16.msra.mxu0 %v800
        %844 = vmatprep.subr.bf16.mxu0 %v798
        %845 = vmatpush1.bf16.msra.mxu0 %v797
        %846 = vmatprep.subr.bf16.mxu0 %v795
        %847 = vmatpush1.bf16.msra.mxu0 %v794
        %848 = vmatprep.subr.bf16.mxu0 %v792
        %849 = vmatpush1.bf16.msra.mxu0 %v791
        %850 = vmatprep.subr.bf16.mxu0 %v789
        %851 = vmatpush1.bf16.msra.mxu0 %v788
        %852 = vmatprep.subr.bf16.mxu0 0
        %853 = vmatpush2.bf16.msra.mxu0 0
        %854 = vmatprep.subr.bf16.mxu0 0
        %855 = vmatpush2.bf16.msra.mxu0 0
        %856 = vmatprep.subr.bf16.mxu0 0
        %857 = vmatpush2.bf16.msra.mxu0 0
        %858 = vmatprep.subr.bf16.mxu0 0
        %859 = vmatpush2.bf16.msra.mxu0 0
        %860 = vmatprep.subr.bf16.mxu0 0
        %861 = vmatpush2.bf16.msra.mxu0 0
        %862 = vmatprep.subr.bf16.mxu0 0
        %863 = vmatpush2.bf16.msra.mxu0 0
        %864 = vmatprep.subr.bf16.mxu0 0
        %865 = vmatpush2.bf16.msra.mxu0 0
        %866 = vmatprep.subr.bf16.mxu0 0
        %867 = vmatpush2.bf16.msra.mxu0 0
        %868 = vmatprep.mubr.bf16.mxu0 0
        %869 = vmatmul.mubr.bf16.gmra.mxu0 %v672
        %v870 = vpop.f32.mrf.mxu0
        %v871 = vadd.f32 0.0, %v870
        %v872 = vpop.f32.mrf.mxu0
        %v873 = vadd.f32 0.0, %v872
        %v874 = vpop.f32.mrf.mxu0
        %v875 = vadd.f32 0.0, %v874
        %v876 = vpop.f32.mrf.mxu0
        %v877 = vadd.f32 0.0, %v876
        %878 = vmatprep.mubr.bf16.mxu0 0
        %879 = vmatmul.mubr.bf16.gmra.mxu0 %v673
        %v880 = vpop.f32.mrf.mxu0
        %v881 = vadd.f32 0.0, %v880
        %v882 = vpop.f32.mrf.mxu0
        %v883 = vadd.f32 0.0, %v882
        %v884 = vpop.f32.mrf.mxu0
        %v885 = vadd.f32 0.0, %v884
        %v886 = vpop.f32.mrf.mxu0
        %v887 = vadd.f32 0.0, %v886
        %888 = vmatprep.mubr.bf16.mxu0 0
        %889 = vmatmul.mubr.bf16.gmra.mxu0 %v674
        %v890 = vpop.f32.mrf.mxu0
        %v891 = vadd.f32 0.0, %v890
        %v892 = vpop.f32.mrf.mxu0
        %v893 = vadd.f32 0.0, %v892
        %v894 = vpop.f32.mrf.mxu0
        %v895 = vadd.f32 0.0, %v894
        %v896 = vpop.f32.mrf.mxu0
        %v897 = vadd.f32 0.0, %v896
        %898 = vmatprep.mubr.bf16.mxu0 0
        %899 = vmatmul.mubr.bf16.gmra.mxu0 %v675
        %v900 = vpop.f32.mrf.mxu0
        %v901 = vadd.f32 0.0, %v900
        %v902 = vpop.f32.mrf.mxu0
        %v903 = vadd.f32 0.0, %v902
        %v904 = vpop.f32.mrf.mxu0
        %v905 = vadd.f32 0.0, %v904
        %v906 = vpop.f32.mrf.mxu0
        %v907 = vadd.f32 0.0, %v906
        %908 = vdwg.mxu0
        %909 = vmatprep.subr.bf16.mxu0 0
        %910 = vmatpush1.bf16.msra.mxu0 %v811
        %911 = vmatprep.subr.bf16.mxu0 0
        %912 = vmatpush1.bf16.msra.mxu0 %v808
        %913 = vmatprep.subr.bf16.mxu0 0
        %914 = vmatpush1.bf16.msra.mxu0 %v805
        %915 = vmatprep.subr.bf16.mxu0 0
        %916 = vmatpush1.bf16.msra.mxu0 %v802
        %917 = vmatprep.subr.bf16.mxu0 0
        %918 = vmatpush1.bf16.msra.mxu0 %v799
        %919 = vmatprep.subr.bf16.mxu0 0
        %920 = vmatpush1.bf16.msra.mxu0 %v796
        %921 = vmatprep.subr.bf16.mxu0 0
        %922 = vmatpush1.bf16.msra.mxu0 %v793
        %923 = vmatprep.subr.bf16.mxu0 0
        %924 = vmatpush1.bf16.msra.mxu0 %v790
        %925 = vmatprep.subr.bf16.mxu0 0
        %926 = vmatpush2.bf16.msra.mxu0 0
        %927 = vmatprep.subr.bf16.mxu0 0
        %928 = vmatpush2.bf16.msra.mxu0 0
        %929 = vmatprep.subr.bf16.mxu0 0
        %930 = vmatpush2.bf16.msra.mxu0 0
        %931 = vmatprep.subr.bf16.mxu0 0
        %932 = vmatpush2.bf16.msra.mxu0 0
        %933 = vmatprep.subr.bf16.mxu0 0
        %934 = vmatpush2.bf16.msra.mxu0 0
        %935 = vmatprep.subr.bf16.mxu0 0
        %936 = vmatpush2.bf16.msra.mxu0 0
        %937 = vmatprep.subr.bf16.mxu0 0
        %938 = vmatpush2.bf16.msra.mxu0 0
        %939 = vmatprep.subr.bf16.mxu0 0
        %940 = vmatpush2.bf16.msra.mxu0 0
        %941 = vmatprep.mubr.bf16.mxu0 0
        %942 = vmatmul.mubr.bf16.gmra.mxu0 %v672
        %v943 = vpop.f32.mrf.mxu0
        %v944 = vadd.f32 0.0, %v943
        %v945 = vpop.f32.mrf.mxu0
        %v946 = vpop.f32.mrf.mxu0
        %v947 = vadd.f32 0.0, %v946
        %v948 = vpop.f32.mrf.mxu0
        %949 = vmatprep.mubr.bf16.mxu0 0
        %950 = vmatmul.mubr.bf16.gmra.mxu0 %v673
        %v951 = vpop.f32.mrf.mxu0
        %v952 = vadd.f32 0.0, %v951
        %v953 = vpop.f32.mrf.mxu0
        %v954 = vpop.f32.mrf.mxu0
        %v955 = vadd.f32 0.0, %v954
        %v956 = vpop.f32.mrf.mxu0
        %957 = vmatprep.mubr.bf16.mxu0 0
        %958 = vmatmul.mubr.bf16.gmra.mxu0 %v674
        %v959 = vpop.f32.mrf.mxu0
        %v960 = vadd.f32 0.0, %v959
        %v961 = vpop.f32.mrf.mxu0
        %v962 = vpop.f32.mrf.mxu0
        %v963 = vadd.f32 0.0, %v962
        %v964 = vpop.f32.mrf.mxu0
        %965 = vmatprep.mubr.bf16.mxu0 0
        %966 = vmatmul.mubr.bf16.gmra.mxu0 %v675
        %v967 = vpop.f32.mrf.mxu0
        %v968 = vadd.f32 0.0, %v967
        %v969 = vpop.f32.mrf.mxu0
        %v970 = vpop.f32.mrf.mxu0
        %v971 = vadd.f32 0.0, %v970
        %v972 = vpop.f32.mrf.mxu0
        %973 = vdwg.mxu0
        %v974 = vpack.c.bf16 %v875, %v871
        %v975 = vpack.c.bf16 %v877, %v873
        %v976 = vpack.c.bf16 %v947, %v944
        %v977 = vpack.c.bf16 %v885, %v881
        %v978 = vpack.c.bf16 %v887, %v883
        %v979 = vpack.c.bf16 %v955, %v952
        %v980 = vpack.c.bf16 %v895, %v891
        %v981 = vpack.c.bf16 %v897, %v893
        %v982 = vpack.c.bf16 %v963, %v960
        %v983 = vpack.c.bf16 %v905, %v901
        %v984 = vpack.c.bf16 %v907, %v903
        %v985 = vpack.c.bf16 %v971, %v968
        %vm986 = vcmask 261120
        %v988 = vsel %vm986, %v974, 0
        %v991 = vsel %vm986, %v977, 0
        %v994 = vsel %vm986, %v980, 0
        %v997 = vsel %vm986, %v983, 0
        %v1000 = vsel %vm986, %v975, 0
        %v1003 = vsel %vm986, %v978, 0
        %v1006 = vsel %vm986, %v981, 0
        %v1009 = vsel %vm986, %v984, 0
        %1011 = vmatprep.subr.bf16.mxu0 0
        %1012 = vmatpush1.bf16.xpose.msra.mxu0 0
        %1013 = vmatprep.subr.bf16.mxu0 0
        %1014 = vmatpush1.bf16.xpose.msra.mxu0 0
        %1015 = vmatprep.subr.bf16.mxu0 0
        %1016 = vmatpush1.bf16.xpose.msra.mxu0 0
        %1017 = vmatprep.subr.bf16.mxu0 0
        %1018 = vmatpush1.bf16.xpose.msra.mxu0 0
        %1019 = vmatprep.subr.bf16.mxu0 0
        %1020 = vmatpush1.bf16.xpose.msra.mxu0 %v1009
        %1021 = vmatprep.subr.bf16.mxu0 0
        %1022 = vmatpush1.bf16.xpose.msra.mxu0 %v1006
        %1023 = vmatprep.subr.bf16.mxu0 0
        %1024 = vmatpush1.bf16.xpose.msra.mxu0 %v1003
        %1025 = vmatprep.subr.bf16.mxu0 0
        %1026 = vmatpush1.bf16.xpose.msra.mxu0 %v1000
        %1027 = vmatprep.subr.bf16.mxu0 0
        %1028 = vmatpush2.bf16.xpose.msra.mxu0 0
        %1029 = vmatprep.subr.bf16.mxu0 0
        %1030 = vmatpush2.bf16.xpose.msra.mxu0 0
        %1031 = vmatprep.subr.bf16.mxu0 0
        %1032 = vmatpush2.bf16.xpose.msra.mxu0 0
        %1033 = vmatprep.subr.bf16.mxu0 0
        %1034 = vmatpush2.bf16.xpose.msra.mxu0 0
        %1035 = vmatprep.subr.bf16.mxu0 0
        %1036 = vmatpush2.bf16.xpose.msra.mxu0 0
        %1037 = vmatprep.subr.bf16.mxu0 0
        %1038 = vmatpush2.bf16.xpose.msra.mxu0 0
        %1039 = vmatprep.subr.bf16.mxu0 0
        %1040 = vmatpush2.bf16.xpose.msra.mxu0 0
        %1041 = vmatprep.subr.bf16.mxu0 0
        %1042 = vmatpush2.bf16.xpose.msra.mxu0 0
        %1043 = vmatprep.mubr.bf16.mxu0 0
        %1044 = vmatmul.mubr.bf16.gmra.mxu0 %v988
        %v1045 = vpop.f32.mrf.mxu0
        %v1046 = vadd.f32 0.0, %v1045
        %v1047 = vpop.f32.mrf.mxu0
        %v1048 = vpop.f32.mrf.mxu0
        %v1049 = vadd.f32 0.0, %v1048
        %v1050 = vpop.f32.mrf.mxu0
        %1051 = vmatprep.mubr.bf16.mxu0 0
        %1052 = vmatmul.mubr.bf16.gmra.mxu0 %v991
        %v1053 = vpop.f32.mrf.mxu0
        %v1054 = vadd.f32 0.0, %v1053
        %v1055 = vpop.f32.mrf.mxu0
        %v1056 = vpop.f32.mrf.mxu0
        %v1057 = vadd.f32 0.0, %v1056
        %v1058 = vpop.f32.mrf.mxu0
        %1059 = vmatprep.mubr.bf16.mxu0 0
        %1060 = vmatmul.mubr.bf16.gmra.mxu0 %v994
        %v1061 = vpop.f32.mrf.mxu0
        %v1062 = vadd.f32 0.0, %v1061
        %v1063 = vpop.f32.mrf.mxu0
        %v1064 = vpop.f32.mrf.mxu0
        %v1065 = vadd.f32 0.0, %v1064
        %v1066 = vpop.f32.mrf.mxu0
        %1067 = vmatprep.mubr.bf16.mxu0 0
        %1068 = vmatmul.mubr.bf16.gmra.mxu0 %v997
        %v1069 = vpop.f32.mrf.mxu0
        %v1070 = vadd.f32 0.0, %v1069
        %v1071 = vpop.f32.mrf.mxu0
        %v1072 = vpop.f32.mrf.mxu0
        %v1073 = vadd.f32 0.0, %v1072
        %v1074 = vpop.f32.mrf.mxu0
        %1075 = vdwg.mxu0
        %vm1076 = vcmask 523264
        %v1077 = vsel %vm1076, %v1046, -inf
        %1078 = vmax.xlane.f32.xlu0 %v1077
        %v1079 = vpop.xlane.xlu0 %1078
        %v1080 = vsel %vm1076, %v1049, -inf
        %1081 = vmax.xlane.f32.xlu0 %v1080
        %v1082 = vpop.xlane.xlu0 %1081
        %v1083 = vsel %vm1076, %v1054, -inf
        %1084 = vmax.xlane.f32.xlu0 %v1083
        %v1085 = vpop.xlane.xlu0 %1084
        %v1086 = vsel %vm1076, %v1057, -inf
        %1087 = vmax.xlane.f32.xlu0 %v1086
        %v1088 = vpop.xlane.xlu0 %1087
        %v1089 = vsel %vm1076, %v1062, -inf
        %1090 = vmax.xlane.f32.xlu0 %v1089
        %v1091 = vpop.xlane.xlu0 %1090
        %v1092 = vsel %vm1076, %v1065, -inf
        %1093 = vmax.xlane.f32.xlu0 %v1092
        %v1094 = vpop.xlane.xlu0 %1093
        %v1095 = vsel %vm1076, %v1070, -inf
        %1096 = vmax.xlane.f32.xlu0 %v1095
        %v1097 = vpop.xlane.xlu0 %1096
        %v1098 = vsel %vm1076, %v1073, -inf
        %1099 = vmax.xlane.f32.xlu0 %v1098
        %v1100 = vpop.xlane.xlu0 %1099
        %v1101 = vsub.f32 %v1046, %v1079
        %v1102 = vsub.f32 %v1049, %v1082
        %v1103 = vsub.f32 %v1054, %v1085
        %v1104 = vsub.f32 %v1057, %v1088
        %v1105 = vsub.f32 %v1062, %v1091
        %v1106 = vsub.f32 %v1065, %v1094
        %v1107 = vsub.f32 %v1070, %v1097
        %v1108 = vsub.f32 %v1073, %v1100
        %v1109 = vmul.f32 %v1101, 1.442695
        %v1110 = vpow.pop %v1109
        %v1111 = vmul.f32 %v1102, 1.442695
        %v1112 = vpow.pop %v1111
        %v1113 = vmul.f32 %v1103, 1.442695
        %v1114 = vpow.pop %v1113
        %v1115 = vmul.f32 %v1104, 1.442695
        %v1116 = vpow.pop %v1115
        %v1117 = vmul.f32 %v1105, 1.442695
        %v1118 = vpow.pop %v1117
        %v1119 = vmul.f32 %v1106, 1.442695
        %v1120 = vpow.pop %v1119
        %v1121 = vmul.f32 %v1107, 1.442695
        %v1122 = vpow.pop %v1121
        %v1123 = vmul.f32 %v1108, 1.442695
        %v1124 = vpow.pop %v1123
        %v1125 = vsel %vm1076, %v1110, 0.0
        %1126 = vadd.xlane.f32.xlu0 %v1125
        %v1127 = vpop.xlane.xlu0 %1126
        %v1128 = vsel %vm1076, %v1112, 0.0
        %1129 = vadd.xlane.f32.xlu0 %v1128
        %v1130 = vpop.xlane.xlu0 %1129
        %v1131 = vsel %vm1076, %v1114, 0.0
        %1132 = vadd.xlane.f32.xlu0 %v1131
        %v1133 = vpop.xlane.xlu0 %1132
        %v1134 = vsel %vm1076, %v1116, 0.0
        %1135 = vadd.xlane.f32.xlu0 %v1134
        %v1136 = vpop.xlane.xlu0 %1135
        %v1137 = vsel %vm1076, %v1118, 0.0
        %1138 = vadd.xlane.f32.xlu0 %v1137
        %v1139 = vpop.xlane.xlu0 %1138
        %v1140 = vsel %vm1076, %v1120, 0.0
        %1141 = vadd.xlane.f32.xlu0 %v1140
        %v1142 = vpop.xlane.xlu0 %1141
        %v1143 = vsel %vm1076, %v1122, 0.0
        %1144 = vadd.xlane.f32.xlu0 %v1143
        %v1145 = vpop.xlane.xlu0 %1144
        %v1146 = vsel %vm1076, %v1124, 0.0
        %1147 = vadd.xlane.f32.xlu0 %v1146
        %v1148 = vpop.xlane.xlu0 %1147
        %v1149 = vrcp.pop %v1127
        %v1150 = vmul.f32 %v1110, %v1149
        %v1151 = vrcp.pop %v1130
        %v1152 = vmul.f32 %v1112, %v1151
        %v1153 = vrcp.pop %v1133
        %v1154 = vmul.f32 %v1114, %v1153
        %v1155 = vrcp.pop %v1136
        %v1156 = vmul.f32 %v1116, %v1155
        %v1157 = vrcp.pop %v1139
        %v1158 = vmul.f32 %v1118, %v1157
        %v1159 = vrcp.pop %v1142
        %v1160 = vmul.f32 %v1120, %v1159
        %v1161 = vrcp.pop %v1145
        %v1162 = vmul.f32 %v1122, %v1161
        %v1163 = vrcp.pop %v1148
        %v1164 = vmul.f32 %v1124, %v1163
        %v1165 = vpack.c.bf16 %v1152, %v1150
        %v1166 = vpack.c.bf16 %v1156, %v1154
        %v1167 = vpack.c.bf16 %v1160, %v1158
        %v1168 = vpack.c.bf16 %v1164, %v1162
        %v1170 = vsel %vm1076, %v1165, 0
        %v1173 = vsel %vm1076, %v1166, 0
        %v1176 = vsel %vm1076, %v1167, 0
        %v1179 = vsel %vm1076, %v1168, 0
        %1181 = vmatprep.subr.bf16.mxu0 0
        %1182 = vmatpush1.bf16.msra.mxu0 0
        %1183 = vmatprep.subr.bf16.mxu0 0
        %1184 = vmatpush1.bf16.msra.mxu0 0
        %1185 = vmatprep.subr.bf16.mxu0 0
        %1186 = vmatpush1.bf16.msra.mxu0 0
        %1187 = vmatprep.subr.bf16.mxu0 0
        %1188 = vmatpush1.bf16.msra.mxu0 0
        %1189 = vmatprep.subr.bf16.mxu0 0
        %1190 = vmatpush1.bf16.msra.mxu0 %v985
        %1191 = vmatprep.subr.bf16.mxu0 0
        %1192 = vmatpush1.bf16.msra.mxu0 %v982
        %1193 = vmatprep.subr.bf16.mxu0 0
        %1194 = vmatpush1.bf16.msra.mxu0 %v979
        %1195 = vmatprep.subr.bf16.mxu0 0
        %1196 = vmatpush1.bf16.msra.mxu0 %v976
        %1197 = vmatprep.subr.bf16.mxu0 0
        %1198 = vmatpush2.bf16.msra.mxu0 0
        %1199 = vmatprep.subr.bf16.mxu0 0
        %1200 = vmatpush2.bf16.msra.mxu0 0
        %1201 = vmatprep.subr.bf16.mxu0 0
        %1202 = vmatpush2.bf16.msra.mxu0 0
        %1203 = vmatprep.subr.bf16.mxu0 0
        %1204 = vmatpush2.bf16.msra.mxu0 0
        %1205 = vmatprep.subr.bf16.mxu0 0
        %1206 = vmatpush2.bf16.msra.mxu0 0
        %1207 = vmatprep.subr.bf16.mxu0 0
        %1208 = vmatpush2.bf16.msra.mxu0 0
        %1209 = vmatprep.subr.bf16.mxu0 0
        %1210 = vmatpush2.bf16.msra.mxu0 0
        %1211 = vmatprep.subr.bf16.mxu0 0
        %1212 = vmatpush2.bf16.msra.mxu0 0
        %1213 = vmatprep.mubr.bf16.mxu0 0
        %1214 = vmatmul.mubr.bf16.gmra.mxu0 %v1170
        %v1215 = vpop.f32.mrf.mxu0
        %v1216 = vadd.f32 0.0, %v1215
        %v1217 = vpop.f32.mrf.mxu0
        %v1218 = vpop.f32.mrf.mxu0
        %v1219 = vadd.f32 0.0, %v1218
        %v1220 = vpop.f32.mrf.mxu0
        %1221 = vmatprep.mubr.bf16.mxu0 0
        %1222 = vmatmul.mubr.bf16.gmra.mxu0 %v1173
        %v1223 = vpop.f32.mrf.mxu0
        %v1224 = vadd.f32 0.0, %v1223
        %v1225 = vpop.f32.mrf.mxu0
        %v1226 = vpop.f32.mrf.mxu0
        %v1227 = vadd.f32 0.0, %v1226
        %v1228 = vpop.f32.mrf.mxu0
        %1229 = vmatprep.mubr.bf16.mxu0 0
        %1230 = vmatmul.mubr.bf16.gmra.mxu0 %v1176
        %v1231 = vpop.f32.mrf.mxu0
        %v1232 = vadd.f32 0.0, %v1231
        %v1233 = vpop.f32.mrf.mxu0
        %v1234 = vpop.f32.mrf.mxu0
        %v1235 = vadd.f32 0.0, %v1234
        %v1236 = vpop.f32.mrf.mxu0
        %1237 = vmatprep.mubr.bf16.mxu0 0
        %1238 = vmatmul.mubr.bf16.gmra.mxu0 %v1179
        %v1239 = vpop.f32.mrf.mxu0
        %v1240 = vadd.f32 0.0, %v1239
        %v1241 = vpop.f32.mrf.mxu0
        %v1242 = vpop.f32.mrf.mxu0
        %v1243 = vadd.f32 0.0, %v1242
        %v1244 = vpop.f32.mrf.mxu0
        %1245 = vdwg.mxu0
        %1250 = vrot.lane.b32.xlu0 %v974, 96
        %v1251 = vpop.permute.xlu0 %1250
        %1252 = vrot.lane.b32.xlu0 %v977, 96
        %v1253 = vpop.permute.xlu0 %1252
        %1254 = vrot.lane.b32.xlu0 %v980, 96
        %v1255 = vpop.permute.xlu0 %1254
        %1256 = vrot.lane.b32.xlu0 %v983, 96
        %v1257 = vpop.permute.xlu0 %1256
        %1262 = vrot.lane.b32.xlu0 %v975, 96
        %v1263 = vpop.permute.xlu0 %1262
        %1264 = vrot.lane.b32.xlu0 %v978, 96
        %v1265 = vpop.permute.xlu0 %1264
        %1266 = vrot.lane.b32.xlu0 %v981, 96
        %v1267 = vpop.permute.xlu0 %1266
        %1268 = vrot.lane.b32.xlu0 %v984, 96
        %v1269 = vpop.permute.xlu0 %1268
        %v1271 = vsel %vm986, %v1251, 0
        %v1274 = vsel %vm986, %v1253, 0
        %v1277 = vsel %vm986, %v1255, 0
        %v1280 = vsel %vm986, %v1257, 0
        %v1283 = vsel %vm986, %v1263, 0
        %v1286 = vsel %vm986, %v1265, 0
        %v1289 = vsel %vm986, %v1267, 0
        %v1292 = vsel %vm986, %v1269, 0
        %1294 = vmatprep.subr.bf16.mxu0 0
        %1295 = vmatpush1.bf16.xpose.msra.mxu0 0
        %1296 = vmatprep.subr.bf16.mxu0 0
        %1297 = vmatpush1.bf16.xpose.msra.mxu0 0
        %1298 = vmatprep.subr.bf16.mxu0 0
        %1299 = vmatpush1.bf16.xpose.msra.mxu0 0
        %1300 = vmatprep.subr.bf16.mxu0 0
        %1301 = vmatpush1.bf16.xpose.msra.mxu0 0
        %1302 = vmatprep.subr.bf16.mxu0 0
        %1303 = vmatpush1.bf16.xpose.msra.mxu0 %v1292
        %1304 = vmatprep.subr.bf16.mxu0 0
        %1305 = vmatpush1.bf16.xpose.msra.mxu0 %v1289
        %1306 = vmatprep.subr.bf16.mxu0 0
        %1307 = vmatpush1.bf16.xpose.msra.mxu0 %v1286
        %1308 = vmatprep.subr.bf16.mxu0 0
        %1309 = vmatpush1.bf16.xpose.msra.mxu0 %v1283
        %1310 = vmatprep.subr.bf16.mxu0 0
        %1311 = vmatpush2.bf16.xpose.msra.mxu0 0
        %1312 = vmatprep.subr.bf16.mxu0 0
        %1313 = vmatpush2.bf16.xpose.msra.mxu0 0
        %1314 = vmatprep.subr.bf16.mxu0 0
        %1315 = vmatpush2.bf16.xpose.msra.mxu0 0
        %1316 = vmatprep.subr.bf16.mxu0 0
        %1317 = vmatpush2.bf16.xpose.msra.mxu0 0
        %1318 = vmatprep.subr.bf16.mxu0 0
        %1319 = vmatpush2.bf16.xpose.msra.mxu0 0
        %1320 = vmatprep.subr.bf16.mxu0 0
        %1321 = vmatpush2.bf16.xpose.msra.mxu0 0
        %1322 = vmatprep.subr.bf16.mxu0 0
        %1323 = vmatpush2.bf16.xpose.msra.mxu0 0
        %1324 = vmatprep.subr.bf16.mxu0 0
        %1325 = vmatpush2.bf16.xpose.msra.mxu0 0
        %1326 = vmatprep.mubr.bf16.mxu0 0
        %1327 = vmatmul.mubr.bf16.gmra.mxu0 %v1271
        %v1328 = vpop.f32.mrf.mxu0
        %v1329 = vadd.f32 0.0, %v1328
        %v1330 = vpop.f32.mrf.mxu0
        %v1331 = vpop.f32.mrf.mxu0
        %v1332 = vadd.f32 0.0, %v1331
        %v1333 = vpop.f32.mrf.mxu0
        %1334 = vmatprep.mubr.bf16.mxu0 0
        %1335 = vmatmul.mubr.bf16.gmra.mxu0 %v1274
        %v1336 = vpop.f32.mrf.mxu0
        %v1337 = vadd.f32 0.0, %v1336
        %v1338 = vpop.f32.mrf.mxu0
        %v1339 = vpop.f32.mrf.mxu0
        %v1340 = vadd.f32 0.0, %v1339
        %v1341 = vpop.f32.mrf.mxu0
        %1342 = vmatprep.mubr.bf16.mxu0 0
        %1343 = vmatmul.mubr.bf16.gmra.mxu0 %v1277
        %v1344 = vpop.f32.mrf.mxu0
        %v1345 = vadd.f32 0.0, %v1344
        %v1346 = vpop.f32.mrf.mxu0
        %v1347 = vpop.f32.mrf.mxu0
        %v1348 = vadd.f32 0.0, %v1347
        %v1349 = vpop.f32.mrf.mxu0
        %1350 = vmatprep.mubr.bf16.mxu0 0
        %1351 = vmatmul.mubr.bf16.gmra.mxu0 %v1280
        %v1352 = vpop.f32.mrf.mxu0
        %v1353 = vadd.f32 0.0, %v1352
        %v1354 = vpop.f32.mrf.mxu0
        %v1355 = vpop.f32.mrf.mxu0
        %v1356 = vadd.f32 0.0, %v1355
        %v1357 = vpop.f32.mrf.mxu0
        %1358 = vdwg.mxu0
        %v1359 = vsel %vm1076, %v1329, -inf
        %1360 = vmax.xlane.f32.xlu0 %v1359
        %v1361 = vpop.xlane.xlu0 %1360
        %v1362 = vsel %vm1076, %v1332, -inf
        %1363 = vmax.xlane.f32.xlu0 %v1362
        %v1364 = vpop.xlane.xlu0 %1363
        %v1365 = vsel %vm1076, %v1337, -inf
        %1366 = vmax.xlane.f32.xlu0 %v1365
        %v1367 = vpop.xlane.xlu0 %1366
        %v1368 = vsel %vm1076, %v1340, -inf
        %1369 = vmax.xlane.f32.xlu0 %v1368
        %v1370 = vpop.xlane.xlu0 %1369
        %v1371 = vsel %vm1076, %v1345, -inf
        %1372 = vmax.xlane.f32.xlu0 %v1371
        %v1373 = vpop.xlane.xlu0 %1372
        %v1374 = vsel %vm1076, %v1348, -inf
        %1375 = vmax.xlane.f32.xlu0 %v1374
        %v1376 = vpop.xlane.xlu0 %1375
        %v1377 = vsel %vm1076, %v1353, -inf
        %1378 = vmax.xlane.f32.xlu0 %v1377
        %v1379 = vpop.xlane.xlu0 %1378
        %v1380 = vsel %vm1076, %v1356, -inf
        %1381 = vmax.xlane.f32.xlu0 %v1380
        %v1382 = vpop.xlane.xlu0 %1381
        %v1383 = vsub.f32 %v1329, %v1361
        %v1384 = vsub.f32 %v1332, %v1364
        %v1385 = vsub.f32 %v1337, %v1367
        %v1386 = vsub.f32 %v1340, %v1370
        %v1387 = vsub.f32 %v1345, %v1373
        %v1388 = vsub.f32 %v1348, %v1376
        %v1389 = vsub.f32 %v1353, %v1379
        %v1390 = vsub.f32 %v1356, %v1382
        %v1391 = vmul.f32 %v1383, 1.442695
        %v1392 = vpow.pop %v1391
        %v1393 = vmul.f32 %v1384, 1.442695
        %v1394 = vpow.pop %v1393
        %v1395 = vmul.f32 %v1385, 1.442695
        %v1396 = vpow.pop %v1395
        %v1397 = vmul.f32 %v1386, 1.442695
        %v1398 = vpow.pop %v1397
        %v1399 = vmul.f32 %v1387, 1.442695
        %v1400 = vpow.pop %v1399
        %v1401 = vmul.f32 %v1388, 1.442695
        %v1402 = vpow.pop %v1401
        %v1403 = vmul.f32 %v1389, 1.442695
        %v1404 = vpow.pop %v1403
        %v1405 = vmul.f32 %v1390, 1.442695
        %v1406 = vpow.pop %v1405
        %v1407 = vsel %vm1076, %v1392, 0.0
        %1408 = vadd.xlane.f32.xlu0 %v1407
        %v1409 = vpop.xlane.xlu0 %1408
        %v1410 = vsel %vm1076, %v1394, 0.0
        %1411 = vadd.xlane.f32.xlu0 %v1410
        %v1412 = vpop.xlane.xlu0 %1411
        %v1413 = vsel %vm1076, %v1396, 0.0
        %1414 = vadd.xlane.f32.xlu0 %v1413
        %v1415 = vpop.xlane.xlu0 %1414
        %v1416 = vsel %vm1076, %v1398, 0.0
        %1417 = vadd.xlane.f32.xlu0 %v1416
        %v1418 = vpop.xlane.xlu0 %1417
        %v1419 = vsel %vm1076, %v1400, 0.0
        %1420 = vadd.xlane.f32.xlu0 %v1419
        %v1421 = vpop.xlane.xlu0 %1420
        %v1422 = vsel %vm1076, %v1402, 0.0
        %1423 = vadd.xlane.f32.xlu0 %v1422
        %v1424 = vpop.xlane.xlu0 %1423
        %v1425 = vsel %vm1076, %v1404, 0.0
        %1426 = vadd.xlane.f32.xlu0 %v1425
        %v1427 = vpop.xlane.xlu0 %1426
        %v1428 = vsel %vm1076, %v1406, 0.0
        %1429 = vadd.xlane.f32.xlu0 %v1428
        %v1430 = vpop.xlane.xlu0 %1429
        %v1431 = vrcp.pop %v1409
        %v1432 = vmul.f32 %v1392, %v1431
        %v1433 = vrcp.pop %v1412
        %v1434 = vmul.f32 %v1394, %v1433
        %v1435 = vrcp.pop %v1415
        %v1436 = vmul.f32 %v1396, %v1435
        %v1437 = vrcp.pop %v1418
        %v1438 = vmul.f32 %v1398, %v1437
        %v1439 = vrcp.pop %v1421
        %v1440 = vmul.f32 %v1400, %v1439
        %v1441 = vrcp.pop %v1424
        %v1442 = vmul.f32 %v1402, %v1441
        %v1443 = vrcp.pop %v1427
        %v1444 = vmul.f32 %v1404, %v1443
        %v1445 = vrcp.pop %v1430
        %v1446 = vmul.f32 %v1406, %v1445
        %v1447 = vpack.c.bf16 %v1434, %v1432
        %v1448 = vpack.c.bf16 %v1438, %v1436
        %v1449 = vpack.c.bf16 %v1442, %v1440
        %v1450 = vpack.c.bf16 %v1446, %v1444
        %1455 = vrot.lane.b32.xlu0 %v976, 96
        %v1456 = vpop.permute.xlu0 %1455
        %1457 = vrot.lane.b32.xlu0 %v979, 96
        %v1458 = vpop.permute.xlu0 %1457
        %1459 = vrot.lane.b32.xlu0 %v982, 96
        %v1460 = vpop.permute.xlu0 %1459
        %1461 = vrot.lane.b32.xlu0 %v985, 96
        %v1462 = vpop.permute.xlu0 %1461
        %v1468 = vsel %vm1076, %v1447, 0
        %v1471 = vsel %vm1076, %v1448, 0
        %v1474 = vsel %vm1076, %v1449, 0
        %v1477 = vsel %vm1076, %v1450, 0
        %1479 = vmatprep.subr.bf16.mxu0 0
        %1480 = vmatpush1.bf16.msra.mxu0 0
        %1481 = vmatprep.subr.bf16.mxu0 0
        %1482 = vmatpush1.bf16.msra.mxu0 0
        %1483 = vmatprep.subr.bf16.mxu0 0
        %1484 = vmatpush1.bf16.msra.mxu0 0
        %1485 = vmatprep.subr.bf16.mxu0 0
        %1486 = vmatpush1.bf16.msra.mxu0 0
        %1487 = vmatprep.subr.bf16.mxu0 0
        %1488 = vmatpush1.bf16.msra.mxu0 %v1462
        %1489 = vmatprep.subr.bf16.mxu0 0
        %1490 = vmatpush1.bf16.msra.mxu0 %v1460
        %1491 = vmatprep.subr.bf16.mxu0 0
        %1492 = vmatpush1.bf16.msra.mxu0 %v1458
        %1493 = vmatprep.subr.bf16.mxu0 0
        %1494 = vmatpush1.bf16.msra.mxu0 %v1456
        %1495 = vmatprep.subr.bf16.mxu0 0
        %1496 = vmatpush2.bf16.msra.mxu0 0
        %1497 = vmatprep.subr.bf16.mxu0 0
        %1498 = vmatpush2.bf16.msra.mxu0 0
        %1499 = vmatprep.subr.bf16.mxu0 0
        %1500 = vmatpush2.bf16.msra.mxu0 0
        %1501 = vmatprep.subr.bf16.mxu0 0
        %1502 = vmatpush2.bf16.msra.mxu0 0
        %1503 = vmatprep.subr.bf16.mxu0 0
        %1504 = vmatpush2.bf16.msra.mxu0 0
        %1505 = vmatprep.subr.bf16.mxu0 0
        %1506 = vmatpush2.bf16.msra.mxu0 0
        %1507 = vmatprep.subr.bf16.mxu0 0
        %1508 = vmatpush2.bf16.msra.mxu0 0
        %1509 = vmatprep.subr.bf16.mxu0 0
        %1510 = vmatpush2.bf16.msra.mxu0 0
        %1511 = vmatprep.mubr.bf16.mxu0 0
        %1512 = vmatmul.mubr.bf16.gmra.mxu0 %v1468
        %v1513 = vpop.f32.mrf.mxu0
        %v1514 = vadd.f32 0.0, %v1513
        %v1515 = vpop.f32.mrf.mxu0
        %v1516 = vpop.f32.mrf.mxu0
        %v1517 = vadd.f32 0.0, %v1516
        %v1518 = vpop.f32.mrf.mxu0
        %1519 = vmatprep.mubr.bf16.mxu0 0
        %1520 = vmatmul.mubr.bf16.gmra.mxu0 %v1471
        %v1521 = vpop.f32.mrf.mxu0
        %v1522 = vadd.f32 0.0, %v1521
        %v1523 = vpop.f32.mrf.mxu0
        %v1524 = vpop.f32.mrf.mxu0
        %v1525 = vadd.f32 0.0, %v1524
        %v1526 = vpop.f32.mrf.mxu0
        %1527 = vmatprep.mubr.bf16.mxu0 0
        %1528 = vmatmul.mubr.bf16.gmra.mxu0 %v1474
        %v1529 = vpop.f32.mrf.mxu0
        %v1530 = vadd.f32 0.0, %v1529
        %v1531 = vpop.f32.mrf.mxu0
        %v1532 = vpop.f32.mrf.mxu0
        %v1533 = vadd.f32 0.0, %v1532
        %v1534 = vpop.f32.mrf.mxu0
        %1535 = vmatprep.mubr.bf16.mxu0 0
        %1536 = vmatmul.mubr.bf16.gmra.mxu0 %v1477
        %v1537 = vpop.f32.mrf.mxu0
        %v1538 = vadd.f32 0.0, %v1537
        %v1539 = vpop.f32.mrf.mxu0
        %v1540 = vpop.f32.mrf.mxu0
        %v1541 = vadd.f32 0.0, %v1540
        %v1542 = vpop.f32.mrf.mxu0
        %1543 = vdwg.mxu0
        %1544 = vrot.lane.b32.xlu0 %v974, 64
        %v1545 = vpop.permute.xlu0 %1544
        %1546 = vrot.lane.b32.xlu0 %v977, 64
        %v1547 = vpop.permute.xlu0 %1546
        %1548 = vrot.lane.b32.xlu0 %v980, 64
        %v1549 = vpop.permute.xlu0 %1548
        %1550 = vrot.lane.b32.xlu0 %v983, 64
        %v1551 = vpop.permute.xlu0 %1550
        %1552 = vrot.lane.b32.xlu0 %v975, 64
        %v1553 = vpop.permute.xlu0 %1552
        %1554 = vrot.lane.b32.xlu0 %v978, 64
        %v1555 = vpop.permute.xlu0 %1554
        %1556 = vrot.lane.b32.xlu0 %v981, 64
        %v1557 = vpop.permute.xlu0 %1556
        %1558 = vrot.lane.b32.xlu0 %v984, 64
        %v1559 = vpop.permute.xlu0 %1558
        %v1561 = vsel %vm986, %v1545, 0
        %v1564 = vsel %vm986, %v1547, 0
        %v1567 = vsel %vm986, %v1549, 0
        %v1570 = vsel %vm986, %v1551, 0
        %v1573 = vsel %vm986, %v1553, 0
        %v1576 = vsel %vm986, %v1555, 0
        %v1579 = vsel %vm986, %v1557, 0
        %v1582 = vsel %vm986, %v1559, 0
        %1584 = vmatprep.subr.bf16.mxu0 0
        %1585 = vmatpush1.bf16.xpose.msra.mxu0 0
        %1586 = vmatprep.subr.bf16.mxu0 0
        %1587 = vmatpush1.bf16.xpose.msra.mxu0 0
        %1588 = vmatprep.subr.bf16.mxu0 0
        %1589 = vmatpush1.bf16.xpose.msra.mxu0 0
        %1590 = vmatprep.subr.bf16.mxu0 0
        %1591 = vmatpush1.bf16.xpose.msra.mxu0 0
        %1592 = vmatprep.subr.bf16.mxu0 0
        %1593 = vmatpush1.bf16.xpose.msra.mxu0 %v1582
        %1594 = vmatprep.subr.bf16.mxu0 0
        %1595 = vmatpush1.bf16.xpose.msra.mxu0 %v1579
        %1596 = vmatprep.subr.bf16.mxu0 0
        %1597 = vmatpush1.bf16.xpose.msra.mxu0 %v1576
        %1598 = vmatprep.subr.bf16.mxu0 0
        %1599 = vmatpush1.bf16.xpose.msra.mxu0 %v1573
        %1600 = vmatprep.subr.bf16.mxu0 0
        %1601 = vmatpush2.bf16.xpose.msra.mxu0 0
        %1602 = vmatprep.subr.bf16.mxu0 0
        %1603 = vmatpush2.bf16.xpose.msra.mxu0 0
        %1604 = vmatprep.subr.bf16.mxu0 0
        %1605 = vmatpush2.bf16.xpose.msra.mxu0 0
        %1606 = vmatprep.subr.bf16.mxu0 0
        %1607 = vmatpush2.bf16.xpose.msra.mxu0 0
        %1608 = vmatprep.subr.bf16.mxu0 0
        %1609 = vmatpush2.bf16.xpose.msra.mxu0 0
        %1610 = vmatprep.subr.bf16.mxu0 0
        %1611 = vmatpush2.bf16.xpose.msra.mxu0 0
        %1612 = vmatprep.subr.bf16.mxu0 0
        %1613 = vmatpush2.bf16.xpose.msra.mxu0 0
        %1614 = vmatprep.subr.bf16.mxu0 0
        %1615 = vmatpush2.bf16.xpose.msra.mxu0 0
        %1616 = vmatprep.mubr.bf16.mxu0 0
        %1617 = vmatmul.mubr.bf16.gmra.mxu0 %v1561
        %v1618 = vpop.f32.mrf.mxu0
        %v1619 = vadd.f32 0.0, %v1618
        %v1620 = vpop.f32.mrf.mxu0
        %v1621 = vpop.f32.mrf.mxu0
        %v1622 = vadd.f32 0.0, %v1621
        %v1623 = vpop.f32.mrf.mxu0
        %1624 = vmatprep.mubr.bf16.mxu0 0
        %1625 = vmatmul.mubr.bf16.gmra.mxu0 %v1564
        %v1626 = vpop.f32.mrf.mxu0
        %v1627 = vadd.f32 0.0, %v1626
        %v1628 = vpop.f32.mrf.mxu0
        %v1629 = vpop.f32.mrf.mxu0
        %v1630 = vadd.f32 0.0, %v1629
        %v1631 = vpop.f32.mrf.mxu0
        %1632 = vmatprep.mubr.bf16.mxu0 0
        %1633 = vmatmul.mubr.bf16.gmra.mxu0 %v1567
        %v1634 = vpop.f32.mrf.mxu0
        %v1635 = vadd.f32 0.0, %v1634
        %v1636 = vpop.f32.mrf.mxu0
        %v1637 = vpop.f32.mrf.mxu0
        %v1638 = vadd.f32 0.0, %v1637
        %v1639 = vpop.f32.mrf.mxu0
        %1640 = vmatprep.mubr.bf16.mxu0 0
        %1641 = vmatmul.mubr.bf16.gmra.mxu0 %v1570
        %v1642 = vpop.f32.mrf.mxu0
        %v1643 = vadd.f32 0.0, %v1642
        %v1644 = vpop.f32.mrf.mxu0
        %v1645 = vpop.f32.mrf.mxu0
        %v1646 = vadd.f32 0.0, %v1645
        %v1647 = vpop.f32.mrf.mxu0
        %1648 = vdwg.mxu0
        %v1649 = vsel %vm1076, %v1619, -inf
        %1650 = vmax.xlane.f32.xlu0 %v1649
        %v1651 = vpop.xlane.xlu0 %1650
        %v1652 = vsel %vm1076, %v1622, -inf
        %1653 = vmax.xlane.f32.xlu0 %v1652
        %v1654 = vpop.xlane.xlu0 %1653
        %v1655 = vsel %vm1076, %v1627, -inf
        %1656 = vmax.xlane.f32.xlu0 %v1655
        %v1657 = vpop.xlane.xlu0 %1656
        %v1658 = vsel %vm1076, %v1630, -inf
        %1659 = vmax.xlane.f32.xlu0 %v1658
        %v1660 = vpop.xlane.xlu0 %1659
        %v1661 = vsel %vm1076, %v1635, -inf
        %1662 = vmax.xlane.f32.xlu0 %v1661
        %v1663 = vpop.xlane.xlu0 %1662
        %v1664 = vsel %vm1076, %v1638, -inf
        %1665 = vmax.xlane.f32.xlu0 %v1664
        %v1666 = vpop.xlane.xlu0 %1665
        %v1667 = vsel %vm1076, %v1643, -inf
        %1668 = vmax.xlane.f32.xlu0 %v1667
        %v1669 = vpop.xlane.xlu0 %1668
        %v1670 = vsel %vm1076, %v1646, -inf
        %1671 = vmax.xlane.f32.xlu0 %v1670
        %v1672 = vpop.xlane.xlu0 %1671
        %v1673 = vsub.f32 %v1619, %v1651
        %v1674 = vsub.f32 %v1622, %v1654
        %v1675 = vsub.f32 %v1627, %v1657
        %v1676 = vsub.f32 %v1630, %v1660
        %v1677 = vsub.f32 %v1635, %v1663
        %v1678 = vsub.f32 %v1638, %v1666
        %v1679 = vsub.f32 %v1643, %v1669
        %v1680 = vsub.f32 %v1646, %v1672
        %v1681 = vmul.f32 %v1673, 1.442695
        %v1682 = vpow.pop %v1681
        %v1683 = vmul.f32 %v1674, 1.442695
        %v1684 = vpow.pop %v1683
        %v1685 = vmul.f32 %v1675, 1.442695
        %v1686 = vpow.pop %v1685
        %v1687 = vmul.f32 %v1676, 1.442695
        %v1688 = vpow.pop %v1687
        %v1689 = vmul.f32 %v1677, 1.442695
        %v1690 = vpow.pop %v1689
        %v1691 = vmul.f32 %v1678, 1.442695
        %v1692 = vpow.pop %v1691
        %v1693 = vmul.f32 %v1679, 1.442695
        %v1694 = vpow.pop %v1693
        %v1695 = vmul.f32 %v1680, 1.442695
        %v1696 = vpow.pop %v1695
        %v1697 = vsel %vm1076, %v1682, 0.0
        %1698 = vadd.xlane.f32.xlu0 %v1697
        %v1699 = vpop.xlane.xlu0 %1698
        %v1700 = vsel %vm1076, %v1684, 0.0
        %1701 = vadd.xlane.f32.xlu0 %v1700
        %v1702 = vpop.xlane.xlu0 %1701
        %v1703 = vsel %vm1076, %v1686, 0.0
        %1704 = vadd.xlane.f32.xlu0 %v1703
        %v1705 = vpop.xlane.xlu0 %1704
        %v1706 = vsel %vm1076, %v1688, 0.0
        %1707 = vadd.xlane.f32.xlu0 %v1706
        %v1708 = vpop.xlane.xlu0 %1707
        %v1709 = vsel %vm1076, %v1690, 0.0
        %1710 = vadd.xlane.f32.xlu0 %v1709
        %v1711 = vpop.xlane.xlu0 %1710
        %v1712 = vsel %vm1076, %v1692, 0.0
        %1713 = vadd.xlane.f32.xlu0 %v1712
        %v1714 = vpop.xlane.xlu0 %1713
        %v1715 = vsel %vm1076, %v1694, 0.0
        %1716 = vadd.xlane.f32.xlu0 %v1715
        %v1717 = vpop.xlane.xlu0 %1716
        %v1718 = vsel %vm1076, %v1696, 0.0
        %1719 = vadd.xlane.f32.xlu0 %v1718
        %v1720 = vpop.xlane.xlu0 %1719
        %v1721 = vrcp.pop %v1699
        %v1722 = vmul.f32 %v1682, %v1721
        %v1723 = vrcp.pop %v1702
        %v1724 = vmul.f32 %v1684, %v1723
        %v1725 = vrcp.pop %v1705
        %v1726 = vmul.f32 %v1686, %v1725
        %v1727 = vrcp.pop %v1708
        %v1728 = vmul.f32 %v1688, %v1727
        %v1729 = vrcp.pop %v1711
        %v1730 = vmul.f32 %v1690, %v1729
        %v1731 = vrcp.pop %v1714
        %v1732 = vmul.f32 %v1692, %v1731
        %v1733 = vrcp.pop %v1717
        %v1734 = vmul.f32 %v1694, %v1733
        %v1735 = vrcp.pop %v1720
        %v1736 = vmul.f32 %v1696, %v1735
        %v1737 = vpack.c.bf16 %v1724, %v1722
        %v1738 = vpack.c.bf16 %v1728, %v1726
        %v1739 = vpack.c.bf16 %v1732, %v1730
        %v1740 = vpack.c.bf16 %v1736, %v1734
        %1741 = vrot.lane.b32.xlu0 %v976, 64
        %v1742 = vpop.permute.xlu0 %1741
        %1743 = vrot.lane.b32.xlu0 %v979, 64
        %v1744 = vpop.permute.xlu0 %1743
        %1745 = vrot.lane.b32.xlu0 %v982, 64
        %v1746 = vpop.permute.xlu0 %1745
        %1747 = vrot.lane.b32.xlu0 %v985, 64
        %v1748 = vpop.permute.xlu0 %1747
        %v1754 = vsel %vm1076, %v1737, 0
        %v1757 = vsel %vm1076, %v1738, 0
        %v1760 = vsel %vm1076, %v1739, 0
        %v1763 = vsel %vm1076, %v1740, 0
        %1765 = vmatprep.subr.bf16.mxu0 0
        %1766 = vmatpush1.bf16.msra.mxu0 0
        %1767 = vmatprep.subr.bf16.mxu0 0
        %1768 = vmatpush1.bf16.msra.mxu0 0
        %1769 = vmatprep.subr.bf16.mxu0 0
        %1770 = vmatpush1.bf16.msra.mxu0 0
        %1771 = vmatprep.subr.bf16.mxu0 0
        %1772 = vmatpush1.bf16.msra.mxu0 0
        %1773 = vmatprep.subr.bf16.mxu0 0
        %1774 = vmatpush1.bf16.msra.mxu0 %v1748
        %1775 = vmatprep.subr.bf16.mxu0 0
        %1776 = vmatpush1.bf16.msra.mxu0 %v1746
        %1777 = vmatprep.subr.bf16.mxu0 0
        %1778 = vmatpush1.bf16.msra.mxu0 %v1744
        %1779 = vmatprep.subr.bf16.mxu0 0
        %1780 = vmatpush1.bf16.msra.mxu0 %v1742
        %1781 = vmatprep.subr.bf16.mxu0 0
        %1782 = vmatpush2.bf16.msra.mxu0 0
        %1783 = vmatprep.subr.bf16.mxu0 0
        %1784 = vmatpush2.bf16.msra.mxu0 0
        %1785 = vmatprep.subr.bf16.mxu0 0
        %1786 = vmatpush2.bf16.msra.mxu0 0
        %1787 = vmatprep.subr.bf16.mxu0 0
        %1788 = vmatpush2.bf16.msra.mxu0 0
        %1789 = vmatprep.subr.bf16.mxu0 0
        %1790 = vmatpush2.bf16.msra.mxu0 0
        %1791 = vmatprep.subr.bf16.mxu0 0
        %1792 = vmatpush2.bf16.msra.mxu0 0
        %1793 = vmatprep.subr.bf16.mxu0 0
        %1794 = vmatpush2.bf16.msra.mxu0 0
        %1795 = vmatprep.subr.bf16.mxu0 0
        %1796 = vmatpush2.bf16.msra.mxu0 0
        %1797 = vmatprep.mubr.bf16.mxu0 0
        %1798 = vmatmul.mubr.bf16.gmra.mxu0 %v1754
        %v1799 = vpop.f32.mrf.mxu0
        %v1800 = vadd.f32 0.0, %v1799
        %v1801 = vpop.f32.mrf.mxu0
        %v1802 = vpop.f32.mrf.mxu0
        %v1803 = vadd.f32 0.0, %v1802
        %v1804 = vpop.f32.mrf.mxu0
        %1805 = vmatprep.mubr.bf16.mxu0 0
        %1806 = vmatmul.mubr.bf16.gmra.mxu0 %v1757
        %v1807 = vpop.f32.mrf.mxu0
        %v1808 = vadd.f32 0.0, %v1807
        %v1809 = vpop.f32.mrf.mxu0
        %v1810 = vpop.f32.mrf.mxu0
        %v1811 = vadd.f32 0.0, %v1810
        %v1812 = vpop.f32.mrf.mxu0
        %1813 = vmatprep.mubr.bf16.mxu0 0
        %1814 = vmatmul.mubr.bf16.gmra.mxu0 %v1760
        %v1815 = vpop.f32.mrf.mxu0
        %v1816 = vadd.f32 0.0, %v1815
        %v1817 = vpop.f32.mrf.mxu0
        %v1818 = vpop.f32.mrf.mxu0
        %v1819 = vadd.f32 0.0, %v1818
        %v1820 = vpop.f32.mrf.mxu0
        %1821 = vmatprep.mubr.bf16.mxu0 0
        %1822 = vmatmul.mubr.bf16.gmra.mxu0 %v1763
        %v1823 = vpop.f32.mrf.mxu0
        %v1824 = vadd.f32 0.0, %v1823
        %v1825 = vpop.f32.mrf.mxu0
        %v1826 = vpop.f32.mrf.mxu0
        %v1827 = vadd.f32 0.0, %v1826
        %v1828 = vpop.f32.mrf.mxu0
        %1829 = vdwg.mxu0
        %1830 = vrot.lane.b32.xlu0 %v974, 32
        %v1831 = vpop.permute.xlu0 %1830
        %1832 = vrot.lane.b32.xlu0 %v977, 32
        %v1833 = vpop.permute.xlu0 %1832
        %1834 = vrot.lane.b32.xlu0 %v980, 32
        %v1835 = vpop.permute.xlu0 %1834
        %1836 = vrot.lane.b32.xlu0 %v983, 32
        %v1837 = vpop.permute.xlu0 %1836
        %1838 = vrot.lane.b32.xlu0 %v975, 32
        %v1839 = vpop.permute.xlu0 %1838
        %1840 = vrot.lane.b32.xlu0 %v978, 32
        %v1841 = vpop.permute.xlu0 %1840
        %1842 = vrot.lane.b32.xlu0 %v981, 32
        %v1843 = vpop.permute.xlu0 %1842
        %1844 = vrot.lane.b32.xlu0 %v984, 32
        %v1845 = vpop.permute.xlu0 %1844
        %v1847 = vsel %vm986, %v1831, 0
        %v1850 = vsel %vm986, %v1833, 0
        %v1853 = vsel %vm986, %v1835, 0
        %v1856 = vsel %vm986, %v1837, 0
        %v1859 = vsel %vm986, %v1839, 0
        %v1862 = vsel %vm986, %v1841, 0
        %v1865 = vsel %vm986, %v1843, 0
        %v1868 = vsel %vm986, %v1845, 0
        %1870 = vmatprep.subr.bf16.mxu0 0
        %1871 = vmatpush1.bf16.xpose.msra.mxu0 0
        %1872 = vmatprep.subr.bf16.mxu0 0
        %1873 = vmatpush1.bf16.xpose.msra.mxu0 0
        %1874 = vmatprep.subr.bf16.mxu0 0
        %1875 = vmatpush1.bf16.xpose.msra.mxu0 0
        %1876 = vmatprep.subr.bf16.mxu0 0
        %1877 = vmatpush1.bf16.xpose.msra.mxu0 0
        %1878 = vmatprep.subr.bf16.mxu0 0
        %1879 = vmatpush1.bf16.xpose.msra.mxu0 %v1868
        %1880 = vmatprep.subr.bf16.mxu0 0
        %1881 = vmatpush1.bf16.xpose.msra.mxu0 %v1865
        %1882 = vmatprep.subr.bf16.mxu0 0
        %1883 = vmatpush1.bf16.xpose.msra.mxu0 %v1862
        %1884 = vmatprep.subr.bf16.mxu0 0
        %1885 = vmatpush1.bf16.xpose.msra.mxu0 %v1859
        %1886 = vmatprep.subr.bf16.mxu0 0
        %1887 = vmatpush2.bf16.xpose.msra.mxu0 0
        %1888 = vmatprep.subr.bf16.mxu0 0
        %1889 = vmatpush2.bf16.xpose.msra.mxu0 0
        %1890 = vmatprep.subr.bf16.mxu0 0
        %1891 = vmatpush2.bf16.xpose.msra.mxu0 0
        %1892 = vmatprep.subr.bf16.mxu0 0
        %1893 = vmatpush2.bf16.xpose.msra.mxu0 0
        %1894 = vmatprep.subr.bf16.mxu0 0
        %1895 = vmatpush2.bf16.xpose.msra.mxu0 0
        %1896 = vmatprep.subr.bf16.mxu0 0
        %1897 = vmatpush2.bf16.xpose.msra.mxu0 0
        %1898 = vmatprep.subr.bf16.mxu0 0
        %1899 = vmatpush2.bf16.xpose.msra.mxu0 0
        %1900 = vmatprep.subr.bf16.mxu0 0
        %1901 = vmatpush2.bf16.xpose.msra.mxu0 0
        %1902 = vmatprep.mubr.bf16.mxu0 0
        %1903 = vmatmul.mubr.bf16.gmra.mxu0 %v1847
        %v1904 = vpop.f32.mrf.mxu0
        %v1905 = vadd.f32 0.0, %v1904
        %v1906 = vpop.f32.mrf.mxu0
        %v1907 = vpop.f32.mrf.mxu0
        %v1908 = vadd.f32 0.0, %v1907
        %v1909 = vpop.f32.mrf.mxu0
        %1910 = vmatprep.mubr.bf16.mxu0 0
        %1911 = vmatmul.mubr.bf16.gmra.mxu0 %v1850
        %v1912 = vpop.f32.mrf.mxu0
        %v1913 = vadd.f32 0.0, %v1912
        %v1914 = vpop.f32.mrf.mxu0
        %v1915 = vpop.f32.mrf.mxu0
        %v1916 = vadd.f32 0.0, %v1915
        %v1917 = vpop.f32.mrf.mxu0
        %1918 = vmatprep.mubr.bf16.mxu0 0
        %1919 = vmatmul.mubr.bf16.gmra.mxu0 %v1853
        %v1920 = vpop.f32.mrf.mxu0
        %v1921 = vadd.f32 0.0, %v1920
        %v1922 = vpop.f32.mrf.mxu0
        %v1923 = vpop.f32.mrf.mxu0
        %v1924 = vadd.f32 0.0, %v1923
        %v1925 = vpop.f32.mrf.mxu0
        %1926 = vmatprep.mubr.bf16.mxu0 0
        %1927 = vmatmul.mubr.bf16.gmra.mxu0 %v1856
        %v1928 = vpop.f32.mrf.mxu0
        %v1929 = vadd.f32 0.0, %v1928
        %v1930 = vpop.f32.mrf.mxu0
        %v1931 = vpop.f32.mrf.mxu0
        %v1932 = vadd.f32 0.0, %v1931
        %v1933 = vpop.f32.mrf.mxu0
        %1934 = vdwg.mxu0
        %v1935 = vsel %vm1076, %v1905, -inf
        %1936 = vmax.xlane.f32.xlu0 %v1935
        %v1937 = vpop.xlane.xlu0 %1936
        %v1938 = vsel %vm1076, %v1908, -inf
        %1939 = vmax.xlane.f32.xlu0 %v1938
        %v1940 = vpop.xlane.xlu0 %1939
        %v1941 = vsel %vm1076, %v1913, -inf
        %1942 = vmax.xlane.f32.xlu0 %v1941
        %v1943 = vpop.xlane.xlu0 %1942
        %v1944 = vsel %vm1076, %v1916, -inf
        %1945 = vmax.xlane.f32.xlu0 %v1944
        %v1946 = vpop.xlane.xlu0 %1945
        %v1947 = vsel %vm1076, %v1921, -inf
        %1948 = vmax.xlane.f32.xlu0 %v1947
        %v1949 = vpop.xlane.xlu0 %1948
        %v1950 = vsel %vm1076, %v1924, -inf
        %1951 = vmax.xlane.f32.xlu0 %v1950
        %v1952 = vpop.xlane.xlu0 %1951
        %v1953 = vsel %vm1076, %v1929, -inf
        %1954 = vmax.xlane.f32.xlu0 %v1953
        %v1955 = vpop.xlane.xlu0 %1954
        %v1956 = vsel %vm1076, %v1932, -inf
        %1957 = vmax.xlane.f32.xlu0 %v1956
        %v1958 = vpop.xlane.xlu0 %1957
        %v1959 = vsub.f32 %v1905, %v1937
        %v1960 = vsub.f32 %v1908, %v1940
        %v1961 = vsub.f32 %v1913, %v1943
        %v1962 = vsub.f32 %v1916, %v1946
        %v1963 = vsub.f32 %v1921, %v1949
        %v1964 = vsub.f32 %v1924, %v1952
        %v1965 = vsub.f32 %v1929, %v1955
        %v1966 = vsub.f32 %v1932, %v1958
        %v1967 = vmul.f32 %v1959, 1.442695
        %v1968 = vpow.pop %v1967
        %v1969 = vmul.f32 %v1960, 1.442695
        %v1970 = vpow.pop %v1969
        %v1971 = vmul.f32 %v1961, 1.442695
        %v1972 = vpow.pop %v1971
        %v1973 = vmul.f32 %v1962, 1.442695
        %v1974 = vpow.pop %v1973
        %v1975 = vmul.f32 %v1963, 1.442695
        %v1976 = vpow.pop %v1975
        %v1977 = vmul.f32 %v1964, 1.442695
        %v1978 = vpow.pop %v1977
        %v1979 = vmul.f32 %v1965, 1.442695
        %v1980 = vpow.pop %v1979
        %v1981 = vmul.f32 %v1966, 1.442695
        %v1982 = vpow.pop %v1981
        %v1983 = vsel %vm1076, %v1968, 0.0
        %1984 = vadd.xlane.f32.xlu0 %v1983
        %v1985 = vpop.xlane.xlu0 %1984
        %v1986 = vsel %vm1076, %v1970, 0.0
        %1987 = vadd.xlane.f32.xlu0 %v1986
        %v1988 = vpop.xlane.xlu0 %1987
        %v1989 = vsel %vm1076, %v1972, 0.0
        %1990 = vadd.xlane.f32.xlu0 %v1989
        %v1991 = vpop.xlane.xlu0 %1990
        %v1992 = vsel %vm1076, %v1974, 0.0
        %1993 = vadd.xlane.f32.xlu0 %v1992
        %v1994 = vpop.xlane.xlu0 %1993
        %v1995 = vsel %vm1076, %v1976, 0.0
        %1996 = vadd.xlane.f32.xlu0 %v1995
        %v1997 = vpop.xlane.xlu0 %1996
        %v1998 = vsel %vm1076, %v1978, 0.0
        %1999 = vadd.xlane.f32.xlu0 %v1998
        %v2000 = vpop.xlane.xlu0 %1999
        %v2001 = vsel %vm1076, %v1980, 0.0
        %2002 = vadd.xlane.f32.xlu0 %v2001
        %v2003 = vpop.xlane.xlu0 %2002
        %v2004 = vsel %vm1076, %v1982, 0.0
        %2005 = vadd.xlane.f32.xlu0 %v2004
        %v2006 = vpop.xlane.xlu0 %2005
        %v2007 = vrcp.pop %v1985
        %v2008 = vmul.f32 %v1968, %v2007
        %v2009 = vrcp.pop %v1988
        %v2010 = vmul.f32 %v1970, %v2009
        %v2011 = vrcp.pop %v1991
        %v2012 = vmul.f32 %v1972, %v2011
        %v2013 = vrcp.pop %v1994
        %v2014 = vmul.f32 %v1974, %v2013
        %v2015 = vrcp.pop %v1997
        %v2016 = vmul.f32 %v1976, %v2015
        %v2017 = vrcp.pop %v2000
        %v2018 = vmul.f32 %v1978, %v2017
        %v2019 = vrcp.pop %v2003
        %v2020 = vmul.f32 %v1980, %v2019
        %v2021 = vrcp.pop %v2006
        %v2022 = vmul.f32 %v1982, %v2021
        %v2023 = vpack.c.bf16 %v2010, %v2008
        %v2024 = vpack.c.bf16 %v2014, %v2012
        %v2025 = vpack.c.bf16 %v2018, %v2016
        %v2026 = vpack.c.bf16 %v2022, %v2020
        %2027 = vrot.lane.b32.xlu0 %v976, 32
        %v2028 = vpop.permute.xlu0 %2027
        %2029 = vrot.lane.b32.xlu0 %v979, 32
        %v2030 = vpop.permute.xlu0 %2029
        %2031 = vrot.lane.b32.xlu0 %v982, 32
        %v2032 = vpop.permute.xlu0 %2031
        %2033 = vrot.lane.b32.xlu0 %v985, 32
        %v2034 = vpop.permute.xlu0 %2033
        %v2040 = vsel %vm1076, %v2023, 0
        %v2043 = vsel %vm1076, %v2024, 0
        %v2046 = vsel %vm1076, %v2025, 0
        %v2049 = vsel %vm1076, %v2026, 0
        %2051 = vmatprep.subr.bf16.mxu0 0
        %2052 = vmatpush1.bf16.msra.mxu0 0
        %2053 = vmatprep.subr.bf16.mxu0 0
        %2054 = vmatpush1.bf16.msra.mxu0 0
        %2055 = vmatprep.subr.bf16.mxu0 0
        %2056 = vmatpush1.bf16.msra.mxu0 0
        %2057 = vmatprep.subr.bf16.mxu0 0
        %2058 = vmatpush1.bf16.msra.mxu0 0
        %2059 = vmatprep.subr.bf16.mxu0 0
        %2060 = vmatpush1.bf16.msra.mxu0 %v2034
        %2061 = vmatprep.subr.bf16.mxu0 0
        %2062 = vmatpush1.bf16.msra.mxu0 %v2032
        %2063 = vmatprep.subr.bf16.mxu0 0
        %2064 = vmatpush1.bf16.msra.mxu0 %v2030
        %2065 = vmatprep.subr.bf16.mxu0 0
        %2066 = vmatpush1.bf16.msra.mxu0 %v2028
        %2067 = vmatprep.subr.bf16.mxu0 0
        %2068 = vmatpush2.bf16.msra.mxu0 0
        %2069 = vmatprep.subr.bf16.mxu0 0
        %2070 = vmatpush2.bf16.msra.mxu0 0
        %2071 = vmatprep.subr.bf16.mxu0 0
        %2072 = vmatpush2.bf16.msra.mxu0 0
        %2073 = vmatprep.subr.bf16.mxu0 0
        %2074 = vmatpush2.bf16.msra.mxu0 0
        %2075 = vmatprep.subr.bf16.mxu0 0
        %2076 = vmatpush2.bf16.msra.mxu0 0
        %2077 = vmatprep.subr.bf16.mxu0 0
        %2078 = vmatpush2.bf16.msra.mxu0 0
        %2079 = vmatprep.subr.bf16.mxu0 0
        %2080 = vmatpush2.bf16.msra.mxu0 0
        %2081 = vmatprep.subr.bf16.mxu0 0
        %2082 = vmatpush2.bf16.msra.mxu0 0
        %2083 = vmatprep.mubr.bf16.mxu0 0
        %2084 = vmatmul.mubr.bf16.gmra.mxu0 %v2040
        %v2085 = vpop.f32.mrf.mxu0
        %v2086 = vadd.f32 0.0, %v2085
        %v2087 = vpop.f32.mrf.mxu0
        %v2088 = vpop.f32.mrf.mxu0
        %v2089 = vadd.f32 0.0, %v2088
        %v2090 = vpop.f32.mrf.mxu0
        %2091 = vmatprep.mubr.bf16.mxu0 0
        %2092 = vmatmul.mubr.bf16.gmra.mxu0 %v2043
        %v2093 = vpop.f32.mrf.mxu0
        %v2094 = vadd.f32 0.0, %v2093
        %v2095 = vpop.f32.mrf.mxu0
        %v2096 = vpop.f32.mrf.mxu0
        %v2097 = vadd.f32 0.0, %v2096
        %v2098 = vpop.f32.mrf.mxu0
        %2099 = vmatprep.mubr.bf16.mxu0 0
        %2100 = vmatmul.mubr.bf16.gmra.mxu0 %v2046
        %v2101 = vpop.f32.mrf.mxu0
        %v2102 = vadd.f32 0.0, %v2101
        %v2103 = vpop.f32.mrf.mxu0
        %v2104 = vpop.f32.mrf.mxu0
        %v2105 = vadd.f32 0.0, %v2104
        %v2106 = vpop.f32.mrf.mxu0
        %2107 = vmatprep.mubr.bf16.mxu0 0
        %2108 = vmatmul.mubr.bf16.gmra.mxu0 %v2049
        %v2109 = vpop.f32.mrf.mxu0
        %v2110 = vadd.f32 0.0, %v2109
        %v2111 = vpop.f32.mrf.mxu0
        %v2112 = vpop.f32.mrf.mxu0
        %v2113 = vadd.f32 0.0, %v2112
        %v2114 = vpop.f32.mrf.mxu0
        %2115 = vdwg.mxu0
        %2124 = vrot.lane.b32.xlu0 %v1514, 32
        %v2125 = vpop.permute.xlu0 %2124
        %2126 = vrot.lane.b32.xlu0 %v1517, 32
        %v2127 = vpop.permute.xlu0 %2126
        %2128 = vrot.lane.b32.xlu0 %v1522, 32
        %v2129 = vpop.permute.xlu0 %2128
        %2130 = vrot.lane.b32.xlu0 %v1525, 32
        %v2131 = vpop.permute.xlu0 %2130
        %2132 = vrot.lane.b32.xlu0 %v1530, 32
        %v2133 = vpop.permute.xlu0 %2132
        %2134 = vrot.lane.b32.xlu0 %v1533, 32
        %v2135 = vpop.permute.xlu0 %2134
        %2136 = vrot.lane.b32.xlu0 %v1538, 32
        %v2137 = vpop.permute.xlu0 %2136
        %2138 = vrot.lane.b32.xlu0 %v1541, 32
        %v2139 = vpop.permute.xlu0 %2138
        %2156 = vrot.lane.b32.xlu0 %v1800, 64
        %v2157 = vpop.permute.xlu0 %2156
        %2158 = vrot.lane.b32.xlu0 %v1803, 64
        %v2159 = vpop.permute.xlu0 %2158
        %2160 = vrot.lane.b32.xlu0 %v1808, 64
        %v2161 = vpop.permute.xlu0 %2160
        %2162 = vrot.lane.b32.xlu0 %v1811, 64
        %v2163 = vpop.permute.xlu0 %2162
        %2164 = vrot.lane.b32.xlu0 %v1816, 64
        %v2165 = vpop.permute.xlu0 %2164
        %2166 = vrot.lane.b32.xlu0 %v1819, 64
        %v2167 = vpop.permute.xlu0 %2166
        %2168 = vrot.lane.b32.xlu0 %v1824, 64
        %v2169 = vpop.permute.xlu0 %2168
        %2170 = vrot.lane.b32.xlu0 %v1827, 64
        %v2171 = vpop.permute.xlu0 %2170
        %2188 = vrot.lane.b32.xlu0 %v2086, 96
        %v2189 = vpop.permute.xlu0 %2188
        %2190 = vrot.lane.b32.xlu0 %v2089, 96
        %v2191 = vpop.permute.xlu0 %2190
        %2192 = vrot.lane.b32.xlu0 %v2094, 96
        %v2193 = vpop.permute.xlu0 %2192
        %2194 = vrot.lane.b32.xlu0 %v2097, 96
        %v2195 = vpop.permute.xlu0 %2194
        %2196 = vrot.lane.b32.xlu0 %v2102, 96
        %v2197 = vpop.permute.xlu0 %2196
        %2198 = vrot.lane.b32.xlu0 %v2105, 96
        %v2199 = vpop.permute.xlu0 %2198
        %2200 = vrot.lane.b32.xlu0 %v2110, 96
        %v2201 = vpop.permute.xlu0 %2200
        %2202 = vrot.lane.b32.xlu0 %v2113, 96
        %v2203 = vpop.permute.xlu0 %2202
        %v2212 = vsel %vm986, %v1216, %v2125
        %v2213 = vsel %vm986, %v1219, %v2127
        %v2214 = vsel %vm986, %v1224, %v2129
        %v2215 = vsel %vm986, %v1227, %v2131
        %v2216 = vsel %vm986, %v1232, %v2133
        %v2217 = vsel %vm986, %v1235, %v2135
        %v2218 = vsel %vm986, %v1240, %v2137
        %v2219 = vsel %vm986, %v1243, %v2139
        %v2220 = vsel %vm1076, %v2212, %v2157
        %v2221 = vsel %vm1076, %v2213, %v2159
        %v2222 = vsel %vm1076, %v2214, %v2161
        %v2223 = vsel %vm1076, %v2215, %v2163
        %v2224 = vsel %vm1076, %v2216, %v2165
        %v2225 = vsel %vm1076, %v2217, %v2167
        %v2226 = vsel %vm1076, %v2218, %v2169
        %v2227 = vsel %vm1076, %v2219, %v2171
        %vm2228 = vcmask 785408
        %v2229 = vsel %vm2228, %v2220, %v2189
        %v2230 = vsel %vm2228, %v2221, %v2191
        %v2231 = vsel %vm2228, %v2222, %v2193
        %v2232 = vsel %vm2228, %v2223, %v2195
        %v2233 = vsel %vm2228, %v2224, %v2197
        %v2234 = vsel %vm2228, %v2225, %v2199
        %v2235 = vsel %vm2228, %v2226, %v2201
        %v2236 = vsel %vm2228, %v2227, %v2203
        %v2237 = vpack.c.bf16 %v2230, %v2229
        %v2238 = vpack.c.bf16 %v2232, %v2231
        %v2239 = vpack.c.bf16 %v2234, %v2233
        %v2240 = vpack.c.bf16 %v2236, %v2235
        %v2241 = vld [vmem:[#allocation7] sm:$0xf]
        %v2242 = vld [vmem:[#allocation7 + $0x4] sm:$0xf]
        %v2243 = vld [vmem:[#allocation7 + $0x8] sm:$0xf]
        %v2244 = vld [vmem:[#allocation7 + $0xc] sm:$0xf]
        %v2245 = vld [vmem:[#allocation7 + $0x10] sm:$0xf]
        %v2246 = vld [vmem:[#allocation7 + $0x14] sm:$0xf]
        %v2247 = vld [vmem:[#allocation7 + $0x18] sm:$0xf]
        %v2248 = vld [vmem:[#allocation7 + $0x1c] sm:$0xf]
        %v2249 = vld [vmem:[#allocation7 + $0x20] sm:$0xf]
        %v2250 = vld [vmem:[#allocation7 + $0x24] sm:$0xf]
        %v2251 = vld [vmem:[#allocation7 + $0x28] sm:$0xf]
        %v2252 = vld [vmem:[#allocation7 + $0x2c] sm:$0xf]
        %v2253 = vld [vmem:[#allocation7 + $0x30] sm:$0xf]
        %v2254 = vld [vmem:[#allocation7 + $0x34] sm:$0xf]
        %v2255 = vld [vmem:[#allocation7 + $0x38] sm:$0xf]
        %v2256 = vld [vmem:[#allocation7 + $0x3c] sm:$0xf]
        %v2273 = vunpack.c.l.b16 %v2241
        %v2274 = vunpack.c.l.b16 %v2242
        %v2275 = vunpack.c.l.b16 %v2243
        %v2276 = vunpack.c.l.b16 %v2244
        %v2277 = vunpack.c.l.b16 %v2245
        %v2278 = vunpack.c.l.b16 %v2246
        %v2279 = vunpack.c.l.b16 %v2247
        %v2280 = vunpack.c.l.b16 %v2248
        %v2281 = vunpack.c.l.b16 %v2249
        %v2282 = vunpack.c.l.b16 %v2250
        %v2283 = vunpack.c.l.b16 %v2251
        %v2284 = vunpack.c.l.b16 %v2252
        %v2285 = vunpack.c.l.b16 %v2253
        %v2286 = vunpack.c.l.b16 %v2254
        %v2287 = vunpack.c.l.b16 %v2255
        %v2288 = vunpack.c.l.b16 %v2256
        %v2289 = vpack.c.b16 %v2274, %v2273
        %v2290 = vpack.c.b16 %v2276, %v2275
        %v2291 = vpack.c.b16 %v2278, %v2277
        %v2292 = vpack.c.b16 %v2280, %v2279
        %v2293 = vpack.c.b16 %v2282, %v2281
        %v2294 = vpack.c.b16 %v2284, %v2283
        %v2295 = vpack.c.b16 %v2286, %v2285
        %v2296 = vpack.c.b16 %v2288, %v2287
        %2305 = vmatprep.subr.bf16.mxu0 0
        %2306 = vmatpush1.bf16.msra.mxu0 %v2296
        %2307 = vmatprep.subr.bf16.mxu0 0
        %2308 = vmatpush1.bf16.msra.mxu0 %v2295
        %2309 = vmatprep.subr.bf16.mxu0 0
        %2310 = vmatpush1.bf16.msra.mxu0 %v2294
        %2311 = vmatprep.subr.bf16.mxu0 0
        %2312 = vmatpush1.bf16.msra.mxu0 %v2293
        %2313 = vmatprep.subr.bf16.mxu0 0
        %2314 = vmatpush1.bf16.msra.mxu0 %v2292
        %2315 = vmatprep.subr.bf16.mxu0 0
        %2316 = vmatpush1.bf16.msra.mxu0 %v2291
        %2317 = vmatprep.subr.bf16.mxu0 0
        %2318 = vmatpush1.bf16.msra.mxu0 %v2290
        %2319 = vmatprep.subr.bf16.mxu0 0
        %2320 = vmatpush1.bf16.msra.mxu0 %v2289
        %2321 = vmatprep.subr.bf16.mxu0 0
        %2322 = vmatpush2.bf16.msra.mxu0 0
        %2323 = vmatprep.subr.bf16.mxu0 0
        %2324 = vmatpush2.bf16.msra.mxu0 0
        %2325 = vmatprep.subr.bf16.mxu0 0
        %2326 = vmatpush2.bf16.msra.mxu0 0
        %2327 = vmatprep.subr.bf16.mxu0 0
        %2328 = vmatpush2.bf16.msra.mxu0 0
        %2329 = vmatprep.subr.bf16.mxu0 0
        %2330 = vmatpush2.bf16.msra.mxu0 0
        %2331 = vmatprep.subr.bf16.mxu0 0
        %2332 = vmatpush2.bf16.msra.mxu0 0
        %2333 = vmatprep.subr.bf16.mxu0 0
        %2334 = vmatpush2.bf16.msra.mxu0 0
        %2335 = vmatprep.subr.bf16.mxu0 0
        %2336 = vmatpush2.bf16.msra.mxu0 0
        %2337 = vmatprep.mubr.bf16.mxu0 0
        %2338 = vmatmul.mubr.bf16.gmra.mxu0 %v2237
        %v2339 = vpop.f32.mrf.mxu0
        %v2340 = vadd.f32 0.0, %v2339
        %v2341 = vpop.f32.mrf.mxu0
        %v2342 = vpop.f32.mrf.mxu0
        %v2343 = vadd.f32 0.0, %v2342
        %v2344 = vpop.f32.mrf.mxu0
        %2345 = vmatprep.mubr.bf16.mxu0 0
        %2346 = vmatmul.mubr.bf16.gmra.mxu0 %v2238
        %v2347 = vpop.f32.mrf.mxu0
        %v2348 = vadd.f32 0.0, %v2347
        %v2349 = vpop.f32.mrf.mxu0
        %v2350 = vpop.f32.mrf.mxu0
        %v2351 = vadd.f32 0.0, %v2350
        %v2352 = vpop.f32.mrf.mxu0
        %2353 = vmatprep.mubr.bf16.mxu0 0
        %2354 = vmatmul.mubr.bf16.gmra.mxu0 %v2239
        %v2355 = vpop.f32.mrf.mxu0
        %v2356 = vadd.f32 0.0, %v2355
        %v2357 = vpop.f32.mrf.mxu0
        %v2358 = vpop.f32.mrf.mxu0
        %v2359 = vadd.f32 0.0, %v2358
        %v2360 = vpop.f32.mrf.mxu0
        %2361 = vmatprep.mubr.bf16.mxu0 0
        %2362 = vmatmul.mubr.bf16.gmra.mxu0 %v2240
        %v2363 = vpop.f32.mrf.mxu0
        %v2364 = vadd.f32 0.0, %v2363
        %v2365 = vpop.f32.mrf.mxu0
        %v2366 = vpop.f32.mrf.mxu0
        %v2367 = vadd.f32 0.0, %v2366
        %v2368 = vpop.f32.mrf.mxu0
        %2369 = vdwg.mxu0
        %v2370 = vadd.f32 %v545, %v2340
        %v2371 = vadd.f32 %v546, %v2343
        %v2372 = vadd.f32 %v547, %v2348
        %v2373 = vadd.f32 %v548, %v2351
        %v2374 = vadd.f32 %v549, %v2356
        %v2375 = vadd.f32 %v550, %v2359
        %v2376 = vadd.f32 %v551, %v2364
        %v2377 = vadd.f32 %v552, %v2367
        %v2378 = vld [vmem:[%s5] sm:$0x1]
        %v2380 = vlaneseq
        %v2381 = vshrl.u32 %v2380, 7
        %v2382 = vsub.s32 0, %v2381
        %v2383 = vrot.slane %v2378, %v2382
        %v2385 = vadd.f32 %v2370, %v2383
        %v2386 = vadd.f32 %v2371, %v2383
        %v2387 = vadd.f32 %v2372, %v2383
        %v2388 = vadd.f32 %v2373, %v2383
        %v2389 = vadd.f32 %v2374, %v2383
        %v2390 = vadd.f32 %v2375, %v2383
        %v2391 = vadd.f32 %v2376, %v2383
        %v2392 = vadd.f32 %v2377, %v2383
        %v2393 = vld [vmem:[%s6] sm:$0x1]
        %v2394 = vld [vmem:[%s7] sm:$0x1]
        %2395 = vadd.xlane.f32.xlu0 %v2385
        %v2396 = vpop.xlane.xlu0 %2395
        %2397 = vadd.xlane.f32.xlu0 %v2386
        %v2398 = vpop.xlane.xlu0 %2397
        %2399 = vadd.xlane.f32.xlu0 %v2387
        %v2400 = vpop.xlane.xlu0 %2399
        %2401 = vadd.xlane.f32.xlu0 %v2388
        %v2402 = vpop.xlane.xlu0 %2401
        %2403 = vadd.xlane.f32.xlu0 %v2389
        %v2404 = vpop.xlane.xlu0 %2403
        %2405 = vadd.xlane.f32.xlu0 %v2390
        %v2406 = vpop.xlane.xlu0 %2405
        %2407 = vadd.xlane.f32.xlu0 %v2391
        %v2408 = vpop.xlane.xlu0 %2407
        %2409 = vadd.xlane.f32.xlu0 %v2392
        %v2410 = vpop.xlane.xlu0 %2409
        %v2411 = vmul.f32 %v2396, %v571
        %v2412 = vmul.f32 %v2398, %v571
        %v2413 = vmul.f32 %v2400, %v571
        %v2414 = vmul.f32 %v2402, %v571
        %v2415 = vmul.f32 %v2404, %v571
        %v2416 = vmul.f32 %v2406, %v571
        %v2417 = vmul.f32 %v2408, %v571
        %v2418 = vmul.f32 %v2410, %v571
        %v2419 = vsub.f32 %v2385, %v2411
        %v2420 = vsub.f32 %v2386, %v2412
        %v2421 = vsub.f32 %v2387, %v2413
        %v2422 = vsub.f32 %v2388, %v2414
        %v2423 = vsub.f32 %v2389, %v2415
        %v2424 = vsub.f32 %v2390, %v2416
        %v2425 = vsub.f32 %v2391, %v2417
        %v2426 = vsub.f32 %v2392, %v2418
        %v2427 = vmul.f32 %v2419, %v2419
        %v2428 = vmul.f32 %v2420, %v2420
        %v2429 = vmul.f32 %v2421, %v2421
        %v2430 = vmul.f32 %v2422, %v2422
        %v2431 = vmul.f32 %v2423, %v2423
        %v2432 = vmul.f32 %v2424, %v2424
        %v2433 = vmul.f32 %v2425, %v2425
        %v2434 = vmul.f32 %v2426, %v2426
        %2435 = vadd.xlane.f32.xlu0 %v2427
        %v2436 = vpop.xlane.xlu0 %2435
        %2437 = vadd.xlane.f32.xlu0 %v2428
        %v2438 = vpop.xlane.xlu0 %2437
        %2439 = vadd.xlane.f32.xlu0 %v2429
        %v2440 = vpop.xlane.xlu0 %2439
        %2441 = vadd.xlane.f32.xlu0 %v2430
        %v2442 = vpop.xlane.xlu0 %2441
        %2443 = vadd.xlane.f32.xlu0 %v2431
        %v2444 = vpop.xlane.xlu0 %2443
        %2445 = vadd.xlane.f32.xlu0 %v2432
        %v2446 = vpop.xlane.xlu0 %2445
        %2447 = vadd.xlane.f32.xlu0 %v2433
        %v2448 = vpop.xlane.xlu0 %2447
        %2449 = vadd.xlane.f32.xlu0 %v2434
        %v2450 = vpop.xlane.xlu0 %2449
        %v2451 = vmul.f32 %v2436, %v571
        %v2452 = vmul.f32 %v2438, %v571
        %v2453 = vmul.f32 %v2440, %v571
        %v2454 = vmul.f32 %v2442, %v571
        %v2455 = vmul.f32 %v2444, %v571
        %v2456 = vmul.f32 %v2446, %v571
        %v2457 = vmul.f32 %v2448, %v571
        %v2458 = vmul.f32 %v2450, %v571
        %v2459 = vadd.f32 %v2451, 1e-05
        %v2460 = vadd.f32 %v2452, 1e-05
        %v2461 = vadd.f32 %v2453, 1e-05
        %v2462 = vadd.f32 %v2454, 1e-05
        %v2463 = vadd.f32 %v2455, 1e-05
        %v2464 = vadd.f32 %v2456, 1e-05
        %v2465 = vadd.f32 %v2457, 1e-05
        %v2466 = vadd.f32 %v2458, 1e-05
        %v2467 = vrsqrt.pop %v2459
        %v2468 = vrsqrt.pop %v2460
        %v2469 = vrsqrt.pop %v2461
        %v2470 = vrsqrt.pop %v2462
        %v2471 = vrsqrt.pop %v2463
        %v2472 = vrsqrt.pop %v2464
        %v2473 = vrsqrt.pop %v2465
        %v2474 = vrsqrt.pop %v2466
        %v2475 = vmul.f32 %v2419, %v2467
        %v2476 = vmul.f32 %v2420, %v2468
        %v2477 = vmul.f32 %v2421, %v2469
        %v2478 = vmul.f32 %v2422, %v2470
        %v2479 = vmul.f32 %v2423, %v2471
        %v2480 = vmul.f32 %v2424, %v2472
        %v2481 = vmul.f32 %v2425, %v2473
        %v2482 = vmul.f32 %v2426, %v2474
        %v2484 = vlaneseq
        %v2485 = vshrl.u32 %v2484, 7
        %v2486 = vsub.s32 0, %v2485
        %v2487 = vrot.slane %v2393, %v2486
        %v2489 = vmul.f32 %v2475, %v2487
        %v2490 = vmul.f32 %v2476, %v2487
        %v2491 = vmul.f32 %v2477, %v2487
        %v2492 = vmul.f32 %v2478, %v2487
        %v2493 = vmul.f32 %v2479, %v2487
        %v2494 = vmul.f32 %v2480, %v2487
        %v2495 = vmul.f32 %v2481, %v2487
        %v2496 = vmul.f32 %v2482, %v2487
        %v2498 = vlaneseq
        %v2499 = vshrl.u32 %v2498, 7
        %v2500 = vsub.s32 0, %v2499
        %v2501 = vrot.slane %v2394, %v2500
        %v2503 = vadd.f32 %v2489, %v2501
        %v2504 = vadd.f32 %v2490, %v2501
        %v2505 = vadd.f32 %v2491, %v2501
        %v2506 = vadd.f32 %v2492, %v2501
        %v2507 = vadd.f32 %v2493, %v2501
        %v2508 = vadd.f32 %v2494, %v2501
        %v2509 = vadd.f32 %v2495, %v2501
        %v2510 = vadd.f32 %v2496, %v2501
        %v2511 = vpack.c.bf16 %v2504, %v2503
        %v2512 = vpack.c.bf16 %v2506, %v2505
        %v2513 = vpack.c.bf16 %v2508, %v2507
        %v2514 = vpack.c.bf16 %v2510, %v2509
        %v2515 = vld [vmem:[%s11] sm:$0xff]
        %v2516 = vld [vmem:[%s11 + $0x8] sm:$0xff]
        %v2517 = vld [vmem:[%s11 + $0x10] sm:$0xff]
        %v2518 = vld [vmem:[%s11 + $0x18] sm:$0xff]
        %v2519 = vld [vmem:[%s11 + $0x20] sm:$0xff]
        %v2520 = vld [vmem:[%s11 + $0x28] sm:$0xff]
        %v2521 = vld [vmem:[%s11 + $0x30] sm:$0xff]
        %v2522 = vld [vmem:[%s11 + $0x38] sm:$0xff]
        %s2523 = scalar_lea.vmem %s11, 64
        %v2524 = vld [vmem:[%s2523] sm:$0xff]
        %v2525 = vld [vmem:[%s2523 + $0x8] sm:$0xff]
        %v2526 = vld [vmem:[%s2523 + $0x10] sm:$0xff]
        %v2527 = vld [vmem:[%s2523 + $0x18] sm:$0xff]
        %v2528 = vld [vmem:[%s2523 + $0x20] sm:$0xff]
        %v2529 = vld [vmem:[%s2523 + $0x28] sm:$0xff]
        %v2530 = vld [vmem:[%s2523 + $0x30] sm:$0xff]
        %v2531 = vld [vmem:[%s2523 + $0x38] sm:$0xff]
        %s2532 = scalar_lea.vmem %s11, 128
        %v2533 = vld [vmem:[%s2532] sm:$0xff]
        %v2534 = vld [vmem:[%s2532 + $0x8] sm:$0xff]
        %v2535 = vld [vmem:[%s2532 + $0x10] sm:$0xff]
        %v2536 = vld [vmem:[%s2532 + $0x18] sm:$0xff]
        %v2537 = vld [vmem:[%s2532 + $0x20] sm:$0xff]
        %v2538 = vld [vmem:[%s2532 + $0x28] sm:$0xff]
        %v2539 = vld [vmem:[%s2532 + $0x30] sm:$0xff]
        %v2540 = vld [vmem:[%s2532 + $0x38] sm:$0xff]
        %s2541 = scalar_lea.vmem %s11, 192
        %v2542 = vld [vmem:[%s2541] sm:$0xff]
        %v2543 = vld [vmem:[%s2541 + $0x8] sm:$0xff]
        %v2544 = vld [vmem:[%s2541 + $0x10] sm:$0xff]
        %v2545 = vld [vmem:[%s2541 + $0x18] sm:$0xff]
        %v2546 = vld [vmem:[%s2541 + $0x20] sm:$0xff]
        %v2547 = vld [vmem:[%s2541 + $0x28] sm:$0xff]
        %v2548 = vld [vmem:[%s2541 + $0x30] sm:$0xff]
        %v2549 = vld [vmem:[%s2541 + $0x38] sm:$0xff]
        %v2550 = vld [vmem:[%s8] sm:$0xf]
        %v2551 = vld [vmem:[%s8 + $0x4] sm:$0xf]
        %v2552 = vld [vmem:[%s8 + $0x8] sm:$0xf]
        %v2553 = vld [vmem:[%s8 + $0xc] sm:$0xf]
        %v2554 = vld [vmem:[%s8 + $0x10] sm:$0xf]
        %v2555 = vld [vmem:[%s8 + $0x14] sm:$0xf]
        %v2556 = vld [vmem:[%s8 + $0x18] sm:$0xf]
        %v2557 = vld [vmem:[%s8 + $0x1c] sm:$0xf]
        %v2558 = vld [vmem:[%s8 + $0x20] sm:$0xf]
        %v2559 = vld [vmem:[%s8 + $0x24] sm:$0xf]
        %v2560 = vld [vmem:[%s8 + $0x28] sm:$0xf]
        %v2561 = vld [vmem:[%s8 + $0x2c] sm:$0xf]
        %v2562 = vld [vmem:[%s8 + $0x30] sm:$0xf]
        %v2563 = vld [vmem:[%s8 + $0x34] sm:$0xf]
        %v2564 = vld [vmem:[%s8 + $0x38] sm:$0xf]
        %v2565 = vld [vmem:[%s8 + $0x3c] sm:$0xf]
        %v2566 = vld [vmem:[%s9] sm:$0x1]
        %v2568 = vlaneseq
        %v2569 = vshrl.u32 %v2568, 7
        %v2570 = vsub.s32 0, %v2569
        %v2571 = vrot.slane %v2566, %v2570
        %v2589 = vunpack.c.l.b16 %v2550
        %v2590 = vunpack.c.l.b16 %v2551
        %v2591 = vunpack.c.l.b16 %v2552
        %v2592 = vunpack.c.l.b16 %v2553
        %v2593 = vunpack.c.l.b16 %v2554
        %v2594 = vunpack.c.l.b16 %v2555
        %v2595 = vunpack.c.l.b16 %v2556
        %v2596 = vunpack.c.l.b16 %v2557
        %v2597 = vunpack.c.l.b16 %v2558
        %v2598 = vunpack.c.l.b16 %v2559
        %v2599 = vunpack.c.l.b16 %v2560
        %v2600 = vunpack.c.l.b16 %v2561
        %v2601 = vunpack.c.l.b16 %v2562
        %v2602 = vunpack.c.l.b16 %v2563
        %v2603 = vunpack.c.l.b16 %v2564
        %v2604 = vunpack.c.l.b16 %v2565
        %v2605 = vpack.c.b16 %v2590, %v2589
        %v2606 = vpack.c.b16 %v2592, %v2591
        %v2607 = vpack.c.b16 %v2594, %v2593
        %v2608 = vpack.c.b16 %v2596, %v2595
        %v2609 = vpack.c.b16 %v2598, %v2597
        %v2610 = vpack.c.b16 %v2600, %v2599
        %v2611 = vpack.c.b16 %v2602, %v2601
        %v2612 = vpack.c.b16 %v2604, %v2603
        %2621 = vmatprep.subr.bf16.mxu0 0
        %2622 = vmatpush1.bf16.msra.mxu0 %v2612
        %2623 = vmatprep.subr.bf16.mxu0 0
        %2624 = vmatpush1.bf16.msra.mxu0 %v2611
        %2625 = vmatprep.subr.bf16.mxu0 0
        %2626 = vmatpush1.bf16.msra.mxu0 %v2610
        %2627 = vmatprep.subr.bf16.mxu0 0
        %2628 = vmatpush1.bf16.msra.mxu0 %v2609
        %2629 = vmatprep.subr.bf16.mxu0 0
        %2630 = vmatpush1.bf16.msra.mxu0 %v2608
        %2631 = vmatprep.subr.bf16.mxu0 0
        %2632 = vmatpush1.bf16.msra.mxu0 %v2607
        %2633 = vmatprep.subr.bf16.mxu0 0
        %2634 = vmatpush1.bf16.msra.mxu0 %v2606
        %2635 = vmatprep.subr.bf16.mxu0 0
        %2636 = vmatpush1.bf16.msra.mxu0 %v2605
        %2637 = vmatprep.subr.bf16.mxu0 0
        %2638 = vmatpush2.bf16.msra.mxu0 0
        %2639 = vmatprep.subr.bf16.mxu0 0
        %2640 = vmatpush2.bf16.msra.mxu0 0
        %2641 = vmatprep.subr.bf16.mxu0 0
        %2642 = vmatpush2.bf16.msra.mxu0 0
        %2643 = vmatprep.subr.bf16.mxu0 0
        %2644 = vmatpush2.bf16.msra.mxu0 0
        %2645 = vmatprep.subr.bf16.mxu0 0
        %2646 = vmatpush2.bf16.msra.mxu0 0
        %2647 = vmatprep.subr.bf16.mxu0 0
        %2648 = vmatpush2.bf16.msra.mxu0 0
        %2649 = vmatprep.subr.bf16.mxu0 0
        %2650 = vmatpush2.bf16.msra.mxu0 0
        %2651 = vmatprep.subr.bf16.mxu0 0
        %2652 = vmatpush2.bf16.msra.mxu0 0
        %2653 = vmatprep.mubr.bf16.mxu0 0
        %2654 = vmatmul.mubr.bf16.gmra.mxu0 %v2511
        %v2655 = vpop.f32.mrf.mxu0
        %v2656 = vadd.f32 %v2571, %v2655
        %v2657 = vpop.f32.mrf.mxu0
        %v2658 = vpop.f32.mrf.mxu0
        %v2659 = vadd.f32 %v2571, %v2658
        %v2660 = vpop.f32.mrf.mxu0
        %2661 = vmatprep.mubr.bf16.mxu0 0
        %2662 = vmatmul.mubr.bf16.gmra.mxu0 %v2512
        %v2663 = vpop.f32.mrf.mxu0
        %v2664 = vadd.f32 %v2571, %v2663
        %v2665 = vpop.f32.mrf.mxu0
        %v2666 = vpop.f32.mrf.mxu0
        %v2667 = vadd.f32 %v2571, %v2666
        %v2668 = vpop.f32.mrf.mxu0
        %2669 = vmatprep.mubr.bf16.mxu0 0
        %2670 = vmatmul.mubr.bf16.gmra.mxu0 %v2513
        %v2671 = vpop.f32.mrf.mxu0
        %v2672 = vadd.f32 %v2571, %v2671
        %v2673 = vpop.f32.mrf.mxu0
        %v2674 = vpop.f32.mrf.mxu0
        %v2675 = vadd.f32 %v2571, %v2674
        %v2676 = vpop.f32.mrf.mxu0
        %2677 = vmatprep.mubr.bf16.mxu0 0
        %2678 = vmatmul.mubr.bf16.gmra.mxu0 %v2514
        %v2679 = vpop.f32.mrf.mxu0
        %v2680 = vadd.f32 %v2571, %v2679
        %v2681 = vpop.f32.mrf.mxu0
        %v2682 = vpop.f32.mrf.mxu0
        %v2683 = vadd.f32 %v2571, %v2682
        %v2684 = vpop.f32.mrf.mxu0
        %2685 = vdwg.mxu0
        %v2686 = vrot.slane %v2656, 7
        %v2687 = vrot.slane %v2659, 7
        %v2688 = vrot.slane %v2664, 7
        %v2689 = vrot.slane %v2667, 7
        %v2690 = vrot.slane %v2672, 7
        %v2691 = vrot.slane %v2675, 7
        %v2692 = vrot.slane %v2680, 7
        %v2693 = vrot.slane %v2683, 7
        %v2694 = vlaneseq
        %v2695 = vshrl.u32 %v2694, 7
        %vm2696 = vcmp.lt.s32.totalorder %v2695, 1
        %v2697 = vsel %vm2696, %v2692, %v2693
        %v2698 = vsel %vm2696, %v2691, %v2692
        %v2699 = vsel %vm2696, %v2690, %v2691
        %v2700 = vsel %vm2696, %v2689, %v2690
        %v2701 = vsel %vm2696, %v2688, %v2689
        %v2702 = vsel %vm2696, %v2687, %v2688
        %v2703 = vsel %vm2696, %v2686, %v2687
        %v2704 = vsel %vm2696, %v2693, %v2686
        %2706 = vset.pattern.permute.xlu0 0
        %2707 = vperm.xlu0 %2706, %v2515
        %v2708 = vpop.permute.xlu0 %2707
        %2711 = vset.pattern.permute.xlu0 0
        %2712 = vperm.xlu0 %2711, %v2516
        %v2713 = vpop.permute.xlu0 %2712
        %2716 = vset.pattern.permute.xlu0 0
        %2717 = vperm.xlu0 %2716, %v2517
        %v2718 = vpop.permute.xlu0 %2717
        %2721 = vset.pattern.permute.xlu0 0
        %2722 = vperm.xlu0 %2721, %v2518
        %v2723 = vpop.permute.xlu0 %2722
        %2726 = vset.pattern.permute.xlu0 0
        %2727 = vperm.xlu0 %2726, %v2519
        %v2728 = vpop.permute.xlu0 %2727
        %2731 = vset.pattern.permute.xlu0 0
        %2732 = vperm.xlu0 %2731, %v2520
        %v2733 = vpop.permute.xlu0 %2732
        %2736 = vset.pattern.permute.xlu0 0
        %2737 = vperm.xlu0 %2736, %v2521
        %v2738 = vpop.permute.xlu0 %2737
        %2741 = vset.pattern.permute.xlu0 0
        %2742 = vperm.xlu0 %2741, %v2522
        %v2743 = vpop.permute.xlu0 %2742
        %v2745 = vmul.f32 %v2704, %v2708
        %v2746 = vmul.f32 %v2703, %v2713
        %v2747 = vmul.f32 %v2702, %v2718
        %v2748 = vmul.f32 %v2701, %v2723
        %v2749 = vmul.f32 %v2700, %v2728
        %v2750 = vmul.f32 %v2699, %v2733
        %v2751 = vmul.f32 %v2698, %v2738
        %v2752 = vmul.f32 %v2697, %v2743
        %v2753 = vrot.slane %v2656, 1
        %v2754 = vrot.slane %v2659, 1
        %v2755 = vrot.slane %v2664, 1
        %v2756 = vrot.slane %v2667, 1
        %v2757 = vrot.slane %v2672, 1
        %v2758 = vrot.slane %v2675, 1
        %v2759 = vrot.slane %v2680, 1
        %v2760 = vrot.slane %v2683, 1
        %vm2761 = vcmp.lt.s32.totalorder %v2695, 7
        %v2762 = vsel %vm2761, %v2759, %v2760
        %v2763 = vsel %vm2761, %v2758, %v2759
        %v2764 = vsel %vm2761, %v2757, %v2758
        %v2765 = vsel %vm2761, %v2756, %v2757
        %v2766 = vsel %vm2761, %v2755, %v2756
        %v2767 = vsel %vm2761, %v2754, %v2755
        %v2768 = vsel %vm2761, %v2753, %v2754
        %v2769 = vsel %vm2761, %v2760, %v2753
        %2771 = vset.pattern.permute.xlu0 0
        %2772 = vperm.xlu0 %2771, %v2524
        %v2773 = vpop.permute.xlu0 %2772
        %2776 = vset.pattern.permute.xlu0 0
        %2777 = vperm.xlu0 %2776, %v2525
        %v2778 = vpop.permute.xlu0 %2777
        %2781 = vset.pattern.permute.xlu0 0
        %2782 = vperm.xlu0 %2781, %v2526
        %v2783 = vpop.permute.xlu0 %2782
        %2786 = vset.pattern.permute.xlu0 0
        %2787 = vperm.xlu0 %2786, %v2527
        %v2788 = vpop.permute.xlu0 %2787
        %2791 = vset.pattern.permute.xlu0 0
        %2792 = vperm.xlu0 %2791, %v2528
        %v2793 = vpop.permute.xlu0 %2792
        %2796 = vset.pattern.permute.xlu0 0
        %2797 = vperm.xlu0 %2796, %v2529
        %v2798 = vpop.permute.xlu0 %2797
        %2801 = vset.pattern.permute.xlu0 0
        %2802 = vperm.xlu0 %2801, %v2530
        %v2803 = vpop.permute.xlu0 %2802
        %2806 = vset.pattern.permute.xlu0 0
        %2807 = vperm.xlu0 %2806, %v2531
        %v2808 = vpop.permute.xlu0 %2807
        %v2810 = vmul.f32 %v2768, %v2773
        %v2811 = vmul.f32 %v2767, %v2778
        %v2812 = vmul.f32 %v2766, %v2783
        %v2813 = vmul.f32 %v2765, %v2788
        %v2814 = vmul.f32 %v2764, %v2793
        %v2815 = vmul.f32 %v2763, %v2798
        %v2816 = vmul.f32 %v2762, %v2803
        %v2817 = vmul.f32 %v2769, %v2808
        %v2818 = vld [vmem:[#allocation8] sm:$0x1]
        %s2819 = scalar_lea.vmem [#allocation8], 1
        %v2820 = vld [vmem:[%s2819] sm:$0x1]
        %s2821 = scalar_lea.vmem [#allocation8], 2
        %v2822 = vld [vmem:[%s2821] sm:$0x1]
        %s2823 = scalar_lea.vmem [#allocation8], 3
        %v2824 = vld [vmem:[%s2823] sm:$0x1]
        %s2825 = scalar_lea.vmem [#allocation8], 4
        %v2826 = vld [vmem:[%s2825] sm:$0x1]
        %s2827 = scalar_lea.vmem [#allocation8], 5
        %v2828 = vld [vmem:[%s2827] sm:$0x1]
        %s2829 = scalar_lea.vmem [#allocation8], 6
        %v2830 = vld [vmem:[%s2829] sm:$0x1]
        %s2831 = scalar_lea.vmem [#allocation8], 7
        %v2832 = vld [vmem:[%s2831] sm:$0x1]
        %s2833 = scalar_lea.vmem [#allocation8], 8
        %v2834 = vld [vmem:[%s2833] sm:$0x1]
        %v2836 = vlaneseq
        %v2837 = vshrl.u32 %v2836, 7
        %v2838 = vsub.s32 0, %v2837
        %v2839 = vrot.slane %v2818, %v2838
        %v2841 = vmul.f32 %v2752, %v2839
        %v2842 = vmul.f32 %v2745, %v2839
        %v2843 = vmul.f32 %v2746, %v2839
        %v2844 = vmul.f32 %v2747, %v2839
        %v2845 = vmul.f32 %v2748, %v2839
        %v2846 = vmul.f32 %v2749, %v2839
        %v2847 = vmul.f32 %v2750, %v2839
        %v2848 = vmul.f32 %v2751, %v2839
        %v2850 = vlaneseq
        %v2851 = vshrl.u32 %v2850, 7
        %v2852 = vsub.s32 0, %v2851
        %v2853 = vrot.slane %v2820, %v2852
        %v2855 = vmul.f32 %v2683, %v2853
        %v2856 = vmul.f32 %v2656, %v2853
        %v2857 = vmul.f32 %v2659, %v2853
        %v2858 = vmul.f32 %v2664, %v2853
        %v2859 = vmul.f32 %v2667, %v2853
        %v2860 = vmul.f32 %v2672, %v2853
        %v2861 = vmul.f32 %v2675, %v2853
        %v2862 = vmul.f32 %v2680, %v2853
        %v2863 = vadd.f32 %v2841, %v2855
        %v2864 = vadd.f32 %v2842, %v2856
        %v2865 = vadd.f32 %v2843, %v2857
        %v2866 = vadd.f32 %v2844, %v2858
        %v2867 = vadd.f32 %v2845, %v2859
        %v2868 = vadd.f32 %v2846, %v2860
        %v2869 = vadd.f32 %v2847, %v2861
        %v2870 = vadd.f32 %v2848, %v2862
        %v2872 = vlaneseq
        %v2873 = vshrl.u32 %v2872, 7
        %v2874 = vsub.s32 0, %v2873
        %v2875 = vrot.slane %v2822, %v2874
        %v2877 = vmul.f32 %v2817, %v2875
        %v2878 = vmul.f32 %v2810, %v2875
        %v2879 = vmul.f32 %v2811, %v2875
        %v2880 = vmul.f32 %v2812, %v2875
        %v2881 = vmul.f32 %v2813, %v2875
        %v2882 = vmul.f32 %v2814, %v2875
        %v2883 = vmul.f32 %v2815, %v2875
        %v2884 = vmul.f32 %v2816, %v2875
        %v2885 = vadd.f32 %v2863, %v2877
        %v2886 = vadd.f32 %v2864, %v2878
        %v2887 = vadd.f32 %v2865, %v2879
        %v2888 = vadd.f32 %v2866, %v2880
        %v2889 = vadd.f32 %v2867, %v2881
        %v2890 = vadd.f32 %v2868, %v2882
        %v2891 = vadd.f32 %v2869, %v2883
        %v2892 = vadd.f32 %v2870, %v2884
        %2894 = vset.pattern.permute.xlu0 0
        %2895 = vperm.xlu0 %2894, %v2533
        %v2896 = vpop.permute.xlu0 %2895
        %2899 = vset.pattern.permute.xlu0 0
        %2900 = vperm.xlu0 %2899, %v2534
        %v2901 = vpop.permute.xlu0 %2900
        %2904 = vset.pattern.permute.xlu0 0
        %2905 = vperm.xlu0 %2904, %v2535
        %v2906 = vpop.permute.xlu0 %2905
        %2909 = vset.pattern.permute.xlu0 0
        %2910 = vperm.xlu0 %2909, %v2536
        %v2911 = vpop.permute.xlu0 %2910
        %2914 = vset.pattern.permute.xlu0 0
        %2915 = vperm.xlu0 %2914, %v2537
        %v2916 = vpop.permute.xlu0 %2915
        %2919 = vset.pattern.permute.xlu0 0
        %2920 = vperm.xlu0 %2919, %v2538
        %v2921 = vpop.permute.xlu0 %2920
        %2924 = vset.pattern.permute.xlu0 0
        %2925 = vperm.xlu0 %2924, %v2539
        %v2926 = vpop.permute.xlu0 %2925
        %2929 = vset.pattern.permute.xlu0 0
        %2930 = vperm.xlu0 %2929, %v2540
        %v2931 = vpop.permute.xlu0 %2930
        %v2933 = vmul.f32 %v2885, %v2896
        %v2934 = vmul.f32 %v2886, %v2901
        %v2935 = vmul.f32 %v2887, %v2906
        %v2936 = vmul.f32 %v2888, %v2911
        %v2937 = vmul.f32 %v2889, %v2916
        %v2938 = vmul.f32 %v2890, %v2921
        %v2939 = vmul.f32 %v2891, %v2926
        %v2940 = vmul.f32 %v2892, %v2931
        %v2942 = vlaneseq
        %v2943 = vshrl.u32 %v2942, 7
        %v2944 = vsub.s32 0, %v2943
        %v2945 = vrot.slane %v2824, %v2944
        %v2947 = vmul.f32 %v2745, %v2945
        %v2948 = vmul.f32 %v2746, %v2945
        %v2949 = vmul.f32 %v2747, %v2945
        %v2950 = vmul.f32 %v2748, %v2945
        %v2951 = vmul.f32 %v2749, %v2945
        %v2952 = vmul.f32 %v2750, %v2945
        %v2953 = vmul.f32 %v2751, %v2945
        %v2954 = vmul.f32 %v2752, %v2945
        %v2956 = vlaneseq
        %v2957 = vshrl.u32 %v2956, 7
        %v2958 = vsub.s32 0, %v2957
        %v2959 = vrot.slane %v2826, %v2958
        %v2961 = vmul.f32 %v2656, %v2959
        %v2962 = vmul.f32 %v2659, %v2959
        %v2963 = vmul.f32 %v2664, %v2959
        %v2964 = vmul.f32 %v2667, %v2959
        %v2965 = vmul.f32 %v2672, %v2959
        %v2966 = vmul.f32 %v2675, %v2959
        %v2967 = vmul.f32 %v2680, %v2959
        %v2968 = vmul.f32 %v2683, %v2959
        %v2969 = vadd.f32 %v2947, %v2961
        %v2970 = vadd.f32 %v2948, %v2962
        %v2971 = vadd.f32 %v2949, %v2963
        %v2972 = vadd.f32 %v2950, %v2964
        %v2973 = vadd.f32 %v2951, %v2965
        %v2974 = vadd.f32 %v2952, %v2966
        %v2975 = vadd.f32 %v2953, %v2967
        %v2976 = vadd.f32 %v2954, %v2968
        %v2978 = vlaneseq
        %v2979 = vshrl.u32 %v2978, 7
        %v2980 = vsub.s32 0, %v2979
        %v2981 = vrot.slane %v2828, %v2980
        %v2983 = vmul.f32 %v2810, %v2981
        %v2984 = vmul.f32 %v2811, %v2981
        %v2985 = vmul.f32 %v2812, %v2981
        %v2986 = vmul.f32 %v2813, %v2981
        %v2987 = vmul.f32 %v2814, %v2981
        %v2988 = vmul.f32 %v2815, %v2981
        %v2989 = vmul.f32 %v2816, %v2981
        %v2990 = vmul.f32 %v2817, %v2981
        %v2991 = vadd.f32 %v2969, %v2983
        %v2992 = vadd.f32 %v2970, %v2984
        %v2993 = vadd.f32 %v2971, %v2985
        %v2994 = vadd.f32 %v2972, %v2986
        %v2995 = vadd.f32 %v2973, %v2987
        %v2996 = vadd.f32 %v2974, %v2988
        %v2997 = vadd.f32 %v2975, %v2989
        %v2998 = vadd.f32 %v2976, %v2990
        %v3000 = vlaneseq
        %v3001 = vshrl.u32 %v3000, 7
        %v3002 = vsub.s32 0, %v3001
        %v3003 = vrot.slane %v2830, %v3002
        %v3005 = vmul.f32 %v2746, %v3003
        %v3006 = vmul.f32 %v2747, %v3003
        %v3007 = vmul.f32 %v2748, %v3003
        %v3008 = vmul.f32 %v2749, %v3003
        %v3009 = vmul.f32 %v2750, %v3003
        %v3010 = vmul.f32 %v2751, %v3003
        %v3011 = vmul.f32 %v2752, %v3003
        %v3012 = vmul.f32 %v2745, %v3003
        %v3014 = vlaneseq
        %v3015 = vshrl.u32 %v3014, 7
        %v3016 = vsub.s32 0, %v3015
        %v3017 = vrot.slane %v2832, %v3016
        %v3019 = vmul.f32 %v2659, %v3017
        %v3020 = vmul.f32 %v2664, %v3017
        %v3021 = vmul.f32 %v2667, %v3017
        %v3022 = vmul.f32 %v2672, %v3017
        %v3023 = vmul.f32 %v2675, %v3017
        %v3024 = vmul.f32 %v2680, %v3017
        %v3025 = vmul.f32 %v2683, %v3017
        %v3026 = vmul.f32 %v2656, %v3017
        %v3027 = vadd.f32 %v3005, %v3019
        %v3028 = vadd.f32 %v3006, %v3020
        %v3029 = vadd.f32 %v3007, %v3021
        %v3030 = vadd.f32 %v3008, %v3022
        %v3031 = vadd.f32 %v3009, %v3023
        %v3032 = vadd.f32 %v3010, %v3024
        %v3033 = vadd.f32 %v3011, %v3025
        %v3034 = vadd.f32 %v3012, %v3026
        %v3036 = vlaneseq
        %v3037 = vshrl.u32 %v3036, 7
        %v3038 = vsub.s32 0, %v3037
        %v3039 = vrot.slane %v2834, %v3038
        %v3041 = vmul.f32 %v2811, %v3039
        %v3042 = vmul.f32 %v2812, %v3039
        %v3043 = vmul.f32 %v2813, %v3039
        %v3044 = vmul.f32 %v2814, %v3039
        %v3045 = vmul.f32 %v2815, %v3039
        %v3046 = vmul.f32 %v2816, %v3039
        %v3047 = vmul.f32 %v2817, %v3039
        %v3048 = vmul.f32 %v2810, %v3039
        %v3049 = vadd.f32 %v3027, %v3041
        %v3050 = vadd.f32 %v3028, %v3042
        %v3051 = vadd.f32 %v3029, %v3043
        %v3052 = vadd.f32 %v3030, %v3044
        %v3053 = vadd.f32 %v3031, %v3045
        %v3054 = vadd.f32 %v3032, %v3046
        %v3055 = vadd.f32 %v3033, %v3047
        %v3056 = vadd.f32 %v3034, %v3048
        %3058 = vset.pattern.permute.xlu0 0
        %3059 = vperm.xlu0 %3058, %v2542
        %v3060 = vpop.permute.xlu0 %3059
        %3063 = vset.pattern.permute.xlu0 0
        %3064 = vperm.xlu0 %3063, %v2543
        %v3065 = vpop.permute.xlu0 %3064
        %3068 = vset.pattern.permute.xlu0 0
        %3069 = vperm.xlu0 %3068, %v2544
        %v3070 = vpop.permute.xlu0 %3069
        %3073 = vset.pattern.permute.xlu0 0
        %3074 = vperm.xlu0 %3073, %v2545
        %v3075 = vpop.permute.xlu0 %3074
        %3078 = vset.pattern.permute.xlu0 0
        %3079 = vperm.xlu0 %3078, %v2546
        %v3080 = vpop.permute.xlu0 %3079
        %3083 = vset.pattern.permute.xlu0 0
        %3084 = vperm.xlu0 %3083, %v2547
        %v3085 = vpop.permute.xlu0 %3084
        %3088 = vset.pattern.permute.xlu0 0
        %3089 = vperm.xlu0 %3088, %v2548
        %v3090 = vpop.permute.xlu0 %3089
        %3093 = vset.pattern.permute.xlu0 0
        %3094 = vperm.xlu0 %3093, %v2549
        %v3095 = vpop.permute.xlu0 %3094
        %v3097 = vmul.f32 %v3049, %v3060
        %v3098 = vmul.f32 %v3050, %v3065
        %v3099 = vmul.f32 %v3051, %v3070
        %v3100 = vmul.f32 %v3052, %v3075
        %v3101 = vmul.f32 %v3053, %v3080
        %v3102 = vmul.f32 %v3054, %v3085
        %v3103 = vmul.f32 %v3055, %v3090
        %v3104 = vmul.f32 %v3056, %v3095
        %v3105 = vadd.f32 %v2933, %v2991
        %v3106 = vadd.f32 %v2934, %v2992
        %v3107 = vadd.f32 %v2935, %v2993
        %v3108 = vadd.f32 %v2936, %v2994
        %v3109 = vadd.f32 %v2937, %v2995
        %v3110 = vadd.f32 %v2938, %v2996
        %v3111 = vadd.f32 %v2939, %v2997
        %v3112 = vadd.f32 %v2940, %v2998
        %v3113 = vadd.f32 %v3105, %v3097
        %v3114 = vadd.f32 %v3106, %v3098
        %v3115 = vadd.f32 %v3107, %v3099
        %v3116 = vadd.f32 %v3108, %v3100
        %v3117 = vadd.f32 %v3109, %v3101
        %v3118 = vadd.f32 %v3110, %v3102
        %v3119 = vadd.f32 %v3111, %v3103
        %v3120 = vadd.f32 %v3112, %v3104
        %v3121 = vmul.f32 %v3113, 0.5
        %v3122 = vmul.f32 %v3114, 0.5
        %v3123 = vmul.f32 %v3115, 0.5
        %v3124 = vmul.f32 %v3116, 0.5
        %v3125 = vmul.f32 %v3117, 0.5
        %v3126 = vmul.f32 %v3118, 0.5
        %v3127 = vmul.f32 %v3119, 0.5
        %v3128 = vmul.f32 %v3120, 0.5
        %v3129 = vmul.f32 %v3113, 0.044715
        %v3130 = vmul.f32 %v3114, 0.044715
        %v3131 = vmul.f32 %v3115, 0.044715
        %v3132 = vmul.f32 %v3116, 0.044715
        %v3133 = vmul.f32 %v3117, 0.044715
        %v3134 = vmul.f32 %v3118, 0.044715
        %v3135 = vmul.f32 %v3119, 0.044715
        %v3136 = vmul.f32 %v3120, 0.044715
        %v3137 = vmul.f32 %v3129, %v3113
        %v3138 = vmul.f32 %v3130, %v3114
        %v3139 = vmul.f32 %v3131, %v3115
        %v3140 = vmul.f32 %v3132, %v3116
        %v3141 = vmul.f32 %v3133, %v3117
        %v3142 = vmul.f32 %v3134, %v3118
        %v3143 = vmul.f32 %v3135, %v3119
        %v3144 = vmul.f32 %v3136, %v3120
        %v3145 = vmul.f32 %v3137, %v3113
        %v3146 = vmul.f32 %v3138, %v3114
        %v3147 = vmul.f32 %v3139, %v3115
        %v3148 = vmul.f32 %v3140, %v3116
        %v3149 = vmul.f32 %v3141, %v3117
        %v3150 = vmul.f32 %v3142, %v3118
        %v3151 = vmul.f32 %v3143, %v3119
        %v3152 = vmul.f32 %v3144, %v3120
        %v3153 = vadd.f32 %v3113, %v3145
        %v3154 = vadd.f32 %v3114, %v3146
        %v3155 = vadd.f32 %v3115, %v3147
        %v3156 = vadd.f32 %v3116, %v3148
        %v3157 = vadd.f32 %v3117, %v3149
        %v3158 = vadd.f32 %v3118, %v3150
        %v3159 = vadd.f32 %v3119, %v3151
        %v3160 = vadd.f32 %v3120, %v3152
        %v3161 = vmul.f32 %v3153, 0.7978846
        %v3162 = vmul.f32 %v3154, 0.7978846
        %v3163 = vmul.f32 %v3155, 0.7978846
        %v3164 = vmul.f32 %v3156, 0.7978846
        %v3165 = vmul.f32 %v3157, 0.7978846
        %v3166 = vmul.f32 %v3158, 0.7978846
        %v3167 = vmul.f32 %v3159, 0.7978846
        %v3168 = vmul.f32 %v3160, 0.7978846
        %v3169 = vtanh.pop %v3161
        %v3170 = vtanh.pop %v3162
        %v3171 = vtanh.pop %v3163
        %v3172 = vtanh.pop %v3164
        %v3173 = vtanh.pop %v3165
        %v3174 = vtanh.pop %v3166
        %v3175 = vtanh.pop %v3167
        %v3176 = vtanh.pop %v3168
        %v3177 = vadd.f32 %v3169, 1.0
        %v3178 = vadd.f32 %v3170, 1.0
        %v3179 = vadd.f32 %v3171, 1.0
        %v3180 = vadd.f32 %v3172, 1.0
        %v3181 = vadd.f32 %v3173, 1.0
        %v3182 = vadd.f32 %v3174, 1.0
        %v3183 = vadd.f32 %v3175, 1.0
        %v3184 = vadd.f32 %v3176, 1.0
        %v3185 = vmul.f32 %v3121, %v3177
        %v3186 = vmul.f32 %v3122, %v3178
        %v3187 = vmul.f32 %v3123, %v3179
        %v3188 = vmul.f32 %v3124, %v3180
        %v3189 = vmul.f32 %v3125, %v3181
        %v3190 = vmul.f32 %v3126, %v3182
        %v3191 = vmul.f32 %v3127, %v3183
        %v3192 = vmul.f32 %v3128, %v3184
        %v3193 = vpack.c.bf16 %v3186, %v3185
        %v3194 = vpack.c.bf16 %v3188, %v3187
        %v3195 = vpack.c.bf16 %v3190, %v3189
        %v3196 = vpack.c.bf16 %v3192, %v3191
        %v3197 = vld [vmem:[#allocation10] sm:$0xf]
        %v3198 = vld [vmem:[#allocation10 + $0x4] sm:$0xf]
        %v3199 = vld [vmem:[#allocation10 + $0x8] sm:$0xf]
        %v3200 = vld [vmem:[#allocation10 + $0xc] sm:$0xf]
        %v3201 = vld [vmem:[#allocation10 + $0x10] sm:$0xf]
        %v3202 = vld [vmem:[#allocation10 + $0x14] sm:$0xf]
        %v3203 = vld [vmem:[#allocation10 + $0x18] sm:$0xf]
        %v3204 = vld [vmem:[#allocation10 + $0x1c] sm:$0xf]
        %v3205 = vld [vmem:[#allocation10 + $0x20] sm:$0xf]
        %v3206 = vld [vmem:[#allocation10 + $0x24] sm:$0xf]
        %v3207 = vld [vmem:[#allocation10 + $0x28] sm:$0xf]
        %v3208 = vld [vmem:[#allocation10 + $0x2c] sm:$0xf]
        %v3209 = vld [vmem:[#allocation10 + $0x30] sm:$0xf]
        %v3210 = vld [vmem:[#allocation10 + $0x34] sm:$0xf]
        %v3211 = vld [vmem:[#allocation10 + $0x38] sm:$0xf]
        %v3212 = vld [vmem:[#allocation10 + $0x3c] sm:$0xf]
        %s3213 = scalar_lea.vmem %s8, 64
        %v3214 = vld [vmem:[%s3213] sm:$0xf]
        %v3215 = vld [vmem:[%s3213 + $0x4] sm:$0xf]
        %v3216 = vld [vmem:[%s3213 + $0x8] sm:$0xf]
        %v3217 = vld [vmem:[%s3213 + $0xc] sm:$0xf]
        %v3218 = vld [vmem:[%s3213 + $0x10] sm:$0xf]
        %v3219 = vld [vmem:[%s3213 + $0x14] sm:$0xf]
        %v3220 = vld [vmem:[%s3213 + $0x18] sm:$0xf]
        %v3221 = vld [vmem:[%s3213 + $0x1c] sm:$0xf]
        %v3222 = vld [vmem:[%s3213 + $0x20] sm:$0xf]
        %v3223 = vld [vmem:[%s3213 + $0x24] sm:$0xf]
        %v3224 = vld [vmem:[%s3213 + $0x28] sm:$0xf]
        %v3225 = vld [vmem:[%s3213 + $0x2c] sm:$0xf]
        %v3226 = vld [vmem:[%s3213 + $0x30] sm:$0xf]
        %v3227 = vld [vmem:[%s3213 + $0x34] sm:$0xf]
        %v3228 = vld [vmem:[%s3213 + $0x38] sm:$0xf]
        %v3229 = vld [vmem:[%s3213 + $0x3c] sm:$0xf]
        %s3230 = scalar_lea.vmem %s9, 1
        %v3231 = vld [vmem:[%s3230] sm:$0x1]
        %v3233 = vlaneseq
        %v3234 = vshrl.u32 %v3233, 7
        %v3235 = vsub.s32 0, %v3234
        %v3236 = vrot.slane %v3231, %v3235
        %v3254 = vunpack.c.l.b16 %v3214
        %v3255 = vunpack.c.l.b16 %v3215
        %v3256 = vunpack.c.l.b16 %v3216
        %v3257 = vunpack.c.l.b16 %v3217
        %v3258 = vunpack.c.l.b16 %v3218
        %v3259 = vunpack.c.l.b16 %v3219
        %v3260 = vunpack.c.l.b16 %v3220
        %v3261 = vunpack.c.l.b16 %v3221
        %v3262 = vunpack.c.l.b16 %v3222
        %v3263 = vunpack.c.l.b16 %v3223
        %v3264 = vunpack.c.l.b16 %v3224
        %v3265 = vunpack.c.l.b16 %v3225
        %v3266 = vunpack.c.l.b16 %v3226
        %v3267 = vunpack.c.l.b16 %v3227
        %v3268 = vunpack.c.l.b16 %v3228
        %v3269 = vunpack.c.l.b16 %v3229
        %v3270 = vpack.c.b16 %v3255, %v3254
        %v3271 = vpack.c.b16 %v3257, %v3256
        %v3272 = vpack.c.b16 %v3259, %v3258
        %v3273 = vpack.c.b16 %v3261, %v3260
        %v3274 = vpack.c.b16 %v3263, %v3262
        %v3275 = vpack.c.b16 %v3265, %v3264
        %v3276 = vpack.c.b16 %v3267, %v3266
        %v3277 = vpack.c.b16 %v3269, %v3268
        %3286 = vmatprep.subr.bf16.mxu0 0
        %3287 = vmatpush1.bf16.msra.mxu0 %v3277
        %3288 = vmatprep.subr.bf16.mxu0 0
        %3289 = vmatpush1.bf16.msra.mxu0 %v3276
        %3290 = vmatprep.subr.bf16.mxu0 0
        %3291 = vmatpush1.bf16.msra.mxu0 %v3275
        %3292 = vmatprep.subr.bf16.mxu0 0
        %3293 = vmatpush1.bf16.msra.mxu0 %v3274
        %3294 = vmatprep.subr.bf16.mxu0 0
        %3295 = vmatpush1.bf16.msra.mxu0 %v3273
        %3296 = vmatprep.subr.bf16.mxu0 0
        %3297 = vmatpush1.bf16.msra.mxu0 %v3272
        %3298 = vmatprep.subr.bf16.mxu0 0
        %3299 = vmatpush1.bf16.msra.mxu0 %v3271
        %3300 = vmatprep.subr.bf16.mxu0 0
        %3301 = vmatpush1.bf16.msra.mxu0 %v3270
        %3302 = vmatprep.subr.bf16.mxu0 0
        %3303 = vmatpush2.bf16.msra.mxu0 0
        %3304 = vmatprep.subr.bf16.mxu0 0
        %3305 = vmatpush2.bf16.msra.mxu0 0
        %3306 = vmatprep.subr.bf16.mxu0 0
        %3307 = vmatpush2.bf16.msra.mxu0 0
        %3308 = vmatprep.subr.bf16.mxu0 0
        %3309 = vmatpush2.bf16.msra.mxu0 0
        %3310 = vmatprep.subr.bf16.mxu0 0
        %3311 = vmatpush2.bf16.msra.mxu0 0
        %3312 = vmatprep.subr.bf16.mxu0 0
        %3313 = vmatpush2.bf16.msra.mxu0 0
        %3314 = vmatprep.subr.bf16.mxu0 0
        %3315 = vmatpush2.bf16.msra.mxu0 0
        %3316 = vmatprep.subr.bf16.mxu0 0
        %3317 = vmatpush2.bf16.msra.mxu0 0
        %3318 = vmatprep.mubr.bf16.mxu0 0
        %3319 = vmatmul.mubr.bf16.gmra.mxu0 %v2511
        %v3320 = vpop.f32.mrf.mxu0
        %v3321 = vadd.f32 %v3236, %v3320
        %v3322 = vpop.f32.mrf.mxu0
        %v3323 = vpop.f32.mrf.mxu0
        %v3324 = vadd.f32 %v3236, %v3323
        %v3325 = vpop.f32.mrf.mxu0
        %3326 = vmatprep.mubr.bf16.mxu0 0
        %3327 = vmatmul.mubr.bf16.gmra.mxu0 %v2512
        %v3328 = vpop.f32.mrf.mxu0
        %v3329 = vadd.f32 %v3236, %v3328
        %v3330 = vpop.f32.mrf.mxu0
        %v3331 = vpop.f32.mrf.mxu0
        %v3332 = vadd.f32 %v3236, %v3331
        %v3333 = vpop.f32.mrf.mxu0
        %3334 = vmatprep.mubr.bf16.mxu0 0
        %3335 = vmatmul.mubr.bf16.gmra.mxu0 %v2513
        %v3336 = vpop.f32.mrf.mxu0
        %v3337 = vadd.f32 %v3236, %v3336
        %v3338 = vpop.f32.mrf.mxu0
        %v3339 = vpop.f32.mrf.mxu0
        %v3340 = vadd.f32 %v3236, %v3339
        %v3341 = vpop.f32.mrf.mxu0
        %3342 = vmatprep.mubr.bf16.mxu0 0
        %3343 = vmatmul.mubr.bf16.gmra.mxu0 %v2514
        %v3344 = vpop.f32.mrf.mxu0
        %v3345 = vadd.f32 %v3236, %v3344
        %v3346 = vpop.f32.mrf.mxu0
        %v3347 = vpop.f32.mrf.mxu0
        %v3348 = vadd.f32 %v3236, %v3347
        %v3349 = vpop.f32.mrf.mxu0
        %3350 = vdwg.mxu0
        %v3351 = vrot.slane %v3321, 7
        %v3352 = vrot.slane %v3324, 7
        %v3353 = vrot.slane %v3329, 7
        %v3354 = vrot.slane %v3332, 7
        %v3355 = vrot.slane %v3337, 7
        %v3356 = vrot.slane %v3340, 7
        %v3357 = vrot.slane %v3345, 7
        %v3358 = vrot.slane %v3348, 7
        %v3359 = vsel %vm2696, %v3357, %v3358
        %v3360 = vsel %vm2696, %v3356, %v3357
        %v3361 = vsel %vm2696, %v3355, %v3356
        %v3362 = vsel %vm2696, %v3354, %v3355
        %v3363 = vsel %vm2696, %v3353, %v3354
        %v3364 = vsel %vm2696, %v3352, %v3353
        %v3365 = vsel %vm2696, %v3351, %v3352
        %v3366 = vsel %vm2696, %v3358, %v3351
        %v3367 = vmul.f32 %v3366, %v2708
        %v3368 = vmul.f32 %v3365, %v2713
        %v3369 = vmul.f32 %v3364, %v2718
        %v3370 = vmul.f32 %v3363, %v2723
        %v3371 = vmul.f32 %v3362, %v2728
        %v3372 = vmul.f32 %v3361, %v2733
        %v3373 = vmul.f32 %v3360, %v2738
        %v3374 = vmul.f32 %v3359, %v2743
        %v3375 = vrot.slane %v3321, 1
        %v3376 = vrot.slane %v3324, 1
        %v3377 = vrot.slane %v3329, 1
        %v3378 = vrot.slane %v3332, 1
        %v3379 = vrot.slane %v3337, 1
        %v3380 = vrot.slane %v3340, 1
        %v3381 = vrot.slane %v3345, 1
        %v3382 = vrot.slane %v3348, 1
        %v3383 = vsel %vm2761, %v3381, %v3382
        %v3384 = vsel %vm2761, %v3380, %v3381
        %v3385 = vsel %vm2761, %v3379, %v3380
        %v3386 = vsel %vm2761, %v3378, %v3379
        %v3387 = vsel %vm2761, %v3377, %v3378
        %v3388 = vsel %vm2761, %v3376, %v3377
        %v3389 = vsel %vm2761, %v3375, %v3376
        %v3390 = vsel %vm2761, %v3382, %v3375
        %v3391 = vmul.f32 %v3389, %v2773
        %v3392 = vmul.f32 %v3388, %v2778
        %v3393 = vmul.f32 %v3387, %v2783
        %v3394 = vmul.f32 %v3386, %v2788
        %v3395 = vmul.f32 %v3385, %v2793
        %v3396 = vmul.f32 %v3384, %v2798
        %v3397 = vmul.f32 %v3383, %v2803
        %v3398 = vmul.f32 %v3390, %v2808
        %s3399 = scalar_lea.vmem [#allocation8], 9
        %v3400 = vld [vmem:[%s3399] sm:$0x1]
        %s3401 = scalar_lea.vmem [#allocation8], 10
        %v3402 = vld [vmem:[%s3401] sm:$0x1]
        %s3403 = scalar_lea.vmem [#allocation8], 11
        %v3404 = vld [vmem:[%s3403] sm:$0x1]
        %s3405 = scalar_lea.vmem [#allocation8], 12
        %v3406 = vld [vmem:[%s3405] sm:$0x1]
        %s3407 = scalar_lea.vmem [#allocation8], 13
        %v3408 = vld [vmem:[%s3407] sm:$0x1]
        %s3409 = scalar_lea.vmem [#allocation8], 14
        %v3410 = vld [vmem:[%s3409] sm:$0x1]
        %s3411 = scalar_lea.vmem [#allocation8], 15
        %v3412 = vld [vmem:[%s3411] sm:$0x1]
        %s3413 = scalar_lea.vmem [#allocation8], 16
        %v3414 = vld [vmem:[%s3413] sm:$0x1]
        %s3415 = scalar_lea.vmem [#allocation8], 17
        %v3416 = vld [vmem:[%s3415] sm:$0x1]
        %v3418 = vlaneseq
        %v3419 = vshrl.u32 %v3418, 7
        %v3420 = vsub.s32 0, %v3419
        %v3421 = vrot.slane %v3400, %v3420
        %v3423 = vmul.f32 %v3374, %v3421
        %v3424 = vmul.f32 %v3367, %v3421
        %v3425 = vmul.f32 %v3368, %v3421
        %v3426 = vmul.f32 %v3369, %v3421
        %v3427 = vmul.f32 %v3370, %v3421
        %v3428 = vmul.f32 %v3371, %v3421
        %v3429 = vmul.f32 %v3372, %v3421
        %v3430 = vmul.f32 %v3373, %v3421
        %v3432 = vlaneseq
        %v3433 = vshrl.u32 %v3432, 7
        %v3434 = vsub.s32 0, %v3433
        %v3435 = vrot.slane %v3402, %v3434
        %v3437 = vmul.f32 %v3348, %v3435
        %v3438 = vmul.f32 %v3321, %v3435
        %v3439 = vmul.f32 %v3324, %v3435
        %v3440 = vmul.f32 %v3329, %v3435
        %v3441 = vmul.f32 %v3332, %v3435
        %v3442 = vmul.f32 %v3337, %v3435
        %v3443 = vmul.f32 %v3340, %v3435
        %v3444 = vmul.f32 %v3345, %v3435
        %v3445 = vadd.f32 %v3423, %v3437
        %v3446 = vadd.f32 %v3424, %v3438
        %v3447 = vadd.f32 %v3425, %v3439
        %v3448 = vadd.f32 %v3426, %v3440
        %v3449 = vadd.f32 %v3427, %v3441
        %v3450 = vadd.f32 %v3428, %v3442
        %v3451 = vadd.f32 %v3429, %v3443
        %v3452 = vadd.f32 %v3430, %v3444
        %v3454 = vlaneseq
        %v3455 = vshrl.u32 %v3454, 7
        %v3456 = vsub.s32 0, %v3455
        %v3457 = vrot.slane %v3404, %v3456
        %v3459 = vmul.f32 %v3398, %v3457
        %v3460 = vmul.f32 %v3391, %v3457
        %v3461 = vmul.f32 %v3392, %v3457
        %v3462 = vmul.f32 %v3393, %v3457
        %v3463 = vmul.f32 %v3394, %v3457
        %v3464 = vmul.f32 %v3395, %v3457
        %v3465 = vmul.f32 %v3396, %v3457
        %v3466 = vmul.f32 %v3397, %v3457
        %v3467 = vadd.f32 %v3445, %v3459
        %v3468 = vadd.f32 %v3446, %v3460
        %v3469 = vadd.f32 %v3447, %v3461
        %v3470 = vadd.f32 %v3448, %v3462
        %v3471 = vadd.f32 %v3449, %v3463
        %v3472 = vadd.f32 %v3450, %v3464
        %v3473 = vadd.f32 %v3451, %v3465
        %v3474 = vadd.f32 %v3452, %v3466
        %v3475 = vmul.f32 %v3467, %v2896
        %v3476 = vmul.f32 %v3468, %v2901
        %v3477 = vmul.f32 %v3469, %v2906
        %v3478 = vmul.f32 %v3470, %v2911
        %v3479 = vmul.f32 %v3471, %v2916
        %v3480 = vmul.f32 %v3472, %v2921
        %v3481 = vmul.f32 %v3473, %v2926
        %v3482 = vmul.f32 %v3474, %v2931
        %v3484 = vlaneseq
        %v3485 = vshrl.u32 %v3484, 7
        %v3486 = vsub.s32 0, %v3485
        %v3487 = vrot.slane %v3406, %v3486
        %v3489 = vmul.f32 %v3367, %v3487
        %v3490 = vmul.f32 %v3368, %v3487
        %v3491 = vmul.f32 %v3369, %v3487
        %v3492 = vmul.f32 %v3370, %v3487
        %v3493 = vmul.f32 %v3371, %v3487
        %v3494 = vmul.f32 %v3372, %v3487
        %v3495 = vmul.f32 %v3373, %v3487
        %v3496 = vmul.f32 %v3374, %v3487
        %v3498 = vlaneseq
        %v3499 = vshrl.u32 %v3498, 7
        %v3500 = vsub.s32 0, %v3499
        %v3501 = vrot.slane %v3408, %v3500
        %v3503 = vmul.f32 %v3321, %v3501
        %v3504 = vmul.f32 %v3324, %v3501
        %v3505 = vmul.f32 %v3329, %v3501
        %v3506 = vmul.f32 %v3332, %v3501
        %v3507 = vmul.f32 %v3337, %v3501
        %v3508 = vmul.f32 %v3340, %v3501
        %v3509 = vmul.f32 %v3345, %v3501
        %v3510 = vmul.f32 %v3348, %v3501
        %v3511 = vadd.f32 %v3489, %v3503
        %v3512 = vadd.f32 %v3490, %v3504
        %v3513 = vadd.f32 %v3491, %v3505
        %v3514 = vadd.f32 %v3492, %v3506
        %v3515 = vadd.f32 %v3493, %v3507
        %v3516 = vadd.f32 %v3494, %v3508
        %v3517 = vadd.f32 %v3495, %v3509
        %v3518 = vadd.f32 %v3496, %v3510
        %v3520 = vlaneseq
        %v3521 = vshrl.u32 %v3520, 7
        %v3522 = vsub.s32 0, %v3521
        %v3523 = vrot.slane %v3410, %v3522
        %v3525 = vmul.f32 %v3391, %v3523
        %v3526 = vmul.f32 %v3392, %v3523
        %v3527 = vmul.f32 %v3393, %v3523
        %v3528 = vmul.f32 %v3394, %v3523
        %v3529 = vmul.f32 %v3395, %v3523
        %v3530 = vmul.f32 %v3396, %v3523
        %v3531 = vmul.f32 %v3397, %v3523
        %v3532 = vmul.f32 %v3398, %v3523
        %v3533 = vadd.f32 %v3511, %v3525
        %v3534 = vadd.f32 %v3512, %v3526
        %v3535 = vadd.f32 %v3513, %v3527
        %v3536 = vadd.f32 %v3514, %v3528
        %v3537 = vadd.f32 %v3515, %v3529
        %v3538 = vadd.f32 %v3516, %v3530
        %v3539 = vadd.f32 %v3517, %v3531
        %v3540 = vadd.f32 %v3518, %v3532
        %v3542 = vlaneseq
        %v3543 = vshrl.u32 %v3542, 7
        %v3544 = vsub.s32 0, %v3543
        %v3545 = vrot.slane %v3412, %v3544
        %v3547 = vmul.f32 %v3368, %v3545
        %v3548 = vmul.f32 %v3369, %v3545
        %v3549 = vmul.f32 %v3370, %v3545
        %v3550 = vmul.f32 %v3371, %v3545
        %v3551 = vmul.f32 %v3372, %v3545
        %v3552 = vmul.f32 %v3373, %v3545
        %v3553 = vmul.f32 %v3374, %v3545
        %v3554 = vmul.f32 %v3367, %v3545
        %v3556 = vlaneseq
        %v3557 = vshrl.u32 %v3556, 7
        %v3558 = vsub.s32 0, %v3557
        %v3559 = vrot.slane %v3414, %v3558
        %v3561 = vmul.f32 %v3324, %v3559
        %v3562 = vmul.f32 %v3329, %v3559
        %v3563 = vmul.f32 %v3332, %v3559
        %v3564 = vmul.f32 %v3337, %v3559
        %v3565 = vmul.f32 %v3340, %v3559
        %v3566 = vmul.f32 %v3345, %v3559
        %v3567 = vmul.f32 %v3348, %v3559
        %v3568 = vmul.f32 %v3321, %v3559
        %v3569 = vadd.f32 %v3547, %v3561
        %v3570 = vadd.f32 %v3548, %v3562
        %v3571 = vadd.f32 %v3549, %v3563
        %v3572 = vadd.f32 %v3550, %v3564
        %v3573 = vadd.f32 %v3551, %v3565
        %v3574 = vadd.f32 %v3552, %v3566
        %v3575 = vadd.f32 %v3553, %v3567
        %v3576 = vadd.f32 %v3554, %v3568
        %v3578 = vlaneseq
        %v3579 = vshrl.u32 %v3578, 7
        %v3580 = vsub.s32 0, %v3579
        %v3581 = vrot.slane %v3416, %v3580
        %v3583 = vmul.f32 %v3392, %v3581
        %v3584 = vmul.f32 %v3393, %v3581
        %v3585 = vmul.f32 %v3394, %v3581
        %v3586 = vmul.f32 %v3395, %v3581
        %v3587 = vmul.f32 %v3396, %v3581
        %v3588 = vmul.f32 %v3397, %v3581
        %v3589 = vmul.f32 %v3398, %v3581
        %v3590 = vmul.f32 %v3391, %v3581
        %v3591 = vadd.f32 %v3569, %v3583
        %v3592 = vadd.f32 %v3570, %v3584
        %v3593 = vadd.f32 %v3571, %v3585
        %v3594 = vadd.f32 %v3572, %v3586
        %v3595 = vadd.f32 %v3573, %v3587
        %v3596 = vadd.f32 %v3574, %v3588
        %v3597 = vadd.f32 %v3575, %v3589
        %v3598 = vadd.f32 %v3576, %v3590
        %v3599 = vmul.f32 %v3591, %v3060
        %v3600 = vmul.f32 %v3592, %v3065
        %v3601 = vmul.f32 %v3593, %v3070
        %v3602 = vmul.f32 %v3594, %v3075
        %v3603 = vmul.f32 %v3595, %v3080
        %v3604 = vmul.f32 %v3596, %v3085
        %v3605 = vmul.f32 %v3597, %v3090
        %v3606 = vmul.f32 %v3598, %v3095
        %v3607 = vadd.f32 %v3475, %v3533
        %v3608 = vadd.f32 %v3476, %v3534
        %v3609 = vadd.f32 %v3477, %v3535
        %v3610 = vadd.f32 %v3478, %v3536
        %v3611 = vadd.f32 %v3479, %v3537
        %v3612 = vadd.f32 %v3480, %v3538
        %v3613 = vadd.f32 %v3481, %v3539
        %v3614 = vadd.f32 %v3482, %v3540
        %v3615 = vadd.f32 %v3607, %v3599
        %v3616 = vadd.f32 %v3608, %v3600
        %v3617 = vadd.f32 %v3609, %v3601
        %v3618 = vadd.f32 %v3610, %v3602
        %v3619 = vadd.f32 %v3611, %v3603
        %v3620 = vadd.f32 %v3612, %v3604
        %v3621 = vadd.f32 %v3613, %v3605
        %v3622 = vadd.f32 %v3614, %v3606
        %v3623 = vmul.f32 %v3615, 0.5
        %v3624 = vmul.f32 %v3616, 0.5
        %v3625 = vmul.f32 %v3617, 0.5
        %v3626 = vmul.f32 %v3618, 0.5
        %v3627 = vmul.f32 %v3619, 0.5
        %v3628 = vmul.f32 %v3620, 0.5
        %v3629 = vmul.f32 %v3621, 0.5
        %v3630 = vmul.f32 %v3622, 0.5
        %v3631 = vmul.f32 %v3615, 0.044715
        %v3632 = vmul.f32 %v3616, 0.044715
        %v3633 = vmul.f32 %v3617, 0.044715
        %v3634 = vmul.f32 %v3618, 0.044715
        %v3635 = vmul.f32 %v3619, 0.044715
        %v3636 = vmul.f32 %v3620, 0.044715
        %v3637 = vmul.f32 %v3621, 0.044715
        %v3638 = vmul.f32 %v3622, 0.044715
        %v3639 = vmul.f32 %v3631, %v3615
        %v3640 = vmul.f32 %v3632, %v3616
        %v3641 = vmul.f32 %v3633, %v3617
        %v3642 = vmul.f32 %v3634, %v3618
        %v3643 = vmul.f32 %v3635, %v3619
        %v3644 = vmul.f32 %v3636, %v3620
        %v3645 = vmul.f32 %v3637, %v3621
        %v3646 = vmul.f32 %v3638, %v3622
        %v3647 = vmul.f32 %v3639, %v3615
        %v3648 = vmul.f32 %v3640, %v3616
        %v3649 = vmul.f32 %v3641, %v3617
        %v3650 = vmul.f32 %v3642, %v3618
        %v3651 = vmul.f32 %v3643, %v3619
        %v3652 = vmul.f32 %v3644, %v3620
        %v3653 = vmul.f32 %v3645, %v3621
        %v3654 = vmul.f32 %v3646, %v3622
        %v3655 = vadd.f32 %v3615, %v3647
        %v3656 = vadd.f32 %v3616, %v3648
        %v3657 = vadd.f32 %v3617, %v3649
        %v3658 = vadd.f32 %v3618, %v3650
        %v3659 = vadd.f32 %v3619, %v3651
        %v3660 = vadd.f32 %v3620, %v3652
        %v3661 = vadd.f32 %v3621, %v3653
        %v3662 = vadd.f32 %v3622, %v3654
        %v3663 = vmul.f32 %v3655, 0.7978846
        %v3664 = vmul.f32 %v3656, 0.7978846
        %v3665 = vmul.f32 %v3657, 0.7978846
        %v3666 = vmul.f32 %v3658, 0.7978846
        %v3667 = vmul.f32 %v3659, 0.7978846
        %v3668 = vmul.f32 %v3660, 0.7978846
        %v3669 = vmul.f32 %v3661, 0.7978846
        %v3670 = vmul.f32 %v3662, 0.7978846
        %v3671 = vtanh.pop %v3663
        %v3672 = vtanh.pop %v3664
        %v3673 = vtanh.pop %v3665
        %v3674 = vtanh.pop %v3666
        %v3675 = vtanh.pop %v3667
        %v3676 = vtanh.pop %v3668
        %v3677 = vtanh.pop %v3669
        %v3678 = vtanh.pop %v3670
        %v3679 = vadd.f32 %v3671, 1.0
        %v3680 = vadd.f32 %v3672, 1.0
        %v3681 = vadd.f32 %v3673, 1.0
        %v3682 = vadd.f32 %v3674, 1.0
        %v3683 = vadd.f32 %v3675, 1.0
        %v3684 = vadd.f32 %v3676, 1.0
        %v3685 = vadd.f32 %v3677, 1.0
        %v3686 = vadd.f32 %v3678, 1.0
        %v3687 = vmul.f32 %v3623, %v3679
        %v3688 = vmul.f32 %v3624, %v3680
        %v3689 = vmul.f32 %v3625, %v3681
        %v3690 = vmul.f32 %v3626, %v3682
        %v3691 = vmul.f32 %v3627, %v3683
        %v3692 = vmul.f32 %v3628, %v3684
        %v3693 = vmul.f32 %v3629, %v3685
        %v3694 = vmul.f32 %v3630, %v3686
        %v3695 = vpack.c.bf16 %v3688, %v3687
        %v3696 = vpack.c.bf16 %v3690, %v3689
        %v3697 = vpack.c.bf16 %v3692, %v3691
        %v3698 = vpack.c.bf16 %v3694, %v3693
        %s3699 = scalar_lea.vmem [#allocation10], 64
        %v3700 = vld [vmem:[%s3699] sm:$0xf]
        %v3701 = vld [vmem:[%s3699 + $0x4] sm:$0xf]
        %v3702 = vld [vmem:[%s3699 + $0x8] sm:$0xf]
        %v3703 = vld [vmem:[%s3699 + $0xc] sm:$0xf]
        %v3704 = vld [vmem:[%s3699 + $0x10] sm:$0xf]
        %v3705 = vld [vmem:[%s3699 + $0x14] sm:$0xf]
        %v3706 = vld [vmem:[%s3699 + $0x18] sm:$0xf]
        %v3707 = vld [vmem:[%s3699 + $0x1c] sm:$0xf]
        %v3708 = vld [vmem:[%s3699 + $0x20] sm:$0xf]
        %v3709 = vld [vmem:[%s3699 + $0x24] sm:$0xf]
        %v3710 = vld [vmem:[%s3699 + $0x28] sm:$0xf]
        %v3711 = vld [vmem:[%s3699 + $0x2c] sm:$0xf]
        %v3712 = vld [vmem:[%s3699 + $0x30] sm:$0xf]
        %v3713 = vld [vmem:[%s3699 + $0x34] sm:$0xf]
        %v3714 = vld [vmem:[%s3699 + $0x38] sm:$0xf]
        %v3715 = vld [vmem:[%s3699 + $0x3c] sm:$0xf]
        %v3732 = vunpack.c.l.b16 %v3700
        %v3733 = vunpack.c.l.b16 %v3701
        %v3734 = vunpack.c.l.b16 %v3702
        %v3735 = vunpack.c.l.b16 %v3703
        %v3736 = vunpack.c.l.b16 %v3704
        %v3737 = vunpack.c.l.b16 %v3705
        %v3738 = vunpack.c.l.b16 %v3706
        %v3739 = vunpack.c.l.b16 %v3707
        %v3740 = vunpack.c.l.b16 %v3708
        %v3741 = vunpack.c.l.b16 %v3709
        %v3742 = vunpack.c.l.b16 %v3710
        %v3743 = vunpack.c.l.b16 %v3711
        %v3744 = vunpack.c.l.b16 %v3712
        %v3745 = vunpack.c.l.b16 %v3713
        %v3746 = vunpack.c.l.b16 %v3714
        %v3747 = vunpack.c.l.b16 %v3715
        %v3748 = vpack.c.b16 %v3733, %v3732
        %v3749 = vpack.c.b16 %v3735, %v3734
        %v3750 = vpack.c.b16 %v3737, %v3736
        %v3751 = vpack.c.b16 %v3739, %v3738
        %v3752 = vpack.c.b16 %v3741, %v3740
        %v3753 = vpack.c.b16 %v3743, %v3742
        %v3754 = vpack.c.b16 %v3745, %v3744
        %v3755 = vpack.c.b16 %v3747, %v3746
        %3764 = vmatprep.subr.bf16.mxu0 0
        %3765 = vmatpush1.bf16.msra.mxu0 %v3755
        %3766 = vmatprep.subr.bf16.mxu0 0
        %3767 = vmatpush1.bf16.msra.mxu0 %v3754
        %3768 = vmatprep.subr.bf16.mxu0 0
        %3769 = vmatpush1.bf16.msra.mxu0 %v3753
        %3770 = vmatprep.subr.bf16.mxu0 0
        %3771 = vmatpush1.bf16.msra.mxu0 %v3752
        %3772 = vmatprep.subr.bf16.mxu0 0
        %3773 = vmatpush1.bf16.msra.mxu0 %v3751
        %3774 = vmatprep.subr.bf16.mxu0 0
        %3775 = vmatpush1.bf16.msra.mxu0 %v3750
        %3776 = vmatprep.subr.bf16.mxu0 0
        %3777 = vmatpush1.bf16.msra.mxu0 %v3749
        %3778 = vmatprep.subr.bf16.mxu0 0
        %3779 = vmatpush1.bf16.msra.mxu0 %v3748
        %3780 = vmatprep.subr.bf16.mxu0 0
        %3781 = vmatpush2.bf16.msra.mxu0 0
        %3782 = vmatprep.subr.bf16.mxu0 0
        %3783 = vmatpush2.bf16.msra.mxu0 0
        %3784 = vmatprep.subr.bf16.mxu0 0
        %3785 = vmatpush2.bf16.msra.mxu0 0
        %3786 = vmatprep.subr.bf16.mxu0 0
        %3787 = vmatpush2.bf16.msra.mxu0 0
        %3788 = vmatprep.subr.bf16.mxu0 0
        %3789 = vmatpush2.bf16.msra.mxu0 0
        %3790 = vmatprep.subr.bf16.mxu0 0
        %3791 = vmatpush2.bf16.msra.mxu0 0
        %3792 = vmatprep.subr.bf16.mxu0 0
        %3793 = vmatpush2.bf16.msra.mxu0 0
        %3794 = vmatprep.subr.bf16.mxu0 0
        %3795 = vmatpush2.bf16.msra.mxu0 0
        %3796 = vmatprep.mubr.bf16.mxu0 0
        %3797 = vmatmul.mubr.bf16.gmra.mxu0 %v3695
        %v3798 = vpop.f32.mrf.mxu0
        %v3799 = vadd.f32 0.0, %v3798
        %v3800 = vpop.f32.mrf.mxu0
        %v3801 = vpop.f32.mrf.mxu0
        %v3802 = vadd.f32 0.0, %v3801
        %v3803 = vpop.f32.mrf.mxu0
        %3804 = vmatprep.mubr.bf16.mxu0 0
        %3805 = vmatmul.mubr.bf16.gmra.mxu0 %v3696
        %v3806 = vpop.f32.mrf.mxu0
        %v3807 = vadd.f32 0.0, %v3806
        %v3808 = vpop.f32.mrf.mxu0
        %v3809 = vpop.f32.mrf.mxu0
        %v3810 = vadd.f32 0.0, %v3809
        %v3811 = vpop.f32.mrf.mxu0
        %3812 = vmatprep.mubr.bf16.mxu0 0
        %3813 = vmatmul.mubr.bf16.gmra.mxu0 %v3697
        %v3814 = vpop.f32.mrf.mxu0
        %v3815 = vadd.f32 0.0, %v3814
        %v3816 = vpop.f32.mrf.mxu0
        %v3817 = vpop.f32.mrf.mxu0
        %v3818 = vadd.f32 0.0, %v3817
        %v3819 = vpop.f32.mrf.mxu0
        %3820 = vmatprep.mubr.bf16.mxu0 0
        %3821 = vmatmul.mubr.bf16.gmra.mxu0 %v3698
        %v3822 = vpop.f32.mrf.mxu0
        %v3823 = vadd.f32 0.0, %v3822
        %v3824 = vpop.f32.mrf.mxu0
        %v3825 = vpop.f32.mrf.mxu0
        %v3826 = vadd.f32 0.0, %v3825
        %v3827 = vpop.f32.mrf.mxu0
        %3828 = vdwg.mxu0
        %v3845 = vunpack.c.l.b16 %v3197
        %v3846 = vunpack.c.l.b16 %v3198
        %v3847 = vunpack.c.l.b16 %v3199
        %v3848 = vunpack.c.l.b16 %v3200
        %v3849 = vunpack.c.l.b16 %v3201
        %v3850 = vunpack.c.l.b16 %v3202
        %v3851 = vunpack.c.l.b16 %v3203
        %v3852 = vunpack.c.l.b16 %v3204
        %v3853 = vunpack.c.l.b16 %v3205
        %v3854 = vunpack.c.l.b16 %v3206
        %v3855 = vunpack.c.l.b16 %v3207
        %v3856 = vunpack.c.l.b16 %v3208
        %v3857 = vunpack.c.l.b16 %v3209
        %v3858 = vunpack.c.l.b16 %v3210
        %v3859 = vunpack.c.l.b16 %v3211
        %v3860 = vunpack.c.l.b16 %v3212
        %v3861 = vpack.c.b16 %v3846, %v3845
        %v3862 = vpack.c.b16 %v3848, %v3847
        %v3863 = vpack.c.b16 %v3850, %v3849
        %v3864 = vpack.c.b16 %v3852, %v3851
        %v3865 = vpack.c.b16 %v3854, %v3853
        %v3866 = vpack.c.b16 %v3856, %v3855
        %v3867 = vpack.c.b16 %v3858, %v3857
        %v3868 = vpack.c.b16 %v3860, %v3859
        %3877 = vmatprep.subr.bf16.mxu0 0
        %3878 = vmatpush1.bf16.msra.mxu0 %v3868
        %3879 = vmatprep.subr.bf16.mxu0 0
        %3880 = vmatpush1.bf16.msra.mxu0 %v3867
        %3881 = vmatprep.subr.bf16.mxu0 0
        %3882 = vmatpush1.bf16.msra.mxu0 %v3866
        %3883 = vmatprep.subr.bf16.mxu0 0
        %3884 = vmatpush1.bf16.msra.mxu0 %v3865
        %3885 = vmatprep.subr.bf16.mxu0 0
        %3886 = vmatpush1.bf16.msra.mxu0 %v3864
        %3887 = vmatprep.subr.bf16.mxu0 0
        %3888 = vmatpush1.bf16.msra.mxu0 %v3863
        %3889 = vmatprep.subr.bf16.mxu0 0
        %3890 = vmatpush1.bf16.msra.mxu0 %v3862
        %3891 = vmatprep.subr.bf16.mxu0 0
        %3892 = vmatpush1.bf16.msra.mxu0 %v3861
        %3893 = vmatprep.subr.bf16.mxu0 0
        %3894 = vmatpush2.bf16.msra.mxu0 0
        %3895 = vmatprep.subr.bf16.mxu0 0
        %3896 = vmatpush2.bf16.msra.mxu0 0
        %3897 = vmatprep.subr.bf16.mxu0 0
        %3898 = vmatpush2.bf16.msra.mxu0 0
        %3899 = vmatprep.subr.bf16.mxu0 0
        %3900 = vmatpush2.bf16.msra.mxu0 0
        %3901 = vmatprep.subr.bf16.mxu0 0
        %3902 = vmatpush2.bf16.msra.mxu0 0
        %3903 = vmatprep.subr.bf16.mxu0 0
        %3904 = vmatpush2.bf16.msra.mxu0 0
        %3905 = vmatprep.subr.bf16.mxu0 0
        %3906 = vmatpush2.bf16.msra.mxu0 0
        %3907 = vmatprep.subr.bf16.mxu0 0
        %3908 = vmatpush2.bf16.msra.mxu0 0
        %3909 = vmatprep.mubr.bf16.mxu0 0
        %3910 = vmatmul.mubr.bf16.gmra.mxu0 %v3193
        %v3911 = vpop.f32.mrf.mxu0
        %v3912 = vadd.f32 %v3799, %v3911
        %v3913 = vpop.f32.mrf.mxu0
        %v3914 = vpop.f32.mrf.mxu0
        %v3915 = vadd.f32 %v3802, %v3914
        %v3916 = vpop.f32.mrf.mxu0
        %3917 = vmatprep.mubr.bf16.mxu0 0
        %3918 = vmatmul.mubr.bf16.gmra.mxu0 %v3194
        %v3919 = vpop.f32.mrf.mxu0
        %v3920 = vadd.f32 %v3807, %v3919
        %v3921 = vpop.f32.mrf.mxu0
        %v3922 = vpop.f32.mrf.mxu0
        %v3923 = vadd.f32 %v3810, %v3922
        %v3924 = vpop.f32.mrf.mxu0
        %3925 = vmatprep.mubr.bf16.mxu0 0
        %3926 = vmatmul.mubr.bf16.gmra.mxu0 %v3195
        %v3927 = vpop.f32.mrf.mxu0
        %v3928 = vadd.f32 %v3815, %v3927
        %v3929 = vpop.f32.mrf.mxu0
        %v3930 = vpop.f32.mrf.mxu0
        %v3931 = vadd.f32 %v3818, %v3930
        %v3932 = vpop.f32.mrf.mxu0
        %3933 = vmatprep.mubr.bf16.mxu0 0
        %3934 = vmatmul.mubr.bf16.gmra.mxu0 %v3196
        %v3935 = vpop.f32.mrf.mxu0
        %v3936 = vadd.f32 %v3823, %v3935
        %v3937 = vpop.f32.mrf.mxu0
        %v3938 = vpop.f32.mrf.mxu0
        %v3939 = vadd.f32 %v3826, %v3938
        %v3940 = vpop.f32.mrf.mxu0
        %3941 = vdwg.mxu0
        %s3942 = scalar_lea.vmem %s8, 128
        %v3943 = vld [vmem:[%s3942] sm:$0xf]
        %v3944 = vld [vmem:[%s3942 + $0x4] sm:$0xf]
        %v3945 = vld [vmem:[%s3942 + $0x8] sm:$0xf]
        %v3946 = vld [vmem:[%s3942 + $0xc] sm:$0xf]
        %v3947 = vld [vmem:[%s3942 + $0x10] sm:$0xf]
        %v3948 = vld [vmem:[%s3942 + $0x14] sm:$0xf]
        %v3949 = vld [vmem:[%s3942 + $0x18] sm:$0xf]
        %v3950 = vld [vmem:[%s3942 + $0x1c] sm:$0xf]
        %v3951 = vld [vmem:[%s3942 + $0x20] sm:$0xf]
        %v3952 = vld [vmem:[%s3942 + $0x24] sm:$0xf]
        %v3953 = vld [vmem:[%s3942 + $0x28] sm:$0xf]
        %v3954 = vld [vmem:[%s3942 + $0x2c] sm:$0xf]
        %v3955 = vld [vmem:[%s3942 + $0x30] sm:$0xf]
        %v3956 = vld [vmem:[%s3942 + $0x34] sm:$0xf]
        %v3957 = vld [vmem:[%s3942 + $0x38] sm:$0xf]
        %v3958 = vld [vmem:[%s3942 + $0x3c] sm:$0xf]
        %s3959 = scalar_lea.vmem %s9, 2
        %v3960 = vld [vmem:[%s3959] sm:$0x1]
        %v3962 = vlaneseq
        %v3963 = vshrl.u32 %v3962, 7
        %v3964 = vsub.s32 0, %v3963
        %v3965 = vrot.slane %v3960, %v3964
        %v3983 = vunpack.c.l.b16 %v3943
        %v3984 = vunpack.c.l.b16 %v3944
        %v3985 = vunpack.c.l.b16 %v3945
        %v3986 = vunpack.c.l.b16 %v3946
        %v3987 = vunpack.c.l.b16 %v3947
        %v3988 = vunpack.c.l.b16 %v3948
        %v3989 = vunpack.c.l.b16 %v3949
        %v3990 = vunpack.c.l.b16 %v3950
        %v3991 = vunpack.c.l.b16 %v3951
        %v3992 = vunpack.c.l.b16 %v3952
        %v3993 = vunpack.c.l.b16 %v3953
        %v3994 = vunpack.c.l.b16 %v3954
        %v3995 = vunpack.c.l.b16 %v3955
        %v3996 = vunpack.c.l.b16 %v3956
        %v3997 = vunpack.c.l.b16 %v3957
        %v3998 = vunpack.c.l.b16 %v3958
        %v3999 = vpack.c.b16 %v3984, %v3983
        %v4000 = vpack.c.b16 %v3986, %v3985
        %v4001 = vpack.c.b16 %v3988, %v3987
        %v4002 = vpack.c.b16 %v3990, %v3989
        %v4003 = vpack.c.b16 %v3992, %v3991
        %v4004 = vpack.c.b16 %v3994, %v3993
        %v4005 = vpack.c.b16 %v3996, %v3995
        %v4006 = vpack.c.b16 %v3998, %v3997
        %4015 = vmatprep.subr.bf16.mxu0 0
        %4016 = vmatpush1.bf16.msra.mxu0 %v4006
        %4017 = vmatprep.subr.bf16.mxu0 0
        %4018 = vmatpush1.bf16.msra.mxu0 %v4005
        %4019 = vmatprep.subr.bf16.mxu0 0
        %4020 = vmatpush1.bf16.msra.mxu0 %v4004
        %4021 = vmatprep.subr.bf16.mxu0 0
        %4022 = vmatpush1.bf16.msra.mxu0 %v4003
        %4023 = vmatprep.subr.bf16.mxu0 0
        %4024 = vmatpush1.bf16.msra.mxu0 %v4002
        %4025 = vmatprep.subr.bf16.mxu0 0
        %4026 = vmatpush1.bf16.msra.mxu0 %v4001
        %4027 = vmatprep.subr.bf16.mxu0 0
        %4028 = vmatpush1.bf16.msra.mxu0 %v4000
        %4029 = vmatprep.subr.bf16.mxu0 0
        %4030 = vmatpush1.bf16.msra.mxu0 %v3999
        %4031 = vmatprep.subr.bf16.mxu0 0
        %4032 = vmatpush2.bf16.msra.mxu0 0
        %4033 = vmatprep.subr.bf16.mxu0 0
        %4034 = vmatpush2.bf16.msra.mxu0 0
        %4035 = vmatprep.subr.bf16.mxu0 0
        %4036 = vmatpush2.bf16.msra.mxu0 0
        %4037 = vmatprep.subr.bf16.mxu0 0
        %4038 = vmatpush2.bf16.msra.mxu0 0
        %4039 = vmatprep.subr.bf16.mxu0 0
        %4040 = vmatpush2.bf16.msra.mxu0 0
        %4041 = vmatprep.subr.bf16.mxu0 0
        %4042 = vmatpush2.bf16.msra.mxu0 0
        %4043 = vmatprep.subr.bf16.mxu0 0
        %4044 = vmatpush2.bf16.msra.mxu0 0
        %4045 = vmatprep.subr.bf16.mxu0 0
        %4046 = vmatpush2.bf16.msra.mxu0 0
        %4047 = vmatprep.mubr.bf16.mxu0 0
        %4048 = vmatmul.mubr.bf16.gmra.mxu0 %v2511
        %v4049 = vpop.f32.mrf.mxu0
        %v4050 = vadd.f32 %v3965, %v4049
        %v4051 = vpop.f32.mrf.mxu0
        %v4052 = vpop.f32.mrf.mxu0
        %v4053 = vadd.f32 %v3965, %v4052
        %v4054 = vpop.f32.mrf.mxu0
        %4055 = vmatprep.mubr.bf16.mxu0 0
        %4056 = vmatmul.mubr.bf16.gmra.mxu0 %v2512
        %v4057 = vpop.f32.mrf.mxu0
        %v4058 = vadd.f32 %v3965, %v4057
        %v4059 = vpop.f32.mrf.mxu0
        %v4060 = vpop.f32.mrf.mxu0
        %v4061 = vadd.f32 %v3965, %v4060
        %v4062 = vpop.f32.mrf.mxu0
        %4063 = vmatprep.mubr.bf16.mxu0 0
        %4064 = vmatmul.mubr.bf16.gmra.mxu0 %v2513
        %v4065 = vpop.f32.mrf.mxu0
        %v4066 = vadd.f32 %v3965, %v4065
        %v4067 = vpop.f32.mrf.mxu0
        %v4068 = vpop.f32.mrf.mxu0
        %v4069 = vadd.f32 %v3965, %v4068
        %v4070 = vpop.f32.mrf.mxu0
        %4071 = vmatprep.mubr.bf16.mxu0 0
        %4072 = vmatmul.mubr.bf16.gmra.mxu0 %v2514
        %v4073 = vpop.f32.mrf.mxu0
        %v4074 = vadd.f32 %v3965, %v4073
        %v4075 = vpop.f32.mrf.mxu0
        %v4076 = vpop.f32.mrf.mxu0
        %v4077 = vadd.f32 %v3965, %v4076
        %v4078 = vpop.f32.mrf.mxu0
        %4079 = vdwg.mxu0
        %v4080 = vrot.slane %v4050, 7
        %v4081 = vrot.slane %v4053, 7
        %v4082 = vrot.slane %v4058, 7
        %v4083 = vrot.slane %v4061, 7
        %v4084 = vrot.slane %v4066, 7
        %v4085 = vrot.slane %v4069, 7
        %v4086 = vrot.slane %v4074, 7
        %v4087 = vrot.slane %v4077, 7
        %v4088 = vsel %vm2696, %v4086, %v4087
        %v4089 = vsel %vm2696, %v4085, %v4086
        %v4090 = vsel %vm2696, %v4084, %v4085
        %v4091 = vsel %vm2696, %v4083, %v4084
        %v4092 = vsel %vm2696, %v4082, %v4083
        %v4093 = vsel %vm2696, %v4081, %v4082
        %v4094 = vsel %vm2696, %v4080, %v4081
        %v4095 = vsel %vm2696, %v4087, %v4080
        %v4096 = vmul.f32 %v4095, %v2708
        %v4097 = vmul.f32 %v4094, %v2713
        %v4098 = vmul.f32 %v4093, %v2718
        %v4099 = vmul.f32 %v4092, %v2723
        %v4100 = vmul.f32 %v4091, %v2728
        %v4101 = vmul.f32 %v4090, %v2733
        %v4102 = vmul.f32 %v4089, %v2738
        %v4103 = vmul.f32 %v4088, %v2743
        %v4104 = vrot.slane %v4050, 1
        %v4105 = vrot.slane %v4053, 1
        %v4106 = vrot.slane %v4058, 1
        %v4107 = vrot.slane %v4061, 1
        %v4108 = vrot.slane %v4066, 1
        %v4109 = vrot.slane %v4069, 1
        %v4110 = vrot.slane %v4074, 1
        %v4111 = vrot.slane %v4077, 1
        %v4112 = vsel %vm2761, %v4110, %v4111
        %v4113 = vsel %vm2761, %v4109, %v4110
        %v4114 = vsel %vm2761, %v4108, %v4109
        %v4115 = vsel %vm2761, %v4107, %v4108
        %v4116 = vsel %vm2761, %v4106, %v4107
        %v4117 = vsel %vm2761, %v4105, %v4106
        %v4118 = vsel %vm2761, %v4104, %v4105
        %v4119 = vsel %vm2761, %v4111, %v4104
        %v4120 = vmul.f32 %v4118, %v2773
        %v4121 = vmul.f32 %v4117, %v2778
        %v4122 = vmul.f32 %v4116, %v2783
        %v4123 = vmul.f32 %v4115, %v2788
        %v4124 = vmul.f32 %v4114, %v2793
        %v4125 = vmul.f32 %v4113, %v2798
        %v4126 = vmul.f32 %v4112, %v2803
        %v4127 = vmul.f32 %v4119, %v2808
        %s4128 = scalar_lea.vmem [#allocation8], 18
        %v4129 = vld [vmem:[%s4128] sm:$0x1]
        %s4130 = scalar_lea.vmem [#allocation8], 19
        %v4131 = vld [vmem:[%s4130] sm:$0x1]
        %s4132 = scalar_lea.vmem [#allocation8], 20
        %v4133 = vld [vmem:[%s4132] sm:$0x1]
        %s4134 = scalar_lea.vmem [#allocation8], 21
        %v4135 = vld [vmem:[%s4134] sm:$0x1]
        %s4136 = scalar_lea.vmem [#allocation8], 22
        %v4137 = vld [vmem:[%s4136] sm:$0x1]
        %s4138 = scalar_lea.vmem [#allocation8], 23
        %v4139 = vld [vmem:[%s4138] sm:$0x1]
        %s4140 = scalar_lea.vmem [#allocation8], 24
        %v4141 = vld [vmem:[%s4140] sm:$0x1]
        %s4142 = scalar_lea.vmem [#allocation8], 25
        %v4143 = vld [vmem:[%s4142] sm:$0x1]
        %s4144 = scalar_lea.vmem [#allocation8], 26
        %v4145 = vld [vmem:[%s4144] sm:$0x1]
        %v4147 = vlaneseq
        %v4148 = vshrl.u32 %v4147, 7
        %v4149 = vsub.s32 0, %v4148
        %v4150 = vrot.slane %v4129, %v4149
        %v4152 = vmul.f32 %v4103, %v4150
        %v4153 = vmul.f32 %v4096, %v4150
        %v4154 = vmul.f32 %v4097, %v4150
        %v4155 = vmul.f32 %v4098, %v4150
        %v4156 = vmul.f32 %v4099, %v4150
        %v4157 = vmul.f32 %v4100, %v4150
        %v4158 = vmul.f32 %v4101, %v4150
        %v4159 = vmul.f32 %v4102, %v4150
        %v4161 = vlaneseq
        %v4162 = vshrl.u32 %v4161, 7
        %v4163 = vsub.s32 0, %v4162
        %v4164 = vrot.slane %v4131, %v4163
        %v4166 = vmul.f32 %v4077, %v4164
        %v4167 = vmul.f32 %v4050, %v4164
        %v4168 = vmul.f32 %v4053, %v4164
        %v4169 = vmul.f32 %v4058, %v4164
        %v4170 = vmul.f32 %v4061, %v4164
        %v4171 = vmul.f32 %v4066, %v4164
        %v4172 = vmul.f32 %v4069, %v4164
        %v4173 = vmul.f32 %v4074, %v4164
        %v4174 = vadd.f32 %v4152, %v4166
        %v4175 = vadd.f32 %v4153, %v4167
        %v4176 = vadd.f32 %v4154, %v4168
        %v4177 = vadd.f32 %v4155, %v4169
        %v4178 = vadd.f32 %v4156, %v4170
        %v4179 = vadd.f32 %v4157, %v4171
        %v4180 = vadd.f32 %v4158, %v4172
        %v4181 = vadd.f32 %v4159, %v4173
        %v4183 = vlaneseq
        %v4184 = vshrl.u32 %v4183, 7
        %v4185 = vsub.s32 0, %v4184
        %v4186 = vrot.slane %v4133, %v4185
        %v4188 = vmul.f32 %v4127, %v4186
        %v4189 = vmul.f32 %v4120, %v4186
        %v4190 = vmul.f32 %v4121, %v4186
        %v4191 = vmul.f32 %v4122, %v4186
        %v4192 = vmul.f32 %v4123, %v4186
        %v4193 = vmul.f32 %v4124, %v4186
        %v4194 = vmul.f32 %v4125, %v4186
        %v4195 = vmul.f32 %v4126, %v4186
        %v4196 = vadd.f32 %v4174, %v4188
        %v4197 = vadd.f32 %v4175, %v4189
        %v4198 = vadd.f32 %v4176, %v4190
        %v4199 = vadd.f32 %v4177, %v4191
        %v4200 = vadd.f32 %v4178, %v4192
        %v4201 = vadd.f32 %v4179, %v4193
        %v4202 = vadd.f32 %v4180, %v4194
        %v4203 = vadd.f32 %v4181, %v4195
        %v4204 = vmul.f32 %v4196, %v2896
        %v4205 = vmul.f32 %v4197, %v2901
        %v4206 = vmul.f32 %v4198, %v2906
        %v4207 = vmul.f32 %v4199, %v2911
        %v4208 = vmul.f32 %v4200, %v2916
        %v4209 = vmul.f32 %v4201, %v2921
        %v4210 = vmul.f32 %v4202, %v2926
        %v4211 = vmul.f32 %v4203, %v2931
        %v4213 = vlaneseq
        %v4214 = vshrl.u32 %v4213, 7
        %v4215 = vsub.s32 0, %v4214
        %v4216 = vrot.slane %v4135, %v4215
        %v4218 = vmul.f32 %v4096, %v4216
        %v4219 = vmul.f32 %v4097, %v4216
        %v4220 = vmul.f32 %v4098, %v4216
        %v4221 = vmul.f32 %v4099, %v4216
        %v4222 = vmul.f32 %v4100, %v4216
        %v4223 = vmul.f32 %v4101, %v4216
        %v4224 = vmul.f32 %v4102, %v4216
        %v4225 = vmul.f32 %v4103, %v4216
        %v4227 = vlaneseq
        %v4228 = vshrl.u32 %v4227, 7
        %v4229 = vsub.s32 0, %v4228
        %v4230 = vrot.slane %v4137, %v4229
        %v4232 = vmul.f32 %v4050, %v4230
        %v4233 = vmul.f32 %v4053, %v4230
        %v4234 = vmul.f32 %v4058, %v4230
        %v4235 = vmul.f32 %v4061, %v4230
        %v4236 = vmul.f32 %v4066, %v4230
        %v4237 = vmul.f32 %v4069, %v4230
        %v4238 = vmul.f32 %v4074, %v4230
        %v4239 = vmul.f32 %v4077, %v4230
        %v4240 = vadd.f32 %v4218, %v4232
        %v4241 = vadd.f32 %v4219, %v4233
        %v4242 = vadd.f32 %v4220, %v4234
        %v4243 = vadd.f32 %v4221, %v4235
        %v4244 = vadd.f32 %v4222, %v4236
        %v4245 = vadd.f32 %v4223, %v4237
        %v4246 = vadd.f32 %v4224, %v4238
        %v4247 = vadd.f32 %v4225, %v4239
        %v4249 = vlaneseq
        %v4250 = vshrl.u32 %v4249, 7
        %v4251 = vsub.s32 0, %v4250
        %v4252 = vrot.slane %v4139, %v4251
        %v4254 = vmul.f32 %v4120, %v4252
        %v4255 = vmul.f32 %v4121, %v4252
        %v4256 = vmul.f32 %v4122, %v4252
        %v4257 = vmul.f32 %v4123, %v4252
        %v4258 = vmul.f32 %v4124, %v4252
        %v4259 = vmul.f32 %v4125, %v4252
        %v4260 = vmul.f32 %v4126, %v4252
        %v4261 = vmul.f32 %v4127, %v4252
        %v4262 = vadd.f32 %v4240, %v4254
        %v4263 = vadd.f32 %v4241, %v4255
        %v4264 = vadd.f32 %v4242, %v4256
        %v4265 = vadd.f32 %v4243, %v4257
        %v4266 = vadd.f32 %v4244, %v4258
        %v4267 = vadd.f32 %v4245, %v4259
        %v4268 = vadd.f32 %v4246, %v4260
        %v4269 = vadd.f32 %v4247, %v4261
        %v4271 = vlaneseq
        %v4272 = vshrl.u32 %v4271, 7
        %v4273 = vsub.s32 0, %v4272
        %v4274 = vrot.slane %v4141, %v4273
        %v4276 = vmul.f32 %v4097, %v4274
        %v4277 = vmul.f32 %v4098, %v4274
        %v4278 = vmul.f32 %v4099, %v4274
        %v4279 = vmul.f32 %v4100, %v4274
        %v4280 = vmul.f32 %v4101, %v4274
        %v4281 = vmul.f32 %v4102, %v4274
        %v4282 = vmul.f32 %v4103, %v4274
        %v4283 = vmul.f32 %v4096, %v4274
        %v4285 = vlaneseq
        %v4286 = vshrl.u32 %v4285, 7
        %v4287 = vsub.s32 0, %v4286
        %v4288 = vrot.slane %v4143, %v4287
        %v4290 = vmul.f32 %v4053, %v4288
        %v4291 = vmul.f32 %v4058, %v4288
        %v4292 = vmul.f32 %v4061, %v4288
        %v4293 = vmul.f32 %v4066, %v4288
        %v4294 = vmul.f32 %v4069, %v4288
        %v4295 = vmul.f32 %v4074, %v4288
        %v4296 = vmul.f32 %v4077, %v4288
        %v4297 = vmul.f32 %v4050, %v4288
        %v4298 = vadd.f32 %v4276, %v4290
        %v4299 = vadd.f32 %v4277, %v4291
        %v4300 = vadd.f32 %v4278, %v4292
        %v4301 = vadd.f32 %v4279, %v4293
        %v4302 = vadd.f32 %v4280, %v4294
        %v4303 = vadd.f32 %v4281, %v4295
        %v4304 = vadd.f32 %v4282, %v4296
        %v4305 = vadd.f32 %v4283, %v4297
        %v4307 = vlaneseq
        %v4308 = vshrl.u32 %v4307, 7
        %v4309 = vsub.s32 0, %v4308
        %v4310 = vrot.slane %v4145, %v4309
        %v4312 = vmul.f32 %v4121, %v4310
        %v4313 = vmul.f32 %v4122, %v4310
        %v4314 = vmul.f32 %v4123, %v4310
        %v4315 = vmul.f32 %v4124, %v4310
        %v4316 = vmul.f32 %v4125, %v4310
        %v4317 = vmul.f32 %v4126, %v4310
        %v4318 = vmul.f32 %v4127, %v4310
        %v4319 = vmul.f32 %v4120, %v4310
        %v4320 = vadd.f32 %v4298, %v4312
        %v4321 = vadd.f32 %v4299, %v4313
        %v4322 = vadd.f32 %v4300, %v4314
        %v4323 = vadd.f32 %v4301, %v4315
        %v4324 = vadd.f32 %v4302, %v4316
        %v4325 = vadd.f32 %v4303, %v4317
        %v4326 = vadd.f32 %v4304, %v4318
        %v4327 = vadd.f32 %v4305, %v4319
        %v4328 = vmul.f32 %v4320, %v3060
        %v4329 = vmul.f32 %v4321, %v3065
        %v4330 = vmul.f32 %v4322, %v3070
        %v4331 = vmul.f32 %v4323, %v3075
        %v4332 = vmul.f32 %v4324, %v3080
        %v4333 = vmul.f32 %v4325, %v3085
        %v4334 = vmul.f32 %v4326, %v3090
        %v4335 = vmul.f32 %v4327, %v3095
        %v4336 = vadd.f32 %v4204, %v4262
        %v4337 = vadd.f32 %v4205, %v4263
        %v4338 = vadd.f32 %v4206, %v4264
        %v4339 = vadd.f32 %v4207, %v4265
        %v4340 = vadd.f32 %v4208, %v4266
        %v4341 = vadd.f32 %v4209, %v4267
        %v4342 = vadd.f32 %v4210, %v4268
        %v4343 = vadd.f32 %v4211, %v4269
        %v4344 = vadd.f32 %v4336, %v4328
        %v4345 = vadd.f32 %v4337, %v4329
        %v4346 = vadd.f32 %v4338, %v4330
        %v4347 = vadd.f32 %v4339, %v4331
        %v4348 = vadd.f32 %v4340, %v4332
        %v4349 = vadd.f32 %v4341, %v4333
        %v4350 = vadd.f32 %v4342, %v4334
        %v4351 = vadd.f32 %v4343, %v4335
        %v4352 = vmul.f32 %v4344, 0.5
        %v4353 = vmul.f32 %v4345, 0.5
        %v4354 = vmul.f32 %v4346, 0.5
        %v4355 = vmul.f32 %v4347, 0.5
        %v4356 = vmul.f32 %v4348, 0.5
        %v4357 = vmul.f32 %v4349, 0.5
        %v4358 = vmul.f32 %v4350, 0.5
        %v4359 = vmul.f32 %v4351, 0.5
        %v4360 = vmul.f32 %v4344, 0.044715
        %v4361 = vmul.f32 %v4345, 0.044715
        %v4362 = vmul.f32 %v4346, 0.044715
        %v4363 = vmul.f32 %v4347, 0.044715
        %v4364 = vmul.f32 %v4348, 0.044715
        %v4365 = vmul.f32 %v4349, 0.044715
        %v4366 = vmul.f32 %v4350, 0.044715
        %v4367 = vmul.f32 %v4351, 0.044715
        %v4368 = vmul.f32 %v4360, %v4344
        %v4369 = vmul.f32 %v4361, %v4345
        %v4370 = vmul.f32 %v4362, %v4346
        %v4371 = vmul.f32 %v4363, %v4347
        %v4372 = vmul.f32 %v4364, %v4348
        %v4373 = vmul.f32 %v4365, %v4349
        %v4374 = vmul.f32 %v4366, %v4350
        %v4375 = vmul.f32 %v4367, %v4351
        %v4376 = vmul.f32 %v4368, %v4344
        %v4377 = vmul.f32 %v4369, %v4345
        %v4378 = vmul.f32 %v4370, %v4346
        %v4379 = vmul.f32 %v4371, %v4347
        %v4380 = vmul.f32 %v4372, %v4348
        %v4381 = vmul.f32 %v4373, %v4349
        %v4382 = vmul.f32 %v4374, %v4350
        %v4383 = vmul.f32 %v4375, %v4351
        %v4384 = vadd.f32 %v4344, %v4376
        %v4385 = vadd.f32 %v4345, %v4377
        %v4386 = vadd.f32 %v4346, %v4378
        %v4387 = vadd.f32 %v4347, %v4379
        %v4388 = vadd.f32 %v4348, %v4380
        %v4389 = vadd.f32 %v4349, %v4381
        %v4390 = vadd.f32 %v4350, %v4382
        %v4391 = vadd.f32 %v4351, %v4383
        %v4392 = vmul.f32 %v4384, 0.7978846
        %v4393 = vmul.f32 %v4385, 0.7978846
        %v4394 = vmul.f32 %v4386, 0.7978846
        %v4395 = vmul.f32 %v4387, 0.7978846
        %v4396 = vmul.f32 %v4388, 0.7978846
        %v4397 = vmul.f32 %v4389, 0.7978846
        %v4398 = vmul.f32 %v4390, 0.7978846
        %v4399 = vmul.f32 %v4391, 0.7978846
        %v4400 = vtanh.pop %v4392
        %v4401 = vtanh.pop %v4393
        %v4402 = vtanh.pop %v4394
        %v4403 = vtanh.pop %v4395
        %v4404 = vtanh.pop %v4396
        %v4405 = vtanh.pop %v4397
        %v4406 = vtanh.pop %v4398
        %v4407 = vtanh.pop %v4399
        %v4408 = vadd.f32 %v4400, 1.0
        %v4409 = vadd.f32 %v4401, 1.0
        %v4410 = vadd.f32 %v4402, 1.0
        %v4411 = vadd.f32 %v4403, 1.0
        %v4412 = vadd.f32 %v4404, 1.0
        %v4413 = vadd.f32 %v4405, 1.0
        %v4414 = vadd.f32 %v4406, 1.0
        %v4415 = vadd.f32 %v4407, 1.0
        %v4416 = vmul.f32 %v4352, %v4408
        %v4417 = vmul.f32 %v4353, %v4409
        %v4418 = vmul.f32 %v4354, %v4410
        %v4419 = vmul.f32 %v4355, %v4411
        %v4420 = vmul.f32 %v4356, %v4412
        %v4421 = vmul.f32 %v4357, %v4413
        %v4422 = vmul.f32 %v4358, %v4414
        %v4423 = vmul.f32 %v4359, %v4415
        %v4424 = vpack.c.bf16 %v4417, %v4416
        %v4425 = vpack.c.bf16 %v4419, %v4418
        %v4426 = vpack.c.bf16 %v4421, %v4420
        %v4427 = vpack.c.bf16 %v4423, %v4422
        %s4428 = scalar_lea.vmem [#allocation10], 128
        %v4429 = vld [vmem:[%s4428] sm:$0xf]
        %v4430 = vld [vmem:[%s4428 + $0x4] sm:$0xf]
        %v4431 = vld [vmem:[%s4428 + $0x8] sm:$0xf]
        %v4432 = vld [vmem:[%s4428 + $0xc] sm:$0xf]
        %v4433 = vld [vmem:[%s4428 + $0x10] sm:$0xf]
        %v4434 = vld [vmem:[%s4428 + $0x14] sm:$0xf]
        %v4435 = vld [vmem:[%s4428 + $0x18] sm:$0xf]
        %v4436 = vld [vmem:[%s4428 + $0x1c] sm:$0xf]
        %v4437 = vld [vmem:[%s4428 + $0x20] sm:$0xf]
        %v4438 = vld [vmem:[%s4428 + $0x24] sm:$0xf]
        %v4439 = vld [vmem:[%s4428 + $0x28] sm:$0xf]
        %v4440 = vld [vmem:[%s4428 + $0x2c] sm:$0xf]
        %v4441 = vld [vmem:[%s4428 + $0x30] sm:$0xf]
        %v4442 = vld [vmem:[%s4428 + $0x34] sm:$0xf]
        %v4443 = vld [vmem:[%s4428 + $0x38] sm:$0xf]
        %v4444 = vld [vmem:[%s4428 + $0x3c] sm:$0xf]
        %v4461 = vunpack.c.l.b16 %v4429
        %v4462 = vunpack.c.l.b16 %v4430
        %v4463 = vunpack.c.l.b16 %v4431
        %v4464 = vunpack.c.l.b16 %v4432
        %v4465 = vunpack.c.l.b16 %v4433
        %v4466 = vunpack.c.l.b16 %v4434
        %v4467 = vunpack.c.l.b16 %v4435
        %v4468 = vunpack.c.l.b16 %v4436
        %v4469 = vunpack.c.l.b16 %v4437
        %v4470 = vunpack.c.l.b16 %v4438
        %v4471 = vunpack.c.l.b16 %v4439
        %v4472 = vunpack.c.l.b16 %v4440
        %v4473 = vunpack.c.l.b16 %v4441
        %v4474 = vunpack.c.l.b16 %v4442
        %v4475 = vunpack.c.l.b16 %v4443
        %v4476 = vunpack.c.l.b16 %v4444
        %v4477 = vpack.c.b16 %v4462, %v4461
        %v4478 = vpack.c.b16 %v4464, %v4463
        %v4479 = vpack.c.b16 %v4466, %v4465
        %v4480 = vpack.c.b16 %v4468, %v4467
        %v4481 = vpack.c.b16 %v4470, %v4469
        %v4482 = vpack.c.b16 %v4472, %v4471
        %v4483 = vpack.c.b16 %v4474, %v4473
        %v4484 = vpack.c.b16 %v4476, %v4475
        %4493 = vmatprep.subr.bf16.mxu0 0
        %4494 = vmatpush1.bf16.msra.mxu0 %v4484
        %4495 = vmatprep.subr.bf16.mxu0 0
        %4496 = vmatpush1.bf16.msra.mxu0 %v4483
        %4497 = vmatprep.subr.bf16.mxu0 0
        %4498 = vmatpush1.bf16.msra.mxu0 %v4482
        %4499 = vmatprep.subr.bf16.mxu0 0
        %4500 = vmatpush1.bf16.msra.mxu0 %v4481
        %4501 = vmatprep.subr.bf16.mxu0 0
        %4502 = vmatpush1.bf16.msra.mxu0 %v4480
        %4503 = vmatprep.subr.bf16.mxu0 0
        %4504 = vmatpush1.bf16.msra.mxu0 %v4479
        %4505 = vmatprep.subr.bf16.mxu0 0
        %4506 = vmatpush1.bf16.msra.mxu0 %v4478
        %4507 = vmatprep.subr.bf16.mxu0 0
        %4508 = vmatpush1.bf16.msra.mxu0 %v4477
        %4509 = vmatprep.subr.bf16.mxu0 0
        %4510 = vmatpush2.bf16.msra.mxu0 0
        %4511 = vmatprep.subr.bf16.mxu0 0
        %4512 = vmatpush2.bf16.msra.mxu0 0
        %4513 = vmatprep.subr.bf16.mxu0 0
        %4514 = vmatpush2.bf16.msra.mxu0 0
        %4515 = vmatprep.subr.bf16.mxu0 0
        %4516 = vmatpush2.bf16.msra.mxu0 0
        %4517 = vmatprep.subr.bf16.mxu0 0
        %4518 = vmatpush2.bf16.msra.mxu0 0
        %4519 = vmatprep.subr.bf16.mxu0 0
        %4520 = vmatpush2.bf16.msra.mxu0 0
        %4521 = vmatprep.subr.bf16.mxu0 0
        %4522 = vmatpush2.bf16.msra.mxu0 0
        %4523 = vmatprep.subr.bf16.mxu0 0
        %4524 = vmatpush2.bf16.msra.mxu0 0
        %4525 = vmatprep.mubr.bf16.mxu0 0
        %4526 = vmatmul.mubr.bf16.gmra.mxu0 %v4424
        %v4527 = vpop.f32.mrf.mxu0
        %v4528 = vadd.f32 0.0, %v4527
        %v4529 = vpop.f32.mrf.mxu0
        %v4530 = vpop.f32.mrf.mxu0
        %v4531 = vadd.f32 0.0, %v4530
        %v4532 = vpop.f32.mrf.mxu0
        %4533 = vmatprep.mubr.bf16.mxu0 0
        %4534 = vmatmul.mubr.bf16.gmra.mxu0 %v4425
        %v4535 = vpop.f32.mrf.mxu0
        %v4536 = vadd.f32 0.0, %v4535
        %v4537 = vpop.f32.mrf.mxu0
        %v4538 = vpop.f32.mrf.mxu0
        %v4539 = vadd.f32 0.0, %v4538
        %v4540 = vpop.f32.mrf.mxu0
        %4541 = vmatprep.mubr.bf16.mxu0 0
        %4542 = vmatmul.mubr.bf16.gmra.mxu0 %v4426
        %v4543 = vpop.f32.mrf.mxu0
        %v4544 = vadd.f32 0.0, %v4543
        %v4545 = vpop.f32.mrf.mxu0
        %v4546 = vpop.f32.mrf.mxu0
        %v4547 = vadd.f32 0.0, %v4546
        %v4548 = vpop.f32.mrf.mxu0
        %4549 = vmatprep.mubr.bf16.mxu0 0
        %4550 = vmatmul.mubr.bf16.gmra.mxu0 %v4427
        %v4551 = vpop.f32.mrf.mxu0
        %v4552 = vadd.f32 0.0, %v4551
        %v4553 = vpop.f32.mrf.mxu0
        %v4554 = vpop.f32.mrf.mxu0
        %v4555 = vadd.f32 0.0, %v4554
        %v4556 = vpop.f32.mrf.mxu0
        %4557 = vdwg.mxu0
        %v4558 = vadd.f32 %v3912, %v4528
        %v4559 = vadd.f32 %v3915, %v4531
        %v4560 = vadd.f32 %v3920, %v4536
        %v4561 = vadd.f32 %v3923, %v4539
        %v4562 = vadd.f32 %v3928, %v4544
        %v4563 = vadd.f32 %v3931, %v4547
        %v4564 = vadd.f32 %v3936, %v4552
        %v4565 = vadd.f32 %v3939, %v4555
        %s4566 = scalar_lea.vmem %s8, 192
        %v4567 = vld [vmem:[%s4566] sm:$0xf]
        %v4568 = vld [vmem:[%s4566 + $0x4] sm:$0xf]
        %v4569 = vld [vmem:[%s4566 + $0x8] sm:$0xf]
        %v4570 = vld [vmem:[%s4566 + $0xc] sm:$0xf]
        %v4571 = vld [vmem:[%s4566 + $0x10] sm:$0xf]
        %v4572 = vld [vmem:[%s4566 + $0x14] sm:$0xf]
        %v4573 = vld [vmem:[%s4566 + $0x18] sm:$0xf]
        %v4574 = vld [vmem:[%s4566 + $0x1c] sm:$0xf]
        %v4575 = vld [vmem:[%s4566 + $0x20] sm:$0xf]
        %v4576 = vld [vmem:[%s4566 + $0x24] sm:$0xf]
        %v4577 = vld [vmem:[%s4566 + $0x28] sm:$0xf]
        %v4578 = vld [vmem:[%s4566 + $0x2c] sm:$0xf]
        %v4579 = vld [vmem:[%s4566 + $0x30] sm:$0xf]
        %v4580 = vld [vmem:[%s4566 + $0x34] sm:$0xf]
        %v4581 = vld [vmem:[%s4566 + $0x38] sm:$0xf]
        %v4582 = vld [vmem:[%s4566 + $0x3c] sm:$0xf]
        %s4583 = scalar_lea.vmem %s9, 3
        %v4584 = vld [vmem:[%s4583] sm:$0x1]
        %v4586 = vlaneseq
        %v4587 = vshrl.u32 %v4586, 7
        %v4588 = vsub.s32 0, %v4587
        %v4589 = vrot.slane %v4584, %v4588
        %v4607 = vunpack.c.l.b16 %v4567
        %v4608 = vunpack.c.l.b16 %v4568
        %v4609 = vunpack.c.l.b16 %v4569
        %v4610 = vunpack.c.l.b16 %v4570
        %v4611 = vunpack.c.l.b16 %v4571
        %v4612 = vunpack.c.l.b16 %v4572
        %v4613 = vunpack.c.l.b16 %v4573
        %v4614 = vunpack.c.l.b16 %v4574
        %v4615 = vunpack.c.l.b16 %v4575
        %v4616 = vunpack.c.l.b16 %v4576
        %v4617 = vunpack.c.l.b16 %v4577
        %v4618 = vunpack.c.l.b16 %v4578
        %v4619 = vunpack.c.l.b16 %v4579
        %v4620 = vunpack.c.l.b16 %v4580
        %v4621 = vunpack.c.l.b16 %v4581
        %v4622 = vunpack.c.l.b16 %v4582
        %v4623 = vpack.c.b16 %v4608, %v4607
        %v4624 = vpack.c.b16 %v4610, %v4609
        %v4625 = vpack.c.b16 %v4612, %v4611
        %v4626 = vpack.c.b16 %v4614, %v4613
        %v4627 = vpack.c.b16 %v4616, %v4615
        %v4628 = vpack.c.b16 %v4618, %v4617
        %v4629 = vpack.c.b16 %v4620, %v4619
        %v4630 = vpack.c.b16 %v4622, %v4621
        %4639 = vmatprep.subr.bf16.mxu0 0
        %4640 = vmatpush1.bf16.msra.mxu0 %v4630
        %4641 = vmatprep.subr.bf16.mxu0 0
        %4642 = vmatpush1.bf16.msra.mxu0 %v4629
        %4643 = vmatprep.subr.bf16.mxu0 0
        %4644 = vmatpush1.bf16.msra.mxu0 %v4628
        %4645 = vmatprep.subr.bf16.mxu0 0
        %4646 = vmatpush1.bf16.msra.mxu0 %v4627
        %4647 = vmatprep.subr.bf16.mxu0 0
        %4648 = vmatpush1.bf16.msra.mxu0 %v4626
        %4649 = vmatprep.subr.bf16.mxu0 0
        %4650 = vmatpush1.bf16.msra.mxu0 %v4625
        %4651 = vmatprep.subr.bf16.mxu0 0
        %4652 = vmatpush1.bf16.msra.mxu0 %v4624
        %4653 = vmatprep.subr.bf16.mxu0 0
        %4654 = vmatpush1.bf16.msra.mxu0 %v4623
        %4655 = vmatprep.subr.bf16.mxu0 0
        %4656 = vmatpush2.bf16.msra.mxu0 0
        %4657 = vmatprep.subr.bf16.mxu0 0
        %4658 = vmatpush2.bf16.msra.mxu0 0
        %4659 = vmatprep.subr.bf16.mxu0 0
        %4660 = vmatpush2.bf16.msra.mxu0 0
        %4661 = vmatprep.subr.bf16.mxu0 0
        %4662 = vmatpush2.bf16.msra.mxu0 0
        %4663 = vmatprep.subr.bf16.mxu0 0
        %4664 = vmatpush2.bf16.msra.mxu0 0
        %4665 = vmatprep.subr.bf16.mxu0 0
        %4666 = vmatpush2.bf16.msra.mxu0 0
        %4667 = vmatprep.subr.bf16.mxu0 0
        %4668 = vmatpush2.bf16.msra.mxu0 0
        %4669 = vmatprep.subr.bf16.mxu0 0
        %4670 = vmatpush2.bf16.msra.mxu0 0
        %4671 = vmatprep.mubr.bf16.mxu0 0
        %4672 = vmatmul.mubr.bf16.gmra.mxu0 %v2511
        %v4673 = vpop.f32.mrf.mxu0
        %v4674 = vadd.f32 %v4589, %v4673
        %v4675 = vpop.f32.mrf.mxu0
        %v4676 = vpop.f32.mrf.mxu0
        %v4677 = vadd.f32 %v4589, %v4676
        %v4678 = vpop.f32.mrf.mxu0
        %4679 = vmatprep.mubr.bf16.mxu0 0
        %4680 = vmatmul.mubr.bf16.gmra.mxu0 %v2512
        %v4681 = vpop.f32.mrf.mxu0
        %v4682 = vadd.f32 %v4589, %v4681
        %v4683 = vpop.f32.mrf.mxu0
        %v4684 = vpop.f32.mrf.mxu0
        %v4685 = vadd.f32 %v4589, %v4684
        %v4686 = vpop.f32.mrf.mxu0
        %4687 = vmatprep.mubr.bf16.mxu0 0
        %4688 = vmatmul.mubr.bf16.gmra.mxu0 %v2513
        %v4689 = vpop.f32.mrf.mxu0
        %v4690 = vadd.f32 %v4589, %v4689
        %v4691 = vpop.f32.mrf.mxu0
        %v4692 = vpop.f32.mrf.mxu0
        %v4693 = vadd.f32 %v4589, %v4692
        %v4694 = vpop.f32.mrf.mxu0
        %4695 = vmatprep.mubr.bf16.mxu0 0
        %4696 = vmatmul.mubr.bf16.gmra.mxu0 %v2514
        %v4697 = vpop.f32.mrf.mxu0
        %v4698 = vadd.f32 %v4589, %v4697
        %v4699 = vpop.f32.mrf.mxu0
        %v4700 = vpop.f32.mrf.mxu0
        %v4701 = vadd.f32 %v4589, %v4700
        %v4702 = vpop.f32.mrf.mxu0
        %4703 = vdwg.mxu0
        %v4704 = vrot.slane %v4674, 7
        %v4705 = vrot.slane %v4677, 7
        %v4706 = vrot.slane %v4682, 7
        %v4707 = vrot.slane %v4685, 7
        %v4708 = vrot.slane %v4690, 7
        %v4709 = vrot.slane %v4693, 7
        %v4710 = vrot.slane %v4698, 7
        %v4711 = vrot.slane %v4701, 7
        %v4712 = vsel %vm2696, %v4710, %v4711
        %v4713 = vsel %vm2696, %v4709, %v4710
        %v4714 = vsel %vm2696, %v4708, %v4709
        %v4715 = vsel %vm2696, %v4707, %v4708
        %v4716 = vsel %vm2696, %v4706, %v4707
        %v4717 = vsel %vm2696, %v4705, %v4706
        %v4718 = vsel %vm2696, %v4704, %v4705
        %v4719 = vsel %vm2696, %v4711, %v4704
        %v4720 = vmul.f32 %v4719, %v2708
        %v4721 = vmul.f32 %v4718, %v2713
        %v4722 = vmul.f32 %v4717, %v2718
        %v4723 = vmul.f32 %v4716, %v2723
        %v4724 = vmul.f32 %v4715, %v2728
        %v4725 = vmul.f32 %v4714, %v2733
        %v4726 = vmul.f32 %v4713, %v2738
        %v4727 = vmul.f32 %v4712, %v2743
        %v4728 = vrot.slane %v4674, 1
        %v4729 = vrot.slane %v4677, 1
        %v4730 = vrot.slane %v4682, 1
        %v4731 = vrot.slane %v4685, 1
        %v4732 = vrot.slane %v4690, 1
        %v4733 = vrot.slane %v4693, 1
        %v4734 = vrot.slane %v4698, 1
        %v4735 = vrot.slane %v4701, 1
        %v4736 = vsel %vm2761, %v4734, %v4735
        %v4737 = vsel %vm2761, %v4733, %v4734
        %v4738 = vsel %vm2761, %v4732, %v4733
        %v4739 = vsel %vm2761, %v4731, %v4732
        %v4740 = vsel %vm2761, %v4730, %v4731
        %v4741 = vsel %vm2761, %v4729, %v4730
        %v4742 = vsel %vm2761, %v4728, %v4729
        %v4743 = vsel %vm2761, %v4735, %v4728
        %v4744 = vmul.f32 %v4742, %v2773
        %v4745 = vmul.f32 %v4741, %v2778
        %v4746 = vmul.f32 %v4740, %v2783
        %v4747 = vmul.f32 %v4739, %v2788
        %v4748 = vmul.f32 %v4738, %v2793
        %v4749 = vmul.f32 %v4737, %v2798
        %v4750 = vmul.f32 %v4736, %v2803
        %v4751 = vmul.f32 %v4743, %v2808
        %s4752 = scalar_lea.vmem [#allocation8], 27
        %v4753 = vld [vmem:[%s4752] sm:$0x1]
        %s4754 = scalar_lea.vmem [#allocation8], 28
        %v4755 = vld [vmem:[%s4754] sm:$0x1]
        %s4756 = scalar_lea.vmem [#allocation8], 29
        %v4757 = vld [vmem:[%s4756] sm:$0x1]
        %s4758 = scalar_lea.vmem [#allocation8], 30
        %v4759 = vld [vmem:[%s4758] sm:$0x1]
        %s4760 = scalar_lea.vmem [#allocation8], 31
        %v4761 = vld [vmem:[%s4760] sm:$0x1]
        %s4762 = scalar_lea.vmem [#allocation8], 32
        %v4763 = vld [vmem:[%s4762] sm:$0x1]
        %s4764 = scalar_lea.vmem [#allocation8], 33
        %v4765 = vld [vmem:[%s4764] sm:$0x1]
        %s4766 = scalar_lea.vmem [#allocation8], 34
        %v4767 = vld [vmem:[%s4766] sm:$0x1]
        %s4768 = scalar_lea.vmem [#allocation8], 35
        %v4769 = vld [vmem:[%s4768] sm:$0x1]
        %v4771 = vlaneseq
        %v4772 = vshrl.u32 %v4771, 7
        %v4773 = vsub.s32 0, %v4772
        %v4774 = vrot.slane %v4753, %v4773
        %v4776 = vmul.f32 %v4727, %v4774
        %v4777 = vmul.f32 %v4720, %v4774
        %v4778 = vmul.f32 %v4721, %v4774
        %v4779 = vmul.f32 %v4722, %v4774
        %v4780 = vmul.f32 %v4723, %v4774
        %v4781 = vmul.f32 %v4724, %v4774
        %v4782 = vmul.f32 %v4725, %v4774
        %v4783 = vmul.f32 %v4726, %v4774
        %v4785 = vlaneseq
        %v4786 = vshrl.u32 %v4785, 7
        %v4787 = vsub.s32 0, %v4786
        %v4788 = vrot.slane %v4755, %v4787
        %v4790 = vmul.f32 %v4701, %v4788
        %v4791 = vmul.f32 %v4674, %v4788
        %v4792 = vmul.f32 %v4677, %v4788
        %v4793 = vmul.f32 %v4682, %v4788
        %v4794 = vmul.f32 %v4685, %v4788
        %v4795 = vmul.f32 %v4690, %v4788
        %v4796 = vmul.f32 %v4693, %v4788
        %v4797 = vmul.f32 %v4698, %v4788
        %v4798 = vadd.f32 %v4776, %v4790
        %v4799 = vadd.f32 %v4777, %v4791
        %v4800 = vadd.f32 %v4778, %v4792
        %v4801 = vadd.f32 %v4779, %v4793
        %v4802 = vadd.f32 %v4780, %v4794
        %v4803 = vadd.f32 %v4781, %v4795
        %v4804 = vadd.f32 %v4782, %v4796
        %v4805 = vadd.f32 %v4783, %v4797
        %v4807 = vlaneseq
        %v4808 = vshrl.u32 %v4807, 7
        %v4809 = vsub.s32 0, %v4808
        %v4810 = vrot.slane %v4757, %v4809
        %v4812 = vmul.f32 %v4751, %v4810
        %v4813 = vmul.f32 %v4744, %v4810
        %v4814 = vmul.f32 %v4745, %v4810
        %v4815 = vmul.f32 %v4746, %v4810
        %v4816 = vmul.f32 %v4747, %v4810
        %v4817 = vmul.f32 %v4748, %v4810
        %v4818 = vmul.f32 %v4749, %v4810
        %v4819 = vmul.f32 %v4750, %v4810
        %v4820 = vadd.f32 %v4798, %v4812
        %v4821 = vadd.f32 %v4799, %v4813
        %v4822 = vadd.f32 %v4800, %v4814
        %v4823 = vadd.f32 %v4801, %v4815
        %v4824 = vadd.f32 %v4802, %v4816
        %v4825 = vadd.f32 %v4803, %v4817
        %v4826 = vadd.f32 %v4804, %v4818
        %v4827 = vadd.f32 %v4805, %v4819
        %v4828 = vmul.f32 %v4820, %v2896
        %v4829 = vmul.f32 %v4821, %v2901
        %v4830 = vmul.f32 %v4822, %v2906
        %v4831 = vmul.f32 %v4823, %v2911
        %v4832 = vmul.f32 %v4824, %v2916
        %v4833 = vmul.f32 %v4825, %v2921
        %v4834 = vmul.f32 %v4826, %v2926
        %v4835 = vmul.f32 %v4827, %v2931
        %v4837 = vlaneseq
        %v4838 = vshrl.u32 %v4837, 7
        %v4839 = vsub.s32 0, %v4838
        %v4840 = vrot.slane %v4759, %v4839
        %v4842 = vmul.f32 %v4720, %v4840
        %v4843 = vmul.f32 %v4721, %v4840
        %v4844 = vmul.f32 %v4722, %v4840
        %v4845 = vmul.f32 %v4723, %v4840
        %v4846 = vmul.f32 %v4724, %v4840
        %v4847 = vmul.f32 %v4725, %v4840
        %v4848 = vmul.f32 %v4726, %v4840
        %v4849 = vmul.f32 %v4727, %v4840
        %v4851 = vlaneseq
        %v4852 = vshrl.u32 %v4851, 7
        %v4853 = vsub.s32 0, %v4852
        %v4854 = vrot.slane %v4761, %v4853
        %v4856 = vmul.f32 %v4674, %v4854
        %v4857 = vmul.f32 %v4677, %v4854
        %v4858 = vmul.f32 %v4682, %v4854
        %v4859 = vmul.f32 %v4685, %v4854
        %v4860 = vmul.f32 %v4690, %v4854
        %v4861 = vmul.f32 %v4693, %v4854
        %v4862 = vmul.f32 %v4698, %v4854
        %v4863 = vmul.f32 %v4701, %v4854
        %v4864 = vadd.f32 %v4842, %v4856
        %v4865 = vadd.f32 %v4843, %v4857
        %v4866 = vadd.f32 %v4844, %v4858
        %v4867 = vadd.f32 %v4845, %v4859
        %v4868 = vadd.f32 %v4846, %v4860
        %v4869 = vadd.f32 %v4847, %v4861
        %v4870 = vadd.f32 %v4848, %v4862
        %v4871 = vadd.f32 %v4849, %v4863
        %v4873 = vlaneseq
        %v4874 = vshrl.u32 %v4873, 7
        %v4875 = vsub.s32 0, %v4874
        %v4876 = vrot.slane %v4763, %v4875
        %v4878 = vmul.f32 %v4744, %v4876
        %v4879 = vmul.f32 %v4745, %v4876
        %v4880 = vmul.f32 %v4746, %v4876
        %v4881 = vmul.f32 %v4747, %v4876
        %v4882 = vmul.f32 %v4748, %v4876
        %v4883 = vmul.f32 %v4749, %v4876
        %v4884 = vmul.f32 %v4750, %v4876
        %v4885 = vmul.f32 %v4751, %v4876
        %v4886 = vadd.f32 %v4864, %v4878
        %v4887 = vadd.f32 %v4865, %v4879
        %v4888 = vadd.f32 %v4866, %v4880
        %v4889 = vadd.f32 %v4867, %v4881
        %v4890 = vadd.f32 %v4868, %v4882
        %v4891 = vadd.f32 %v4869, %v4883
        %v4892 = vadd.f32 %v4870, %v4884
        %v4893 = vadd.f32 %v4871, %v4885
        %v4895 = vlaneseq
        %v4896 = vshrl.u32 %v4895, 7
        %v4897 = vsub.s32 0, %v4896
        %v4898 = vrot.slane %v4765, %v4897
        %v4900 = vmul.f32 %v4721, %v4898
        %v4901 = vmul.f32 %v4722, %v4898
        %v4902 = vmul.f32 %v4723, %v4898
        %v4903 = vmul.f32 %v4724, %v4898
        %v4904 = vmul.f32 %v4725, %v4898
        %v4905 = vmul.f32 %v4726, %v4898
        %v4906 = vmul.f32 %v4727, %v4898
        %v4907 = vmul.f32 %v4720, %v4898
        %v4909 = vlaneseq
        %v4910 = vshrl.u32 %v4909, 7
        %v4911 = vsub.s32 0, %v4910
        %v4912 = vrot.slane %v4767, %v4911
        %v4914 = vmul.f32 %v4677, %v4912
        %v4915 = vmul.f32 %v4682, %v4912
        %v4916 = vmul.f32 %v4685, %v4912
        %v4917 = vmul.f32 %v4690, %v4912
        %v4918 = vmul.f32 %v4693, %v4912
        %v4919 = vmul.f32 %v4698, %v4912
        %v4920 = vmul.f32 %v4701, %v4912
        %v4921 = vmul.f32 %v4674, %v4912
        %v4922 = vadd.f32 %v4900, %v4914
        %v4923 = vadd.f32 %v4901, %v4915
        %v4924 = vadd.f32 %v4902, %v4916
        %v4925 = vadd.f32 %v4903, %v4917
        %v4926 = vadd.f32 %v4904, %v4918
        %v4927 = vadd.f32 %v4905, %v4919
        %v4928 = vadd.f32 %v4906, %v4920
        %v4929 = vadd.f32 %v4907, %v4921
        %v4931 = vlaneseq
        %v4932 = vshrl.u32 %v4931, 7
        %v4933 = vsub.s32 0, %v4932
        %v4934 = vrot.slane %v4769, %v4933
        %v4936 = vmul.f32 %v4745, %v4934
        %v4937 = vmul.f32 %v4746, %v4934
        %v4938 = vmul.f32 %v4747, %v4934
        %v4939 = vmul.f32 %v4748, %v4934
        %v4940 = vmul.f32 %v4749, %v4934
        %v4941 = vmul.f32 %v4750, %v4934
        %v4942 = vmul.f32 %v4751, %v4934
        %v4943 = vmul.f32 %v4744, %v4934
        %v4944 = vadd.f32 %v4922, %v4936
        %v4945 = vadd.f32 %v4923, %v4937
        %v4946 = vadd.f32 %v4924, %v4938
        %v4947 = vadd.f32 %v4925, %v4939
        %v4948 = vadd.f32 %v4926, %v4940
        %v4949 = vadd.f32 %v4927, %v4941
        %v4950 = vadd.f32 %v4928, %v4942
        %v4951 = vadd.f32 %v4929, %v4943
        %v4952 = vmul.f32 %v4944, %v3060
        %v4953 = vmul.f32 %v4945, %v3065
        %v4954 = vmul.f32 %v4946, %v3070
        %v4955 = vmul.f32 %v4947, %v3075
        %v4956 = vmul.f32 %v4948, %v3080
        %v4957 = vmul.f32 %v4949, %v3085
        %v4958 = vmul.f32 %v4950, %v3090
        %v4959 = vmul.f32 %v4951, %v3095
        %v4960 = vadd.f32 %v4828, %v4886
        %v4961 = vadd.f32 %v4829, %v4887
        %v4962 = vadd.f32 %v4830, %v4888
        %v4963 = vadd.f32 %v4831, %v4889
        %v4964 = vadd.f32 %v4832, %v4890
        %v4965 = vadd.f32 %v4833, %v4891
        %v4966 = vadd.f32 %v4834, %v4892
        %v4967 = vadd.f32 %v4835, %v4893
        %v4968 = vadd.f32 %v4960, %v4952
        %v4969 = vadd.f32 %v4961, %v4953
        %v4970 = vadd.f32 %v4962, %v4954
        %v4971 = vadd.f32 %v4963, %v4955
        %v4972 = vadd.f32 %v4964, %v4956
        %v4973 = vadd.f32 %v4965, %v4957
        %v4974 = vadd.f32 %v4966, %v4958
        %v4975 = vadd.f32 %v4967, %v4959
        %v4976 = vmul.f32 %v4968, 0.5
        %v4977 = vmul.f32 %v4969, 0.5
        %v4978 = vmul.f32 %v4970, 0.5
        %v4979 = vmul.f32 %v4971, 0.5
        %v4980 = vmul.f32 %v4972, 0.5
        %v4981 = vmul.f32 %v4973, 0.5
        %v4982 = vmul.f32 %v4974, 0.5
        %v4983 = vmul.f32 %v4975, 0.5
        %v4984 = vmul.f32 %v4968, 0.044715
        %v4985 = vmul.f32 %v4969, 0.044715
        %v4986 = vmul.f32 %v4970, 0.044715
        %v4987 = vmul.f32 %v4971, 0.044715
        %v4988 = vmul.f32 %v4972, 0.044715
        %v4989 = vmul.f32 %v4973, 0.044715
        %v4990 = vmul.f32 %v4974, 0.044715
        %v4991 = vmul.f32 %v4975, 0.044715
        %v4992 = vmul.f32 %v4984, %v4968
        %v4993 = vmul.f32 %v4985, %v4969
        %v4994 = vmul.f32 %v4986, %v4970
        %v4995 = vmul.f32 %v4987, %v4971
        %v4996 = vmul.f32 %v4988, %v4972
        %v4997 = vmul.f32 %v4989, %v4973
        %v4998 = vmul.f32 %v4990, %v4974
        %v4999 = vmul.f32 %v4991, %v4975
        %v5000 = vmul.f32 %v4992, %v4968
        %v5001 = vmul.f32 %v4993, %v4969
        %v5002 = vmul.f32 %v4994, %v4970
        %v5003 = vmul.f32 %v4995, %v4971
        %v5004 = vmul.f32 %v4996, %v4972
        %v5005 = vmul.f32 %v4997, %v4973
        %v5006 = vmul.f32 %v4998, %v4974
        %v5007 = vmul.f32 %v4999, %v4975
        %v5008 = vadd.f32 %v4968, %v5000
        %v5009 = vadd.f32 %v4969, %v5001
        %v5010 = vadd.f32 %v4970, %v5002
        %v5011 = vadd.f32 %v4971, %v5003
        %v5012 = vadd.f32 %v4972, %v5004
        %v5013 = vadd.f32 %v4973, %v5005
        %v5014 = vadd.f32 %v4974, %v5006
        %v5015 = vadd.f32 %v4975, %v5007
        %v5016 = vmul.f32 %v5008, 0.7978846
        %v5017 = vmul.f32 %v5009, 0.7978846
        %v5018 = vmul.f32 %v5010, 0.7978846
        %v5019 = vmul.f32 %v5011, 0.7978846
        %v5020 = vmul.f32 %v5012, 0.7978846
        %v5021 = vmul.f32 %v5013, 0.7978846
        %v5022 = vmul.f32 %v5014, 0.7978846
        %v5023 = vmul.f32 %v5015, 0.7978846
        %v5024 = vtanh.pop %v5016
        %v5025 = vtanh.pop %v5017
        %v5026 = vtanh.pop %v5018
        %v5027 = vtanh.pop %v5019
        %v5028 = vtanh.pop %v5020
        %v5029 = vtanh.pop %v5021
        %v5030 = vtanh.pop %v5022
        %v5031 = vtanh.pop %v5023
        %v5032 = vadd.f32 %v5024, 1.0
        %v5033 = vadd.f32 %v5025, 1.0
        %v5034 = vadd.f32 %v5026, 1.0
        %v5035 = vadd.f32 %v5027, 1.0
        %v5036 = vadd.f32 %v5028, 1.0
        %v5037 = vadd.f32 %v5029, 1.0
        %v5038 = vadd.f32 %v5030, 1.0
        %v5039 = vadd.f32 %v5031, 1.0
        %v5040 = vmul.f32 %v4976, %v5032
        %v5041 = vmul.f32 %v4977, %v5033
        %v5042 = vmul.f32 %v4978, %v5034
        %v5043 = vmul.f32 %v4979, %v5035
        %v5044 = vmul.f32 %v4980, %v5036
        %v5045 = vmul.f32 %v4981, %v5037
        %v5046 = vmul.f32 %v4982, %v5038
        %v5047 = vmul.f32 %v4983, %v5039
        %v5048 = vpack.c.bf16 %v5041, %v5040
        %v5049 = vpack.c.bf16 %v5043, %v5042
        %v5050 = vpack.c.bf16 %v5045, %v5044
        %v5051 = vpack.c.bf16 %v5047, %v5046
        %s5052 = scalar_lea.vmem [#allocation10], 192
        %v5053 = vld [vmem:[%s5052] sm:$0xf]
        %v5054 = vld [vmem:[%s5052 + $0x4] sm:$0xf]
        %v5055 = vld [vmem:[%s5052 + $0x8] sm:$0xf]
        %v5056 = vld [vmem:[%s5052 + $0xc] sm:$0xf]
        %v5057 = vld [vmem:[%s5052 + $0x10] sm:$0xf]
        %v5058 = vld [vmem:[%s5052 + $0x14] sm:$0xf]
        %v5059 = vld [vmem:[%s5052 + $0x18] sm:$0xf]
        %v5060 = vld [vmem:[%s5052 + $0x1c] sm:$0xf]
        %v5061 = vld [vmem:[%s5052 + $0x20] sm:$0xf]
        %v5062 = vld [vmem:[%s5052 + $0x24] sm:$0xf]
        %v5063 = vld [vmem:[%s5052 + $0x28] sm:$0xf]
        %v5064 = vld [vmem:[%s5052 + $0x2c] sm:$0xf]
        %v5065 = vld [vmem:[%s5052 + $0x30] sm:$0xf]
        %v5066 = vld [vmem:[%s5052 + $0x34] sm:$0xf]
        %v5067 = vld [vmem:[%s5052 + $0x38] sm:$0xf]
        %v5068 = vld [vmem:[%s5052 + $0x3c] sm:$0xf]
        %v5085 = vunpack.c.l.b16 %v5053
        %v5086 = vunpack.c.l.b16 %v5054
        %v5087 = vunpack.c.l.b16 %v5055
        %v5088 = vunpack.c.l.b16 %v5056
        %v5089 = vunpack.c.l.b16 %v5057
        %v5090 = vunpack.c.l.b16 %v5058
        %v5091 = vunpack.c.l.b16 %v5059
        %v5092 = vunpack.c.l.b16 %v5060
        %v5093 = vunpack.c.l.b16 %v5061
        %v5094 = vunpack.c.l.b16 %v5062
        %v5095 = vunpack.c.l.b16 %v5063
        %v5096 = vunpack.c.l.b16 %v5064
        %v5097 = vunpack.c.l.b16 %v5065
        %v5098 = vunpack.c.l.b16 %v5066
        %v5099 = vunpack.c.l.b16 %v5067
        %v5100 = vunpack.c.l.b16 %v5068
        %v5101 = vpack.c.b16 %v5086, %v5085
        %v5102 = vpack.c.b16 %v5088, %v5087
        %v5103 = vpack.c.b16 %v5090, %v5089
        %v5104 = vpack.c.b16 %v5092, %v5091
        %v5105 = vpack.c.b16 %v5094, %v5093
        %v5106 = vpack.c.b16 %v5096, %v5095
        %v5107 = vpack.c.b16 %v5098, %v5097
        %v5108 = vpack.c.b16 %v5100, %v5099
        %5117 = vmatprep.subr.bf16.mxu0 0
        %5118 = vmatpush1.bf16.msra.mxu0 %v5108
        %5119 = vmatprep.subr.bf16.mxu0 0
        %5120 = vmatpush1.bf16.msra.mxu0 %v5107
        %5121 = vmatprep.subr.bf16.mxu0 0
        %5122 = vmatpush1.bf16.msra.mxu0 %v5106
        %5123 = vmatprep.subr.bf16.mxu0 0
        %5124 = vmatpush1.bf16.msra.mxu0 %v5105
        %5125 = vmatprep.subr.bf16.mxu0 0
        %5126 = vmatpush1.bf16.msra.mxu0 %v5104
        %5127 = vmatprep.subr.bf16.mxu0 0
        %5128 = vmatpush1.bf16.msra.mxu0 %v5103
        %5129 = vmatprep.subr.bf16.mxu0 0
        %5130 = vmatpush1.bf16.msra.mxu0 %v5102
        %5131 = vmatprep.subr.bf16.mxu0 0
        %5132 = vmatpush1.bf16.msra.mxu0 %v5101
        %5133 = vmatprep.subr.bf16.mxu0 0
        %5134 = vmatpush2.bf16.msra.mxu0 0
        %5135 = vmatprep.subr.bf16.mxu0 0
        %5136 = vmatpush2.bf16.msra.mxu0 0
        %5137 = vmatprep.subr.bf16.mxu0 0
        %5138 = vmatpush2.bf16.msra.mxu0 0
        %5139 = vmatprep.subr.bf16.mxu0 0
        %5140 = vmatpush2.bf16.msra.mxu0 0
        %5141 = vmatprep.subr.bf16.mxu0 0
        %5142 = vmatpush2.bf16.msra.mxu0 0
        %5143 = vmatprep.subr.bf16.mxu0 0
        %5144 = vmatpush2.bf16.msra.mxu0 0
        %5145 = vmatprep.subr.bf16.mxu0 0
        %5146 = vmatpush2.bf16.msra.mxu0 0
        %5147 = vmatprep.subr.bf16.mxu0 0
        %5148 = vmatpush2.bf16.msra.mxu0 0
        %5149 = vmatprep.mubr.bf16.mxu0 0
        %5150 = vmatmul.mubr.bf16.gmra.mxu0 %v5048
        %v5151 = vpop.f32.mrf.mxu0
        %v5152 = vadd.f32 0.0, %v5151
        %v5153 = vpop.f32.mrf.mxu0
        %v5154 = vpop.f32.mrf.mxu0
        %v5155 = vadd.f32 0.0, %v5154
        %v5156 = vpop.f32.mrf.mxu0
        %5157 = vmatprep.mubr.bf16.mxu0 0
        %5158 = vmatmul.mubr.bf16.gmra.mxu0 %v5049
        %v5159 = vpop.f32.mrf.mxu0
        %v5160 = vadd.f32 0.0, %v5159
        %v5161 = vpop.f32.mrf.mxu0
        %v5162 = vpop.f32.mrf.mxu0
        %v5163 = vadd.f32 0.0, %v5162
        %v5164 = vpop.f32.mrf.mxu0
        %5165 = vmatprep.mubr.bf16.mxu0 0
        %5166 = vmatmul.mubr.bf16.gmra.mxu0 %v5050
        %v5167 = vpop.f32.mrf.mxu0
        %v5168 = vadd.f32 0.0, %v5167
        %v5169 = vpop.f32.mrf.mxu0
        %v5170 = vpop.f32.mrf.mxu0
        %v5171 = vadd.f32 0.0, %v5170
        %v5172 = vpop.f32.mrf.mxu0
        %5173 = vmatprep.mubr.bf16.mxu0 0
        %5174 = vmatmul.mubr.bf16.gmra.mxu0 %v5051
        %v5175 = vpop.f32.mrf.mxu0
        %v5176 = vadd.f32 0.0, %v5175
        %v5177 = vpop.f32.mrf.mxu0
        %v5178 = vpop.f32.mrf.mxu0
        %v5179 = vadd.f32 0.0, %v5178
        %v5180 = vpop.f32.mrf.mxu0
        %5181 = vdwg.mxu0
        %v5182 = vadd.f32 %v4558, %v5152
        %v5183 = vadd.f32 %v4559, %v5155
        %v5184 = vadd.f32 %v4560, %v5160
        %v5185 = vadd.f32 %v4561, %v5163
        %v5186 = vadd.f32 %v4562, %v5168
        %v5187 = vadd.f32 %v4563, %v5171
        %v5188 = vadd.f32 %v4564, %v5176
        %v5189 = vadd.f32 %v4565, %v5179
        %v5190 = vadd.f32 %v2385, %v5182
        %v5191 = vadd.f32 %v2386, %v5183
        %v5192 = vadd.f32 %v2387, %v5184
        %v5193 = vadd.f32 %v2388, %v5185
        %v5194 = vadd.f32 %v2389, %v5186
        %v5195 = vadd.f32 %v2390, %v5187
        %v5196 = vadd.f32 %v2391, %v5188
        %v5197 = vadd.f32 %v2392, %v5189
        %v5198 = vld [vmem:[%s13] sm:$0x1]
        %v5200 = vlaneseq
        %v5201 = vshrl.u32 %v5200, 7
        %v5202 = vsub.s32 0, %v5201
        %v5203 = vrot.slane %v5198, %v5202
        %v5205 = vadd.f32 %v5190, %v5203
        %v5206 = vadd.f32 %v5191, %v5203
        %v5207 = vadd.f32 %v5192, %v5203
        %v5208 = vadd.f32 %v5193, %v5203
        %v5209 = vadd.f32 %v5194, %v5203
        %v5210 = vadd.f32 %v5195, %v5203
        %v5211 = vadd.f32 %v5196, %v5203
        %v5212 = vadd.f32 %v5197, %v5203
        %5213 = vst [vmem:[%s543] sm:$0xff] %v5205
        %5214 = vst [vmem:[%s543 + $0x8] sm:$0xff] %v5206
        %5215 = vst [vmem:[%s543 + $0x10] sm:$0xff] %v5207
        %5216 = vst [vmem:[%s543 + $0x18] sm:$0xff] %v5208
        %5217 = vst [vmem:[%s543 + $0x20] sm:$0xff] %v5209
        %5218 = vst [vmem:[%s543 + $0x28] sm:$0xff] %v5210
        %5219 = vst [vmem:[%s543 + $0x30] sm:$0xff] %v5211
        %5220 = vst [vmem:[%s543 + $0x38] sm:$0xff] %v5212
        %s5221 = sand.u32 %s340, 1
        %s5222 = scalar_lea.sflag [#allocation4], %s5221
        %s5223 = sand.u32 %s340, 1
        %s5224 = smul.addr %s5223, 64
        %s5225 = scalar_lea.vmem [#allocation11], %s5224
        // Predicated region
        $region97: #{tpu_custom_call.1} parent=75 // pred_check
          %p5226 = pneg %p350
        $region98: #{tpu_custom_call.1} parent=75 // pred_check_branch
          %5228 = sbr.rel (%p5226) target = $region100
        $region99: #{tpu_custom_call.1} parent=75 // pred_region
          %s5230 = ssub.s32 1024, 1024
          %5231 = vsyncadd %s5222, %s5230
          %s5232 = smul.addr %s33, 8
          %s5233 = smul.addr %s5232, 128
          %s5234 = scalar_lea.hbm %s14, %s5233
          %s5235 = sshll.u32 %s5225, 4
          %s5236 = int_to_ptr.vmem [resolvable:$true] %s5235
          %5241 = dma.vmem_to_hbm [thread:$0]  %s5236, 1024, %s5234, %s5222, 128, 128, 8
        $region100: #{tpu_custom_call.1} parent=75 // pred_fallthru
          _
      $region76: #{tpu_custom_call.1} parent=5 // pred_fallthru
        _
      %p5242 = scmp.le.s32.totalorder 2, %s28
      // Predicated region
      $region101: #{tpu_custom_call.1} parent=5 // pred_check
        %p5243 = pneg %p5242
      $region102: #{tpu_custom_call.1} parent=5 // pred_check_branch
        %5245 = sbr.rel (%p5243) target = $region104
      $region103: #{tpu_custom_call.1} parent=5 // pred_region
        %s5246 = ssub.s32 %s28, 2
        // Predicated region
        $region105: #{tpu_custom_call.1} parent=103 // pred_check
          %p5247 = pneg %p356
        $region106: #{tpu_custom_call.1} parent=103 // pred_check_branch
          %5249 = sbr.rel (%p5247) target = $region108
        $region107: #{tpu_custom_call.1} parent=103 // pred_region
          %s5250 = sand.u32 %s341, 1
          %s5251 = scalar_lea.sflag [#allocation4], %s5250
          %s5252 = sand.u32 %s341, 1
          %s5253 = smul.addr %s5252, 64
          %s5254 = scalar_lea.vmem [#allocation11], %s5253
          %5255 = dma.done %s5251, 1024
        $region108: #{tpu_custom_call.1} parent=103 // pred_fallthru
          _
      $region104: #{tpu_custom_call.1} parent=5 // pred_fallthru
        _
    $region6: #{tpu_custom_call.1} parent=1 // loop_footer
      %s32 = sadd.s32 1, %s28
    $region7: #{tpu_custom_call.1} parent=1 // loop_footer_branch
      %27 = sbr.rel target = $region3
    $region8: #{tpu_custom_call.1} parent=1 // loop_exit
      _
    %5256 = vsyncpa [#allocation3], 1
    %s5257 = scalar_lea.sflag [#allocation3], 1
    %5258 = vsyncpa %s5257, 1
    %5259 = vsyncpa [#allocation6], 1
    %5260 = vsyncpa [#allocation9], 1
    %5261 = vsyncpa [#allocation4], 1
    %s5262 = scalar_lea.sflag [#allocation4], 1
    %5263 = vsyncpa %s5262, 1

</llo_original>
